<compile_context>
chip_gen: v5e
topology: v5e:2x2
jax: 0.10.0
libtpu: 0.0.40
codegen_flags: <defaults>
</compile_context>

<pallas_src>
import functools

import jax
import jax.numpy as jnp
from jax import lax
from jax.experimental import pallas as pl
from jax.experimental.pallas import tpu as pltpu


# ----------------------------------------------------------------------------
# Fused CBAM kernel: one block of `bn` images, NCHW flattened to (bn, C, H*W)
# ----------------------------------------------------------------------------
def _cbam_kernel(x_ref, w1_ref, w2_ref, sw_ref, o_ref, *, H, W, ksize):
    # x_ref : (bn, C, H*W) activations (native dtype)
    # w1_ref: (Cr, C) SE layer-1 weight (== torch ca.se[0].weight[:, :, 0, 0])
    # w2_ref: (Cr, C) SE layer-2 weight (== torch ca.se[2].weight[:, :, 0, 0].T)
    # sw_ref: (2*K*K + 1,) f32 in SMEM: [K*K taps (max path), K*K taps (avg), bias]
    # o_ref : (bn, C, H*W)
    f32 = jnp.float32
    xb = x_ref[...]                                          # (bn, C, HW)
    bn, C, HW = xb.shape
    Cr = w2_ref.shape[0]

    # ---------------- Channel attention ----------------
    # Global max / mean over H*W (lane reduces, f32 accumulation).
    maxp = jnp.max(xb, axis=2).astype(f32)                   # (bn, C)
    avgp = jnp.sum(xb, axis=2, dtype=f32) * (1.0 / HW)       # (bn, C)
    p_all = jnp.concatenate([maxp, avgp], axis=0)            # (2bn, C)

    w1 = w1_ref[...].astype(f32)                             # (Cr, C)
    w2 = w2_ref[...].astype(f32)                             # (Cr, C)

    # SE layer 1: h[i, r] = sum_c p[i, c] * w1[r, c]   (lane reduce over C)
    h = jnp.sum(p_all[:, None, :] * w1[None, :, :], axis=2)  # (2bn, Cr)
    h = h * jax.nn.sigmoid(h)                                # SiLU
    # SE layer 2: y[i, c] = sum_r h[i, r] * w2[r, c]   (Cr-term outer products)
    # TODO(synk): for large images_per_block swap both SE layers to MXU jnp.dot.
    y = jnp.zeros((2 * bn, C), f32)
    for r in range(Cr):                                      # Cr is small & static
        y = y + h[:, r:r + 1] * w2[r:r + 1, :]
    ca = jax.nn.sigmoid(y[:bn] + y[bn:])                     # (bn, C)

    out1 = xb * ca.astype(xb.dtype)[:, :, None]              # x * ca   (bn, C, HW)

    # ---------------- Spatial attention ----------------
    # Channel max / mean (sublane-direction reduces) -> lane-dense (bn, HW) maps.
    cmax = jnp.max(out1, axis=1).astype(f32)                 # (bn, HW)
    cavg = jnp.sum(out1, axis=1, dtype=f32) * (1.0 / C)      # (bn, HW)

    # KxK zero-padded conv on the flattened maps: every tap is one lane roll
    # plus a precomputed validity mask (masks hoisted, built without int div).
    idx = lax.broadcasted_iota(jnp.int32, (1, HW), 1)
    if W & (W - 1) == 0:
        col = jnp.bitwise_and(idx, W - 1)
    else:
        col = lax.rem(idx, jnp.int32(W))  # TODO(synk): verify vector rem for non-pow2 W
    P = ksize // 2
    row_ok = {d: None if d == 0 else
              (idx >= (-d) * W if d < 0 else idx < (H - d) * W)
              for d in range(-P, P + 1)}
    col_ok = {d: None if d == 0 else
              (col >= -d if d < 0 else col < W - d)
              for d in range(-P, P + 1)}

    def shifted(m, s, mask):
        r = m if s == 0 else pltpu.roll(m, shift=(-s) % HW, axis=1)  # XLU rotate
        return r if mask is None else jnp.where(mask, r, 0.0)

    nt = ksize * ksize
    logit = jnp.zeros((bn, HW), f32) + sw_ref[2 * nt]        # conv bias
    t = 0
    for dr in range(-P, P + 1):
        for dc in range(-P, P + 1):
            s = dr * W + dc
            mr, mc = row_ok[dr], col_ok[dc]
            mask = mr if mc is None else (mc if mr is None
                                          else jnp.logical_and(mr, mc))
            logit = logit + sw_ref[t] * shifted(cmax, s, mask)
            logit = logit + sw_ref[nt + t] * shifted(cavg, s, mask)
            t += 1
    sa = jax.nn.sigmoid(logit)                               # (bn, HW)

    # ---------------- Gate + residual ----------------
    o_ref[...] = (out1 * sa.astype(xb.dtype)[:, None, :] + xb).astype(o_ref.dtype)


# ----------------------------------------------------------------------------
# Wrapper: NCHW in / NCHW out (like the PyTorch module); free reshapes only.
# ----------------------------------------------------------------------------
def _images_per_block(n, per_image_bytes, target_bytes=2 << 20, min_grid_steps=4):
    bn = min(n, max(1, target_bytes // max(per_image_bytes, 1)))  # ~2 MiB / step
    bn = max(1, min(bn, max(1, n // min_grid_steps)))             # keep some steps
    while n % bn:
        bn -= 1
    return bn


def cbam_forward(x_nchw, w1t, w2, spatial_params, *, ksize=3, images_per_block=None):
    N, C, H, W = x_nchw.shape
    HW = H * W
    # Contiguous minor-dim merge: zero-cost layout view, no extra HBM traffic.
    x = x_nchw.reshape(N, C, HW)

    per_img = C * HW * x.dtype.itemsize
    bn = images_per_block or _images_per_block(N, per_img)
    assert N % bn == 0, (N, bn)

    block_f32_bytes = bn * C * HW * 4
    # Explicit scoped-VMEM limit; block policy keeps blocks far below v7x's 64 MiB.
    vmem_limit = int(min(48 * 2 ** 20, max(32 * 2 ** 20, 12 * block_f32_bytes)))

    kernel = functools.partial(_cbam_kernel, H=H, W=W, ksize=ksize)
    out = pl.pallas_call(
        kernel,
        out_shape=jax.ShapeDtypeStruct((N, C, HW), x.dtype),
        grid=(N // bn,),
        in_specs=[
            pl.BlockSpec((bn, C, HW), lambda n: (n, 0, 0)),
            pl.BlockSpec(w1t.shape, lambda n: (0, 0)),
            pl.BlockSpec(w2.shape, lambda n: (0, 0)),
            pl.BlockSpec(memory_space=pltpu.MemorySpace.SMEM),   # conv taps + bias
        ],
        out_specs=pl.BlockSpec((bn, C, HW), lambda n: (n, 0, 0)),
        compiler_params=pltpu.CompilerParams(
            dimension_semantics=("parallel",),   # megacore-shard the image axis
            vmem_limit_bytes=vmem_limit,
        ),
    )(x, w1t, w2, spatial_params)
    return out.reshape(N, C, H, W)


# ----------------------------------------------------------------------------
# Pure-JAX reference (same math as the PyTorch module, for verification)
# ----------------------------------------------------------------------------
def cbam_reference(x_nchw, w1t, w2, spatial_params, ksize=3):
    maxp = jnp.max(x_nchw, axis=(2, 3))                      # (N, C)
    avgp = jnp.mean(x_nchw, axis=(2, 3))

    def se(p):
        h = p @ w1t.T                                        # (N, Cr)
        h = h * jax.nn.sigmoid(h)                            # SiLU
        return h @ w2                                        # (N, C)

    ca = jax.nn.sigmoid(se(maxp) + se(avgp))
    out1 = x_nchw * ca[:, :, None, None]

    cmax = jnp.max(out1, axis=1, keepdims=True)              # (N, 1, H, W)
    cavg = jnp.mean(out1, axis=1, keepdims=True)
    inp = jnp.concatenate([cmax, cavg], axis=1)              # (N, 2, H, W)
    nt = ksize * ksize
    w_sp = spatial_params[: 2 * nt].reshape(2, ksize, ksize)[None]  # (1,2,K,K)
    pad = ksize // 2
    logit = jax.lax.conv_general_dilated(
        inp, w_sp, window_strides=(1, 1), padding=((pad, pad), (pad, pad)),
        dimension_numbers=("NCHW", "OIHW", "NCHW")) + spatial_params[2 * nt]
    sa = jax.nn.sigmoid(logit)
    return out1 * sa + x_nchw


if __name__ == "__main__":
    # channel=128 (lane-dense), reduction=16 -> hidden=8, kernel_size=3
    N, C, H, W = 8, 128, 16, 16
    reduction, ksize = 16, 3
    Cr = C // reduction

    key = jax.random.PRNGKey(0)
    kx, k1, k2, k3, k4 = jax.random.split(key, 5)
    x = jax.random.normal(kx, (N, C, H, W), jnp.float32)
    # ChannelAttention SE weights (Conv2d 1x1, bias=False):
    w1t = jax.random.normal(k1, (Cr, C), jnp.float32) * (1.0 / (C ** 0.5))
    w2 = jax.random.normal(k2, (Cr, C), jnp.float32) * (1.0 / (Cr ** 0.5))
    # SpatialAttention conv (2->1, k=3, padding=1, bias=True), flattened as
    # [taps for max path, taps for avg path, bias]:
    w_sp = jax.random.normal(k3, (2, ksize, ksize), jnp.float32) * 0.3
    b_sp = jax.random.normal(k4, (1,), jnp.float32) * 0.1
    spatial_params = jnp.concatenate([w_sp.reshape(-1), b_sp]).astype(jnp.float32)

    y = cbam_forward(x, w1t, w2, spatial_params, ksize=ksize)
    y = jax.block_until_ready(y)
    assert y.shape == x.shape, y.shape
    assert bool(jnp.all(jnp.isfinite(y)))

    y_ref = cbam_reference(x, w1t, w2, spatial_params, ksize=ksize)
    err = float(jnp.max(jnp.abs(y - y_ref)))
    assert err < 1e-3, f"mismatch vs reference: {err}"
    print("KERNEL_OK")
</pallas_src>

<mosaic_0001>
module attributes {stable_mosaic.version = 11 : i64} {
  func.func @_cbam_kernel(%arg0: i32, %arg1: memref<2x128x256xf32, #tpu.memory_space<vmem>>, %arg2: memref<8x128xf32, #tpu.memory_space<vmem>>, %arg3: memref<8x128xf32, #tpu.memory_space<vmem>>, %arg4: memref<19xf32, #tpu.memory_space<smem>>, %arg5: memref<2x128x256xf32, #tpu.memory_space<vmem>>) attributes {dimension_semantics = [#tpu.dimension_semantics<parallel>], iteration_bounds = array<i64: 4>, scalar_prefetch = 0 : i64, scratch_operands = 0 : i64, tpu.core_type = #tpu.core_type<tc>, window_params = [{transform_indices = @transform_0, window_bounds = array<i64: 2, 128, 256>}, {pipeline_mode = #tpu.pipeline_mode<synchronous>, transform_indices = @transform_1, window_bounds = array<i64: 8, 128>}, {pipeline_mode = #tpu.pipeline_mode<synchronous>, transform_indices = @transform_2, window_bounds = array<i64: 8, 128>}, {transform_indices = @transform_3, window_bounds = array<i64: 19>}, {transform_indices = @transform_4, window_bounds = array<i64: 2, 128, 256>}]} {
    %c0 = arith.constant 0 : index
    %c0_0 = arith.constant 0 : index
    %c0_1 = arith.constant 0 : index
    %0 = vector.load %arg1[%c0, %c0_0, %c0_1] : memref<2x128x256xf32, #tpu.memory_space<vmem>>, vector<2x128x256xf32>
    %cst = arith.constant dense<0xFF800000> : vector<2x128xf32>
    %1 = vector.multi_reduction <maximumf>, %0, %cst [2] : vector<2x128x256xf32> to vector<2x128xf32>
    %cst_2 = arith.constant dense<0.000000e+00> : vector<2x128xf32>
    %2 = vector.multi_reduction <add>, %0, %cst_2 [2] : vector<2x128x256xf32> to vector<2x128xf32>
    %cst_3 = arith.constant 3.906250e-03 : f32
    %3 = vector.broadcast %cst_3 : f32 to vector<2x128xf32>
    %4 = arith.mulf %2, %3 : vector<2x128xf32>
    %5 = tpu.concatenate %1, %4 in 0 : vector<2x128xf32>, vector<2x128xf32> -> vector<4x128xf32>
    %c0_4 = arith.constant 0 : index
    %c0_5 = arith.constant 0 : index
    %6 = vector.load %arg2[%c0_4, %c0_5] : memref<8x128xf32, #tpu.memory_space<vmem>>, vector<8x128xf32>
    %c0_6 = arith.constant 0 : index
    %c0_7 = arith.constant 0 : index
    %7 = vector.load %arg3[%c0_6, %c0_7] : memref<8x128xf32, #tpu.memory_space<vmem>>, vector<8x128xf32>
    %8 = vector.shape_cast %5 : vector<4x128xf32> to vector<4x1x128xf32>
    %9 = vector.shape_cast %6 : vector<8x128xf32> to vector<1x8x128xf32>
    %10 = vector.broadcast %8 : vector<4x1x128xf32> to vector<4x8x128xf32>
    %11 = vector.broadcast %9 : vector<1x8x128xf32> to vector<4x8x128xf32>
    %12 = arith.mulf %10, %11 : vector<4x8x128xf32>
    %cst_8 = arith.constant dense<0.000000e+00> : vector<4x8xf32>
    %13 = vector.multi_reduction <add>, %12, %cst_8 [2] : vector<4x8x128xf32> to vector<4x8xf32>
    %14 = arith.negf %13 : vector<4x8xf32>
    %15 = math.exp %14 : vector<4x8xf32>
    %cst_9 = arith.constant 1.000000e+00 : f32
    %16 = vector.broadcast %cst_9 : f32 to vector<4x8xf32>
    %17 = arith.addf %16, %15 : vector<4x8xf32>
    %18 = arith.divf %16, %17 : vector<4x8xf32>
    %19 = arith.mulf %13, %18 : vector<4x8xf32>
    %cst_10 = arith.constant 0.000000e+00 : f32
    %20 = vector.broadcast %cst_10 : f32 to vector<4x128xf32>
    %21 = vector.extract_strided_slice %19 {offsets = [0, 0], sizes = [4, 1], strides = [1, 1]} : vector<4x8xf32> to vector<4x1xf32>
    %22 = vector.extract_strided_slice %7 {offsets = [0, 0], sizes = [1, 128], strides = [1, 1]} : vector<8x128xf32> to vector<1x128xf32>
    %23 = vector.broadcast %21 : vector<4x1xf32> to vector<4x128xf32>
    %24 = vector.broadcast %22 : vector<1x128xf32> to vector<4x128xf32>
    %25 = arith.mulf %23, %24 : vector<4x128xf32>
    %26 = arith.addf %20, %25 : vector<4x128xf32>
    %27 = vector.extract_strided_slice %19 {offsets = [0, 1], sizes = [4, 1], strides = [1, 1]} : vector<4x8xf32> to vector<4x1xf32>
    %28 = vector.extract_strided_slice %7 {offsets = [1, 0], sizes = [1, 128], strides = [1, 1]} : vector<8x128xf32> to vector<1x128xf32>
    %29 = vector.broadcast %27 : vector<4x1xf32> to vector<4x128xf32>
    %30 = vector.broadcast %28 : vector<1x128xf32> to vector<4x128xf32>
    %31 = arith.mulf %29, %30 : vector<4x128xf32>
    %32 = arith.addf %26, %31 : vector<4x128xf32>
    %33 = vector.extract_strided_slice %19 {offsets = [0, 2], sizes = [4, 1], strides = [1, 1]} : vector<4x8xf32> to vector<4x1xf32>
    %34 = vector.extract_strided_slice %7 {offsets = [2, 0], sizes = [1, 128], strides = [1, 1]} : vector<8x128xf32> to vector<1x128xf32>
    %35 = vector.broadcast %33 : vector<4x1xf32> to vector<4x128xf32>
    %36 = vector.broadcast %34 : vector<1x128xf32> to vector<4x128xf32>
    %37 = arith.mulf %35, %36 : vector<4x128xf32>
    %38 = arith.addf %32, %37 : vector<4x128xf32>
    %39 = vector.extract_strided_slice %19 {offsets = [0, 3], sizes = [4, 1], strides = [1, 1]} : vector<4x8xf32> to vector<4x1xf32>
    %40 = vector.extract_strided_slice %7 {offsets = [3, 0], sizes = [1, 128], strides = [1, 1]} : vector<8x128xf32> to vector<1x128xf32>
    %41 = vector.broadcast %39 : vector<4x1xf32> to vector<4x128xf32>
    %42 = vector.broadcast %40 : vector<1x128xf32> to vector<4x128xf32>
    %43 = arith.mulf %41, %42 : vector<4x128xf32>
    %44 = arith.addf %38, %43 : vector<4x128xf32>
    %45 = vector.extract_strided_slice %19 {offsets = [0, 4], sizes = [4, 1], strides = [1, 1]} : vector<4x8xf32> to vector<4x1xf32>
    %46 = vector.extract_strided_slice %7 {offsets = [4, 0], sizes = [1, 128], strides = [1, 1]} : vector<8x128xf32> to vector<1x128xf32>
    %47 = vector.broadcast %45 : vector<4x1xf32> to vector<4x128xf32>
    %48 = vector.broadcast %46 : vector<1x128xf32> to vector<4x128xf32>
    %49 = arith.mulf %47, %48 : vector<4x128xf32>
    %50 = arith.addf %44, %49 : vector<4x128xf32>
    %51 = vector.extract_strided_slice %19 {offsets = [0, 5], sizes = [4, 1], strides = [1, 1]} : vector<4x8xf32> to vector<4x1xf32>
    %52 = vector.extract_strided_slice %7 {offsets = [5, 0], sizes = [1, 128], strides = [1, 1]} : vector<8x128xf32> to vector<1x128xf32>
    %53 = vector.broadcast %51 : vector<4x1xf32> to vector<4x128xf32>
    %54 = vector.broadcast %52 : vector<1x128xf32> to vector<4x128xf32>
    %55 = arith.mulf %53, %54 : vector<4x128xf32>
    %56 = arith.addf %50, %55 : vector<4x128xf32>
    %57 = vector.extract_strided_slice %19 {offsets = [0, 6], sizes = [4, 1], strides = [1, 1]} : vector<4x8xf32> to vector<4x1xf32>
    %58 = vector.extract_strided_slice %7 {offsets = [6, 0], sizes = [1, 128], strides = [1, 1]} : vector<8x128xf32> to vector<1x128xf32>
    %59 = vector.broadcast %57 : vector<4x1xf32> to vector<4x128xf32>
    %60 = vector.broadcast %58 : vector<1x128xf32> to vector<4x128xf32>
    %61 = arith.mulf %59, %60 : vector<4x128xf32>
    %62 = arith.addf %56, %61 : vector<4x128xf32>
    %63 = vector.extract_strided_slice %19 {offsets = [0, 7], sizes = [4, 1], strides = [1, 1]} : vector<4x8xf32> to vector<4x1xf32>
    %64 = vector.extract_strided_slice %7 {offsets = [7, 0], sizes = [1, 128], strides = [1, 1]} : vector<8x128xf32> to vector<1x128xf32>
    %65 = vector.broadcast %63 : vector<4x1xf32> to vector<4x128xf32>
    %66 = vector.broadcast %64 : vector<1x128xf32> to vector<4x128xf32>
    %67 = arith.mulf %65, %66 : vector<4x128xf32>
    %68 = arith.addf %62, %67 : vector<4x128xf32>
    %69 = vector.extract_strided_slice %68 {offsets = [0, 0], sizes = [2, 128], strides = [1, 1]} : vector<4x128xf32> to vector<2x128xf32>
    %70 = vector.extract_strided_slice %68 {offsets = [2, 0], sizes = [2, 128], strides = [1, 1]} : vector<4x128xf32> to vector<2x128xf32>
    %71 = arith.addf %69, %70 : vector<2x128xf32>
    %72 = arith.negf %71 : vector<2x128xf32>
    %73 = math.exp %72 : vector<2x128xf32>
    %cst_11 = arith.constant 1.000000e+00 : f32
    %74 = vector.broadcast %cst_11 : f32 to vector<2x128xf32>
    %75 = arith.addf %74, %73 : vector<2x128xf32>
    %76 = arith.divf %74, %75 : vector<2x128xf32>
    %77 = vector.shape_cast %76 : vector<2x128xf32> to vector<2x128x1xf32>
    %78 = vector.broadcast %77 : vector<2x128x1xf32> to vector<2x128x256xf32>
    %79 = arith.mulf %0, %78 : vector<2x128x256xf32>
    %cst_12 = arith.constant dense<0xFF800000> : vector<2x256xf32>
    %80 = vector.multi_reduction <maximumf>, %79, %cst_12 [1] : vector<2x128x256xf32> to vector<2x256xf32>
    %cst_13 = arith.constant dense<0.000000e+00> : vector<2x256xf32>
    %81 = vector.multi_reduction <add>, %79, %cst_13 [1] : vector<2x128x256xf32> to vector<2x256xf32>
    %cst_14 = arith.constant 7.812500e-03 : f32
    %82 = vector.broadcast %cst_14 : f32 to vector<2x256xf32>
    %83 = arith.mulf %81, %82 : vector<2x256xf32>
    %84 = tpu.iota {dimensions = array<i32: 1>} : vector<1x256xi32>
    %c15_i32 = arith.constant 15 : i32
    %85 = vector.broadcast %c15_i32 : i32 to vector<1x256xi32>
    %86 = arith.andi %84, %85 : vector<1x256xi32>
    %c16_i32 = arith.constant 16 : i32
    %87 = vector.broadcast %c16_i32 : i32 to vector<1x256xi32>
    %88 = arith.cmpi sge, %84, %87 : vector<1x256xi32>
    %c240_i32 = arith.constant 240 : i32
    %89 = vector.broadcast %c240_i32 : i32 to vector<1x256xi32>
    %90 = arith.cmpi slt, %84, %89 : vector<1x256xi32>
    %c1_i32 = arith.constant 1 : i32
    %91 = vector.broadcast %c1_i32 : i32 to vector<1x256xi32>
    %92 = arith.cmpi sge, %86, %91 : vector<1x256xi32>
    %c15_i32_15 = arith.constant 15 : i32
    %93 = vector.broadcast %c15_i32_15 : i32 to vector<1x256xi32>
    %94 = arith.cmpi slt, %86, %93 : vector<1x256xi32>
    %cst_16 = arith.constant 0.000000e+00 : f32
    %95 = vector.broadcast %cst_16 : f32 to vector<2x256xf32>
    %c18 = arith.constant 18 : index
    %96 = memref.load %arg4[%c18] : memref<19xf32, #tpu.memory_space<smem>>
    %97 = vector.broadcast %96 : f32 to vector<2x256xf32>
    %98 = arith.addf %95, %97 : vector<2x256xf32>
    %99 = arith.andi %88, %92 : vector<1x256xi1>
    %c0_17 = arith.constant 0 : index
    %100 = memref.load %arg4[%c0_17] : memref<19xf32, #tpu.memory_space<smem>>
    %c17_i32 = arith.constant 17 : i32
    %101 = tpu.dynamic_rotate %80 by %c17_i32 dim 1 : vector<2x256xf32>, i32 -> vector<2x256xf32>
    %cst_18 = arith.constant 0.000000e+00 : f32
    %102 = vector.shape_cast %99 : vector<1x256xi1> to vector<1x256xi1>
    %103 = vector.broadcast %102 : vector<1x256xi1> to vector<2x256xi1>
    %104 = vector.broadcast %cst_18 : f32 to vector<2x256xf32>
    %105 = arith.select %103, %101, %104 : vector<2x256xi1>, vector<2x256xf32>
    %106 = vector.broadcast %100 : f32 to vector<2x256xf32>
    %107 = arith.mulf %106, %105 : vector<2x256xf32>
    %108 = arith.addf %98, %107 : vector<2x256xf32>
    %c9 = arith.constant 9 : index
    %109 = memref.load %arg4[%c9] : memref<19xf32, #tpu.memory_space<smem>>
    %c17_i32_19 = arith.constant 17 : i32
    %110 = tpu.dynamic_rotate %83 by %c17_i32_19 dim 1 : vector<2x256xf32>, i32 -> vector<2x256xf32>
    %cst_20 = arith.constant 0.000000e+00 : f32
    %111 = vector.shape_cast %99 : vector<1x256xi1> to vector<1x256xi1>
    %112 = vector.broadcast %111 : vector<1x256xi1> to vector<2x256xi1>
    %113 = vector.broadcast %cst_20 : f32 to vector<2x256xf32>
    %114 = arith.select %112, %110, %113 : vector<2x256xi1>, vector<2x256xf32>
    %115 = vector.broadcast %109 : f32 to vector<2x256xf32>
    %116 = arith.mulf %115, %114 : vector<2x256xf32>
    %117 = arith.addf %108, %116 : vector<2x256xf32>
    %c1 = arith.constant 1 : index
    %118 = memref.load %arg4[%c1] : memref<19xf32, #tpu.memory_space<smem>>
    %c16_i32_21 = arith.constant 16 : i32
    %119 = tpu.dynamic_rotate %80 by %c16_i32_21 dim 1 : vector<2x256xf32>, i32 -> vector<2x256xf32>
    %cst_22 = arith.constant 0.000000e+00 : f32
    %120 = vector.shape_cast %88 : vector<1x256xi1> to vector<1x256xi1>
    %121 = vector.broadcast %120 : vector<1x256xi1> to vector<2x256xi1>
    %122 = vector.broadcast %cst_22 : f32 to vector<2x256xf32>
    %123 = arith.select %121, %119, %122 : vector<2x256xi1>, vector<2x256xf32>
    %124 = vector.broadcast %118 : f32 to vector<2x256xf32>
    %125 = arith.mulf %124, %123 : vector<2x256xf32>
    %126 = arith.addf %117, %125 : vector<2x256xf32>
    %c10 = arith.constant 10 : index
    %127 = memref.load %arg4[%c10] : memref<19xf32, #tpu.memory_space<smem>>
    %c16_i32_23 = arith.constant 16 : i32
    %128 = tpu.dynamic_rotate %83 by %c16_i32_23 dim 1 : vector<2x256xf32>, i32 -> vector<2x256xf32>
    %cst_24 = arith.constant 0.000000e+00 : f32
    %129 = vector.shape_cast %88 : vector<1x256xi1> to vector<1x256xi1>
    %130 = vector.broadcast %129 : vector<1x256xi1> to vector<2x256xi1>
    %131 = vector.broadcast %cst_24 : f32 to vector<2x256xf32>
    %132 = arith.select %130, %128, %131 : vector<2x256xi1>, vector<2x256xf32>
    %133 = vector.broadcast %127 : f32 to vector<2x256xf32>
    %134 = arith.mulf %133, %132 : vector<2x256xf32>
    %135 = arith.addf %126, %134 : vector<2x256xf32>
    %136 = arith.andi %88, %94 : vector<1x256xi1>
    %c2 = arith.constant 2 : index
    %137 = memref.load %arg4[%c2] : memref<19xf32, #tpu.memory_space<smem>>
    %c15_i32_25 = arith.constant 15 : i32
    %138 = tpu.dynamic_rotate %80 by %c15_i32_25 dim 1 : vector<2x256xf32>, i32 -> vector<2x256xf32>
    %cst_26 = arith.constant 0.000000e+00 : f32
    %139 = vector.shape_cast %136 : vector<1x256xi1> to vector<1x256xi1>
    %140 = vector.broadcast %139 : vector<1x256xi1> to vector<2x256xi1>
    %141 = vector.broadcast %cst_26 : f32 to vector<2x256xf32>
    %142 = arith.select %140, %138, %141 : vector<2x256xi1>, vector<2x256xf32>
    %143 = vector.broadcast %137 : f32 to vector<2x256xf32>
    %144 = arith.mulf %143, %142 : vector<2x256xf32>
    %145 = arith.addf %135, %144 : vector<2x256xf32>
    %c11 = arith.constant 11 : index
    %146 = memref.load %arg4[%c11] : memref<19xf32, #tpu.memory_space<smem>>
    %c15_i32_27 = arith.constant 15 : i32
    %147 = tpu.dynamic_rotate %83 by %c15_i32_27 dim 1 : vector<2x256xf32>, i32 -> vector<2x256xf32>
    %cst_28 = arith.constant 0.000000e+00 : f32
    %148 = vector.shape_cast %136 : vector<1x256xi1> to vector<1x256xi1>
    %149 = vector.broadcast %148 : vector<1x256xi1> to vector<2x256xi1>
    %150 = vector.broadcast %cst_28 : f32 to vector<2x256xf32>
    %151 = arith.select %149, %147, %150 : vector<2x256xi1>, vector<2x256xf32>
    %152 = vector.broadcast %146 : f32 to vector<2x256xf32>
    %153 = arith.mulf %152, %151 : vector<2x256xf32>
    %154 = arith.addf %145, %153 : vector<2x256xf32>
    %c3 = arith.constant 3 : index
    %155 = memref.load %arg4[%c3] : memref<19xf32, #tpu.memory_space<smem>>
    %c1_i32_29 = arith.constant 1 : i32
    %156 = tpu.dynamic_rotate %80 by %c1_i32_29 dim 1 : vector<2x256xf32>, i32 -> vector<2x256xf32>
    %cst_30 = arith.constant 0.000000e+00 : f32
    %157 = vector.shape_cast %92 : vector<1x256xi1> to vector<1x256xi1>
    %158 = vector.broadcast %157 : vector<1x256xi1> to vector<2x256xi1>
    %159 = vector.broadcast %cst_30 : f32 to vector<2x256xf32>
    %160 = arith.select %158, %156, %159 : vector<2x256xi1>, vector<2x256xf32>
    %161 = vector.broadcast %155 : f32 to vector<2x256xf32>
    %162 = arith.mulf %161, %160 : vector<2x256xf32>
    %163 = arith.addf %154, %162 : vector<2x256xf32>
    %c12 = arith.constant 12 : index
    %164 = memref.load %arg4[%c12] : memref<19xf32, #tpu.memory_space<smem>>
    %c1_i32_31 = arith.constant 1 : i32
    %165 = tpu.dynamic_rotate %83 by %c1_i32_31 dim 1 : vector<2x256xf32>, i32 -> vector<2x256xf32>
    %cst_32 = arith.constant 0.000000e+00 : f32
    %166 = vector.shape_cast %92 : vector<1x256xi1> to vector<1x256xi1>
    %167 = vector.broadcast %166 : vector<1x256xi1> to vector<2x256xi1>
    %168 = vector.broadcast %cst_32 : f32 to vector<2x256xf32>
    %169 = arith.select %167, %165, %168 : vector<2x256xi1>, vector<2x256xf32>
    %170 = vector.broadcast %164 : f32 to vector<2x256xf32>
    %171 = arith.mulf %170, %169 : vector<2x256xf32>
    %172 = arith.addf %163, %171 : vector<2x256xf32>
    %c4 = arith.constant 4 : index
    %173 = memref.load %arg4[%c4] : memref<19xf32, #tpu.memory_space<smem>>
    %174 = vector.broadcast %173 : f32 to vector<2x256xf32>
    %175 = arith.mulf %174, %80 : vector<2x256xf32>
    %176 = arith.addf %172, %175 : vector<2x256xf32>
    %c13 = arith.constant 13 : index
    %177 = memref.load %arg4[%c13] : memref<19xf32, #tpu.memory_space<smem>>
    %178 = vector.broadcast %177 : f32 to vector<2x256xf32>
    %179 = arith.mulf %178, %83 : vector<2x256xf32>
    %180 = arith.addf %176, %179 : vector<2x256xf32>
    %c5 = arith.constant 5 : index
    %181 = memref.load %arg4[%c5] : memref<19xf32, #tpu.memory_space<smem>>
    %c255_i32 = arith.constant 255 : i32
    %182 = tpu.dynamic_rotate %80 by %c255_i32 dim 1 : vector<2x256xf32>, i32 -> vector<2x256xf32>
    %cst_33 = arith.constant 0.000000e+00 : f32
    %183 = vector.shape_cast %94 : vector<1x256xi1> to vector<1x256xi1>
    %184 = vector.broadcast %183 : vector<1x256xi1> to vector<2x256xi1>
    %185 = vector.broadcast %cst_33 : f32 to vector<2x256xf32>
    %186 = arith.select %184, %182, %185 : vector<2x256xi1>, vector<2x256xf32>
    %187 = vector.broadcast %181 : f32 to vector<2x256xf32>
    %188 = arith.mulf %187, %186 : vector<2x256xf32>
    %189 = arith.addf %180, %188 : vector<2x256xf32>
    %c14 = arith.constant 14 : index
    %190 = memref.load %arg4[%c14] : memref<19xf32, #tpu.memory_space<smem>>
    %c255_i32_34 = arith.constant 255 : i32
    %191 = tpu.dynamic_rotate %83 by %c255_i32_34 dim 1 : vector<2x256xf32>, i32 -> vector<2x256xf32>
    %cst_35 = arith.constant 0.000000e+00 : f32
    %192 = vector.shape_cast %94 : vector<1x256xi1> to vector<1x256xi1>
    %193 = vector.broadcast %192 : vector<1x256xi1> to vector<2x256xi1>
    %194 = vector.broadcast %cst_35 : f32 to vector<2x256xf32>
    %195 = arith.select %193, %191, %194 : vector<2x256xi1>, vector<2x256xf32>
    %196 = vector.broadcast %190 : f32 to vector<2x256xf32>
    %197 = arith.mulf %196, %195 : vector<2x256xf32>
    %198 = arith.addf %189, %197 : vector<2x256xf32>
    %199 = arith.andi %90, %92 : vector<1x256xi1>
    %c6 = arith.constant 6 : index
    %200 = memref.load %arg4[%c6] : memref<19xf32, #tpu.memory_space<smem>>
    %c241_i32 = arith.constant 241 : i32
    %201 = tpu.dynamic_rotate %80 by %c241_i32 dim 1 : vector<2x256xf32>, i32 -> vector<2x256xf32>
    %cst_36 = arith.constant 0.000000e+00 : f32
    %202 = vector.shape_cast %199 : vector<1x256xi1> to vector<1x256xi1>
    %203 = vector.broadcast %202 : vector<1x256xi1> to vector<2x256xi1>
    %204 = vector.broadcast %cst_36 : f32 to vector<2x256xf32>
    %205 = arith.select %203, %201, %204 : vector<2x256xi1>, vector<2x256xf32>
    %206 = vector.broadcast %200 : f32 to vector<2x256xf32>
    %207 = arith.mulf %206, %205 : vector<2x256xf32>
    %208 = arith.addf %198, %207 : vector<2x256xf32>
    %c15 = arith.constant 15 : index
    %209 = memref.load %arg4[%c15] : memref<19xf32, #tpu.memory_space<smem>>
    %c241_i32_37 = arith.constant 241 : i32
    %210 = tpu.dynamic_rotate %83 by %c241_i32_37 dim 1 : vector<2x256xf32>, i32 -> vector<2x256xf32>
    %cst_38 = arith.constant 0.000000e+00 : f32
    %211 = vector.shape_cast %199 : vector<1x256xi1> to vector<1x256xi1>
    %212 = vector.broadcast %211 : vector<1x256xi1> to vector<2x256xi1>
    %213 = vector.broadcast %cst_38 : f32 to vector<2x256xf32>
    %214 = arith.select %212, %210, %213 : vector<2x256xi1>, vector<2x256xf32>
    %215 = vector.broadcast %209 : f32 to vector<2x256xf32>
    %216 = arith.mulf %215, %214 : vector<2x256xf32>
    %217 = arith.addf %208, %216 : vector<2x256xf32>
    %c7 = arith.constant 7 : index
    %218 = memref.load %arg4[%c7] : memref<19xf32, #tpu.memory_space<smem>>
    %c240_i32_39 = arith.constant 240 : i32
    %219 = tpu.dynamic_rotate %80 by %c240_i32_39 dim 1 : vector<2x256xf32>, i32 -> vector<2x256xf32>
    %cst_40 = arith.constant 0.000000e+00 : f32
    %220 = vector.shape_cast %90 : vector<1x256xi1> to vector<1x256xi1>
    %221 = vector.broadcast %220 : vector<1x256xi1> to vector<2x256xi1>
    %222 = vector.broadcast %cst_40 : f32 to vector<2x256xf32>
    %223 = arith.select %221, %219, %222 : vector<2x256xi1>, vector<2x256xf32>
    %224 = vector.broadcast %218 : f32 to vector<2x256xf32>
    %225 = arith.mulf %224, %223 : vector<2x256xf32>
    %226 = arith.addf %217, %225 : vector<2x256xf32>
    %c16 = arith.constant 16 : index
    %227 = memref.load %arg4[%c16] : memref<19xf32, #tpu.memory_space<smem>>
    %c240_i32_41 = arith.constant 240 : i32
    %228 = tpu.dynamic_rotate %83 by %c240_i32_41 dim 1 : vector<2x256xf32>, i32 -> vector<2x256xf32>
    %cst_42 = arith.constant 0.000000e+00 : f32
    %229 = vector.shape_cast %90 : vector<1x256xi1> to vector<1x256xi1>
    %230 = vector.broadcast %229 : vector<1x256xi1> to vector<2x256xi1>
    %231 = vector.broadcast %cst_42 : f32 to vector<2x256xf32>
    %232 = arith.select %230, %228, %231 : vector<2x256xi1>, vector<2x256xf32>
    %233 = vector.broadcast %227 : f32 to vector<2x256xf32>
    %234 = arith.mulf %233, %232 : vector<2x256xf32>
    %235 = arith.addf %226, %234 : vector<2x256xf32>
    %236 = arith.andi %90, %94 : vector<1x256xi1>
    %c8 = arith.constant 8 : index
    %237 = memref.load %arg4[%c8] : memref<19xf32, #tpu.memory_space<smem>>
    %c239_i32 = arith.constant 239 : i32
    %238 = tpu.dynamic_rotate %80 by %c239_i32 dim 1 : vector<2x256xf32>, i32 -> vector<2x256xf32>
    %cst_43 = arith.constant 0.000000e+00 : f32
    %239 = vector.shape_cast %236 : vector<1x256xi1> to vector<1x256xi1>
    %240 = vector.broadcast %239 : vector<1x256xi1> to vector<2x256xi1>
    %241 = vector.broadcast %cst_43 : f32 to vector<2x256xf32>
    %242 = arith.select %240, %238, %241 : vector<2x256xi1>, vector<2x256xf32>
    %243 = vector.broadcast %237 : f32 to vector<2x256xf32>
    %244 = arith.mulf %243, %242 : vector<2x256xf32>
    %245 = arith.addf %235, %244 : vector<2x256xf32>
    %c17 = arith.constant 17 : index
    %246 = memref.load %arg4[%c17] : memref<19xf32, #tpu.memory_space<smem>>
    %c239_i32_44 = arith.constant 239 : i32
    %247 = tpu.dynamic_rotate %83 by %c239_i32_44 dim 1 : vector<2x256xf32>, i32 -> vector<2x256xf32>
    %cst_45 = arith.constant 0.000000e+00 : f32
    %248 = vector.shape_cast %236 : vector<1x256xi1> to vector<1x256xi1>
    %249 = vector.broadcast %248 : vector<1x256xi1> to vector<2x256xi1>
    %250 = vector.broadcast %cst_45 : f32 to vector<2x256xf32>
    %251 = arith.select %249, %247, %250 : vector<2x256xi1>, vector<2x256xf32>
    %252 = vector.broadcast %246 : f32 to vector<2x256xf32>
    %253 = arith.mulf %252, %251 : vector<2x256xf32>
    %254 = arith.addf %245, %253 : vector<2x256xf32>
    %255 = arith.negf %254 : vector<2x256xf32>
    %256 = math.exp %255 : vector<2x256xf32>
    %cst_46 = arith.constant 1.000000e+00 : f32
    %257 = vector.broadcast %cst_46 : f32 to vector<2x256xf32>
    %258 = arith.addf %257, %256 : vector<2x256xf32>
    %259 = arith.divf %257, %258 : vector<2x256xf32>
    %260 = vector.shape_cast %259 : vector<2x256xf32> to vector<2x1x256xf32>
    %261 = vector.broadcast %260 : vector<2x1x256xf32> to vector<2x128x256xf32>
    %262 = arith.mulf %79, %261 : vector<2x128x256xf32>
    %263 = arith.addf %262, %0 : vector<2x128x256xf32>
    %c0_47 = arith.constant 0 : index
    %c0_48 = arith.constant 0 : index
    %c0_49 = arith.constant 0 : index
    %264 = vector.load %arg5[%c0_47, %c0_48, %c0_49] : memref<2x128x256xf32, #tpu.memory_space<vmem>>, vector<2x128x256xf32>
    tpu.vector_store %arg5[%c0_47, %c0_48, %c0_49], %263 {strides = array<i32>} : memref<2x128x256xf32, #tpu.memory_space<vmem>>, vector<2x128x256xf32>,
    return
  }
  func.func @transform_0(%arg0: i32) -> (i32, i32, i32) {
    %c0_i32 = arith.constant 0 : i32
    %c0_i32_0 = arith.constant 0 : i32
    %c0_i32_1 = arith.constant 0 : i32
    return %arg0, %c0_i32, %c0_i32_0 : i32, i32, i32
  }
  func.func @transform_1(%arg0: i32) -> (i32, i32) {
    %c0_i32 = arith.constant 0 : i32
    %c0_i32_0 = arith.constant 0 : i32
    %c0_i32_1 = arith.constant 0 : i32
    return %c0_i32, %c0_i32_0 : i32, i32
  }
  func.func @transform_2(%arg0: i32) -> (i32, i32) {
    %c0_i32 = arith.constant 0 : i32
    %c0_i32_0 = arith.constant 0 : i32
    %c0_i32_1 = arith.constant 0 : i32
    return %c0_i32, %c0_i32_0 : i32, i32
  }
  func.func @transform_3(%arg0: i32) -> i32 {
    %c0_i32 = arith.constant 0 : i32
    %c0_i32_0 = arith.constant 0 : i32
    return %c0_i32 : i32
  }
  func.func @transform_4(%arg0: i32) -> (i32, i32, i32) {
    %c0_i32 = arith.constant 0 : i32
    %c0_i32_0 = arith.constant 0 : i32
    %c0_i32_1 = arith.constant 0 : i32
    return %arg0, %c0_i32, %c0_i32_0 : i32, i32, i32
  }
}

</mosaic_0001>

<llo_original>
// kernel: tpu_custom_call.1
$region0: #{tpu_custom_call.1}
  #allocation0 [shape = 'u32[]', space=smem, size = 0x4, offset = 0x4, fixed_abs, tag = 'smem constant byte address 0x4 - core index']
  #allocation1 [shape = 'u32[72,128]{1,0:T(1,128)}', space=vmem, size = 0x9000, scoped, tag = 'internal scratch']
  %s0 = inlined_call_operand.hbm [shape: f32[8,128,256], index: 0, kind: input, shape index: {}]
  %s1 = inlined_call_operand.hbm [shape: f32[8,128], index: 1, kind: input, shape index: {}]
  %s2 = inlined_call_operand.hbm [shape: f32[8,128], index: 2, kind: input, shape index: {}]
  %s3 = inlined_call_operand.vmem [shape: f32[19], index: 3, kind: input, shape index: {}]
  %s4 = inlined_call_operand.hbm [shape: f32[8,128,256], index: 4, kind: output, shape index: {}]
  %s5 = sld [smem:[#allocation0]]
  $region65: #{tpu_custom_call.1} parent=0
    _
  %s7 = ssub.s32 1, %s5
  %s8 = scalar_select 0, %s7, %s5
  $region1: #{tpu_custom_call.1} parent=0
    #allocation2 [shape = 'u8[524288]{0}', space=vmem, size = 0x80000, scoped, tag = 'input window, operand 0']
    #allocation3 [shape = 's32[2]{0}', space=sflag, size = 0x8, scoped, tag = 'scoped memory for tpu_custom_call.1']
    #allocation4 [shape = 's32[2]{0}', space=sflag, size = 0x8, scoped, tag = 'scoped memory for tpu_custom_call.1']
    #allocation5 [shape = 's32[2]{0}', space=sflag, size = 0x8, scoped, tag = 'scoped memory for tpu_custom_call.1']
    #allocation6 [shape = 'u8[4096]{0}', space=vmem, size = 0x1000, scoped, tag = 'input window, operand 1, single buffered']
    #allocation7 [shape = 's32[1]{0}', space=sflag, size = 0x4, scoped, tag = 'scoped memory for tpu_custom_call.1']
    #allocation8 [shape = 'u8[4096]{0}', space=vmem, size = 0x1000, scoped, tag = 'input window, operand 2, single buffered']
    #allocation9 [shape = 'u8[512]{0}', space=smem, size = 0x200, scoped, tag = 'input window, operand 3, single buffered']
    #allocation10 [shape = 'u8[524288]{0}', space=vmem, size = 0x80000, scoped, tag = 'output window, operand 0']
    %9 = vsyncpa [#allocation3], 0
    %s10 = scalar_lea.sflag [#allocation3], 1
    %11 = vsyncpa %s10, 0
    %12 = vsyncpa [#allocation7], 0
    %13 = vsyncpa [#allocation5], 0
    %14 = vsyncpa [#allocation4], 0
    %s15 = scalar_lea.sflag [#allocation4], 1
    %16 = vsyncpa %s15, 0
    loop: start=0, step=1, limit=6
    $region2: #{tpu_custom_call.1} parent=1 // loop_pre_header
      _
    $region3: #{tpu_custom_call.1} parent=1 // loop_header
      %s18 = sphi 0, %s22
      %p19 = scmp.ge.s32.totalorder %s18, 6
      %s28 = sphi 0, %s30
      %s31 = sphi 0, %s28
      %s32 = sphi 0, %s31
      %s48 = sphi 0, %s32
      %s52 = sphi 0, %s52
      %s54 = sphi 0, %s52
      %s55 = sphi 0, %s54
      %s69 = sphi 0, %s55
      %s73 = sphi 0, %s73
      %s75 = sphi 0, %s73
      %s76 = sphi 0, %s75
      %s90 = sphi 0, %s76
      %s94 = sphi 0, %s94
      %s96 = sphi 0, %s94
      %s97 = sphi 0, %s96
      %s111 = sphi 0, %s97
      %s117 = sphi 0, %s119
      %s120 = sphi 0, %s117
      %s121 = sphi 0, %s120
      %s137 = sphi 0, %s121
    $region4: #{tpu_custom_call.1} parent=1 // loop_header_branch
      %21 = sbr.rel (%p19) target = $region8
    $region5: #{tpu_custom_call.1} parent=1 // loop_body
      %s23 = ssub.s32 %s18, 1
      %s24 = ssub.s32 %s18, 2
      %s25 = sadd.s32 %s18, 1
      %s26 = ssub.s32 %s18, %s25
      %p27 = scmp.eq.s32.totalorder %s26, 0
      %s29 = sadd.s32 %s28, 1
      %s30 = scalar_select %p27, %s28, %s29
      %p33 = pneg %p27
      %p34 = scmp.eq.s32.totalorder %s18, 3
      %p35 = por %p33, %p34
      %p36 = scmp.ne.s32.totalorder %s28, %s31
      %p37 = scmp.eq.s32.totalorder %s18, 0
      %p38 = por %p36, %p37
      %p39 = scmp.ne.s32.totalorder %s28, %s31
      %p40 = scmp.eq.s32.totalorder %s23, 3
      %p41 = por %p39, %p40
      %p42 = scmp.ne.s32.totalorder %s31, %s32
      %p43 = scmp.eq.s32.totalorder %s23, 0
      %p44 = por %p42, %p43
      %p45 = scmp.ne.s32.totalorder %s31, %s32
      %p46 = scmp.eq.s32.totalorder %s24, 3
      %p47 = por %p45, %p46
      %p49 = scmp.ne.s32.totalorder %s32, %s48
      %p50 = scmp.eq.s32.totalorder %s24, 0
      %p51 = por %p49, %p50
      %s53 = sadd.s32 %s52, 1
      %p56 = scmp.eq.s32.totalorder %s18, 3
      %p57 = scmp.ne.s32.totalorder %s52, %s54
      %p58 = scmp.eq.s32.totalorder %s18, 0
      %p59 = por %p57, %p58
      %p60 = scmp.ne.s32.totalorder %s52, %s54
      %p61 = scmp.eq.s32.totalorder %s23, 3
      %p62 = por %p60, %p61
      %p63 = scmp.ne.s32.totalorder %s54, %s55
      %p64 = scmp.eq.s32.totalorder %s23, 0
      %p65 = por %p63, %p64
      %p66 = scmp.ne.s32.totalorder %s54, %s55
      %p67 = scmp.eq.s32.totalorder %s24, 3
      %p68 = por %p66, %p67
      %p70 = scmp.ne.s32.totalorder %s55, %s69
      %p71 = scmp.eq.s32.totalorder %s24, 0
      %p72 = por %p70, %p71
      %s74 = sadd.s32 %s73, 1
      %p77 = scmp.eq.s32.totalorder %s18, 3
      %p78 = scmp.ne.s32.totalorder %s73, %s75
      %p79 = scmp.eq.s32.totalorder %s18, 0
      %p80 = por %p78, %p79
      %p81 = scmp.ne.s32.totalorder %s73, %s75
      %p82 = scmp.eq.s32.totalorder %s23, 3
      %p83 = por %p81, %p82
      %p84 = scmp.ne.s32.totalorder %s75, %s76
      %p85 = scmp.eq.s32.totalorder %s23, 0
      %p86 = por %p84, %p85
      %p87 = scmp.ne.s32.totalorder %s75, %s76
      %p88 = scmp.eq.s32.totalorder %s24, 3
      %p89 = por %p87, %p88
      %p91 = scmp.ne.s32.totalorder %s76, %s90
      %p92 = scmp.eq.s32.totalorder %s24, 0
      %p93 = por %p91, %p92
      %s95 = sadd.s32 %s94, 1
      %p98 = scmp.eq.s32.totalorder %s18, 3
      %p99 = scmp.ne.s32.totalorder %s94, %s96
      %p100 = scmp.eq.s32.totalorder %s18, 0
      %p101 = por %p99, %p100
      %p102 = scmp.ne.s32.totalorder %s94, %s96
      %p103 = scmp.eq.s32.totalorder %s23, 3
      %p104 = por %p102, %p103
      %p105 = scmp.ne.s32.totalorder %s96, %s97
      %p106 = scmp.eq.s32.totalorder %s23, 0
      %p107 = por %p105, %p106
      %p108 = scmp.ne.s32.totalorder %s96, %s97
      %p109 = scmp.eq.s32.totalorder %s24, 3
      %p110 = por %p108, %p109
      %p112 = scmp.ne.s32.totalorder %s97, %s111
      %p113 = scmp.eq.s32.totalorder %s24, 0
      %p114 = por %p112, %p113
      %s115 = ssub.s32 %s18, %s25
      %p116 = scmp.eq.s32.totalorder %s115, 0
      %s118 = sadd.s32 %s117, 1
      %s119 = scalar_select %p116, %s117, %s118
      %p122 = pneg %p116
      %p123 = scmp.eq.s32.totalorder %s18, 3
      %p124 = por %p122, %p123
      %p125 = scmp.ne.s32.totalorder %s117, %s120
      %p126 = scmp.eq.s32.totalorder %s18, 0
      %p127 = por %p125, %p126
      %p128 = scmp.ne.s32.totalorder %s117, %s120
      %p129 = scmp.eq.s32.totalorder %s23, 3
      %p130 = por %p128, %p129
      %p131 = scmp.ne.s32.totalorder %s120, %s121
      %p132 = scmp.eq.s32.totalorder %s23, 0
      %p133 = por %p131, %p132
      %p134 = scmp.ne.s32.totalorder %s120, %s121
      %p135 = scmp.eq.s32.totalorder %s24, 3
      %p136 = por %p134, %p135
      %p138 = scmp.ne.s32.totalorder %s121, %s137
      %p139 = scmp.eq.s32.totalorder %s24, 0
      %p140 = por %p138, %p139
      %p141 = scmp.le.s32.totalorder 1, %s18
      %p142 = scmp.lt.s32.totalorder %s18, 5
      %p143 = pnand %p141, %p142
      %p144 = pneg %p143
      // Predicated region
      $region9: #{tpu_custom_call.1} parent=5 // pred_check
        _
      $region10: #{tpu_custom_call.1} parent=5 // pred_check_branch
        %146 = sbr.rel (%p143) target = $region12
      $region11: #{tpu_custom_call.1} parent=5 // pred_region
        %s147 = ssub.s32 %s18, 1
        // Predicated region
        $region13: #{tpu_custom_call.1} parent=11 // pred_check
          %p148 = pneg %p65
        $region14: #{tpu_custom_call.1} parent=11 // pred_check_branch
          %150 = sbr.rel (%p148) target = $region16
        $region15: #{tpu_custom_call.1} parent=11 // pred_region
          %152 = vsyncadd [#allocation7], 0
          %s154 = sshll.u32 %s1, 4
          %s155 = int_to_ptr.hbm [resolvable:$true] %s154
          %s156 = sshll.u32 [#allocation6], 4
          %s157 = int_to_ptr.vmem [resolvable:$true] %s156
          %159 = dma.hbm_to_vmem [thread:$0]  %s155, 128, %s157, [#allocation7]
        $region16: #{tpu_custom_call.1} parent=11 // pred_fallthru
          _
        // Predicated region
        $region17: #{tpu_custom_call.1} parent=11 // pred_check
          %p160 = pneg %p86
        $region18: #{tpu_custom_call.1} parent=11 // pred_check_branch
          %162 = sbr.rel (%p160) target = $region20
        $region19: #{tpu_custom_call.1} parent=11 // pred_region
          %164 = vsyncadd [#allocation7], 0
          %s166 = sshll.u32 %s2, 4
          %s167 = int_to_ptr.hbm [resolvable:$true] %s166
          %s168 = sshll.u32 [#allocation8], 4
          %s169 = int_to_ptr.vmem [resolvable:$true] %s168
          %171 = dma.hbm_to_vmem [thread:$0]  %s167, 128, %s169, [#allocation7]
        $region20: #{tpu_custom_call.1} parent=11 // pred_fallthru
          _
        // Predicated region
        $region21: #{tpu_custom_call.1} parent=11 // pred_check
          %p172 = pneg %p107
        $region22: #{tpu_custom_call.1} parent=11 // pred_check_branch
          %174 = sbr.rel (%p172) target = $region24
        $region23: #{tpu_custom_call.1} parent=11 // pred_region
          %176 = vsyncadd [#allocation5], 0
          %s178 = sshll.u32 %s3, 4
          %s179 = int_to_ptr.vmem [resolvable:$true] %s178
          %181 = dma.vmem_to_smem %s179, 16, [#allocation9], [#allocation5]
        $region24: #{tpu_custom_call.1} parent=11 // pred_fallthru
          _
      $region12: #{tpu_custom_call.1} parent=5 // pred_fallthru
        _
      %p182 = scmp.lt.s32.totalorder %s18, 4
      // Predicated region
      $region25: #{tpu_custom_call.1} parent=5 // pred_check
        %p183 = pneg %p182
      $region26: #{tpu_custom_call.1} parent=5 // pred_check_branch
        %185 = sbr.rel (%p183) target = $region28
      $region27: #{tpu_custom_call.1} parent=5 // pred_region
        // Predicated region
        $region29: #{tpu_custom_call.1} parent=27 // pred_check
          %p186 = pneg %p38
        $region30: #{tpu_custom_call.1} parent=27 // pred_check_branch
          %188 = sbr.rel (%p186) target = $region32
        $region31: #{tpu_custom_call.1} parent=27 // pred_region
          %s189 = sand.u32 %s28, 1
          %s190 = scalar_lea.sflag [#allocation3], %s189
          %s191 = sand.u32 %s28, 1
          %s192 = smul.addr %s191, 512
          %s193 = scalar_lea.vmem [#allocation2], %s192
          %s194 = smul.u32 2, %s18
          %196 = vsyncadd %s190, 0
          %s197 = smul.addr %s194, 32
          %s198 = smul.addr %s197, 8
          %s199 = scalar_lea.hbm %s0, %s198
          %s200 = sshll.u32 %s199, 4
          %s201 = int_to_ptr.hbm [resolvable:$true] %s200
          %s202 = sshll.u32 %s193, 4
          %s203 = int_to_ptr.vmem [resolvable:$true] %s202
          %208 = dma.hbm_to_vmem [thread:$0]  %s201, 8192, %s203, %s190, 256, 256, 16
        $region32: #{tpu_custom_call.1} parent=27 // pred_fallthru
          _
      $region28: #{tpu_custom_call.1} parent=5 // pred_fallthru
        _
      %p209 = scmp.le.s32.totalorder 1, %s18
      %p210 = scmp.lt.s32.totalorder %s18, 5
      %p211 = pnand %p209, %p210
      %p212 = pneg %p211
      // Predicated region
      $region33: #{tpu_custom_call.1} parent=5 // pred_check
        _
      $region34: #{tpu_custom_call.1} parent=5 // pred_check_branch
        %214 = sbr.rel (%p211) target = $region36
      $region35: #{tpu_custom_call.1} parent=5 // pred_region
        %s215 = ssub.s32 %s18, 1
        %s216 = sand.u32 %s31, 1
        %s217 = scalar_lea.sflag [#allocation3], %s216
        %s218 = sand.u32 %s31, 1
        %s219 = smul.addr %s218, 512
        %s220 = scalar_lea.vmem [#allocation2], %s219
        // Predicated region
        $region37: #{tpu_custom_call.1} parent=35 // pred_check
          %p221 = pneg %p44
        $region38: #{tpu_custom_call.1} parent=35 // pred_check_branch
          %223 = sbr.rel (%p221) target = $region40
        $region39: #{tpu_custom_call.1} parent=35 // pred_region
          %225 = dma.done %s217, 8192
        $region40: #{tpu_custom_call.1} parent=35 // pred_fallthru
          _
        // Predicated region
        $region41: #{tpu_custom_call.1} parent=35 // pred_check
          %p226 = pneg %p65
        $region42: #{tpu_custom_call.1} parent=35 // pred_check_branch
          %228 = sbr.rel (%p226) target = $region44
        $region43: #{tpu_custom_call.1} parent=35 // pred_region
          %230 = dma.done [#allocation7], 128
        $region44: #{tpu_custom_call.1} parent=35 // pred_fallthru
          _
        // Predicated region
        $region45: #{tpu_custom_call.1} parent=35 // pred_check
          %p231 = pneg %p86
        $region46: #{tpu_custom_call.1} parent=35 // pred_check_branch
          %233 = sbr.rel (%p231) target = $region48
        $region47: #{tpu_custom_call.1} parent=35 // pred_region
          %235 = dma.done [#allocation7], 128
        $region48: #{tpu_custom_call.1} parent=35 // pred_fallthru
          _
        // Predicated region
        $region49: #{tpu_custom_call.1} parent=35 // pred_check
          %p236 = pneg %p107
        $region50: #{tpu_custom_call.1} parent=35 // pred_check_branch
          %238 = sbr.rel (%p236) target = $region52
        $region51: #{tpu_custom_call.1} parent=35 // pred_region
          %240 = dma.done [#allocation5], 16
        $region52: #{tpu_custom_call.1} parent=35 // pred_fallthru
          _
        %241 = sfence
        %s242 = sand.u32 %s31, 1
        %s243 = scalar_lea.sflag [#allocation3], %s242
        %s244 = sand.u32 %s31, 1
        %s245 = smul.addr %s244, 512
        %s246 = scalar_lea.vmem [#allocation2], %s245
        %p247 = pneg %p44
        %p248 = pneg %p41
        %p249 = pneg %p65
        %p250 = pneg %p62
        %p251 = pneg %p86
        %p252 = pneg %p83
        %p253 = pneg %p107
        %p254 = pneg %p104
        %p255 = pneg %p133
        %p256 = pneg %p130
        %s257 = sand.u32 %s120, 1
        %s258 = scalar_lea.sflag [#allocation4], %s257
        %s259 = sand.u32 %s120, 1
        %s260 = smul.addr %s259, 512
        %s261 = scalar_lea.vmem [#allocation10], %s260
        %s262 = smul.u32 2, %s23
        %s263 = smul.u32 2, %s23
        %v264 = vld [vmem:[%s220] sm:$0xff]
        %v265 = vld [vmem:[%s220 + $0x8] sm:$0xff]
        %v266 = vld [vmem:[%s220 + $0x10] sm:$0xff]
        %v267 = vld [vmem:[%s220 + $0x18] sm:$0xff]
        %v268 = vld [vmem:[%s220 + $0x20] sm:$0xff]
        %v269 = vld [vmem:[%s220 + $0x28] sm:$0xff]
        %v270 = vld [vmem:[%s220 + $0x30] sm:$0xff]
        %v271 = vld [vmem:[%s220 + $0x38] sm:$0xff]
        %v272 = vld [vmem:[%s220 + $0x40] sm:$0xff]
        %v273 = vld [vmem:[%s220 + $0x48] sm:$0xff]
        %v274 = vld [vmem:[%s220 + $0x50] sm:$0xff]
        %v275 = vld [vmem:[%s220 + $0x58] sm:$0xff]
        %v276 = vld [vmem:[%s220 + $0x60] sm:$0xff]
        %v277 = vld [vmem:[%s220 + $0x68] sm:$0xff]
        %v278 = vld [vmem:[%s220 + $0x70] sm:$0xff]
        %v279 = vld [vmem:[%s220 + $0x78] sm:$0xff]
        %v280 = vld [vmem:[%s220 + $0x80] sm:$0xff]
        %v281 = vld [vmem:[%s220 + $0x88] sm:$0xff]
        %v282 = vld [vmem:[%s220 + $0x90] sm:$0xff]
        %v283 = vld [vmem:[%s220 + $0x98] sm:$0xff]
        %v284 = vld [vmem:[%s220 + $0xa0] sm:$0xff]
        %v285 = vld [vmem:[%s220 + $0xa8] sm:$0xff]
        %v286 = vld [vmem:[%s220 + $0xb0] sm:$0xff]
        %v287 = vld [vmem:[%s220 + $0xb8] sm:$0xff]
        %v288 = vld [vmem:[%s220 + $0xc0] sm:$0xff]
        %v289 = vld [vmem:[%s220 + $0xc8] sm:$0xff]
        %v290 = vld [vmem:[%s220 + $0xd0] sm:$0xff]
        %v291 = vld [vmem:[%s220 + $0xd8] sm:$0xff]
        %v292 = vld [vmem:[%s220 + $0xe0] sm:$0xff]
        %v293 = vld [vmem:[%s220 + $0xe8] sm:$0xff]
        %v294 = vld [vmem:[%s220 + $0xf0] sm:$0xff]
        %v295 = vld [vmem:[%s220 + $0xf8] sm:$0xff]
        %v296 = vld [vmem:[%s220 + $0x100] sm:$0xff]
        %v297 = vld [vmem:[%s220 + $0x108] sm:$0xff]
        %v298 = vld [vmem:[%s220 + $0x110] sm:$0xff]
        %v299 = vld [vmem:[%s220 + $0x118] sm:$0xff]
        %v300 = vld [vmem:[%s220 + $0x120] sm:$0xff]
        %v301 = vld [vmem:[%s220 + $0x128] sm:$0xff]
        %v302 = vld [vmem:[%s220 + $0x130] sm:$0xff]
        %v303 = vld [vmem:[%s220 + $0x138] sm:$0xff]
        %v304 = vld [vmem:[%s220 + $0x140] sm:$0xff]
        %v305 = vld [vmem:[%s220 + $0x148] sm:$0xff]
        %v306 = vld [vmem:[%s220 + $0x150] sm:$0xff]
        %v307 = vld [vmem:[%s220 + $0x158] sm:$0xff]
        %v308 = vld [vmem:[%s220 + $0x160] sm:$0xff]
        %v309 = vld [vmem:[%s220 + $0x168] sm:$0xff]
        %v310 = vld [vmem:[%s220 + $0x170] sm:$0xff]
        %v311 = vld [vmem:[%s220 + $0x178] sm:$0xff]
        %v312 = vld [vmem:[%s220 + $0x180] sm:$0xff]
        %v313 = vld [vmem:[%s220 + $0x188] sm:$0xff]
        %v314 = vld [vmem:[%s220 + $0x190] sm:$0xff]
        %v315 = vld [vmem:[%s220 + $0x198] sm:$0xff]
        %v316 = vld [vmem:[%s220 + $0x1a0] sm:$0xff]
        %v317 = vld [vmem:[%s220 + $0x1a8] sm:$0xff]
        %v318 = vld [vmem:[%s220 + $0x1b0] sm:$0xff]
        %v319 = vld [vmem:[%s220 + $0x1b8] sm:$0xff]
        %v320 = vld [vmem:[%s220 + $0x1c0] sm:$0xff]
        %v321 = vld [vmem:[%s220 + $0x1c8] sm:$0xff]
        %v322 = vld [vmem:[%s220 + $0x1d0] sm:$0xff]
        %v323 = vld [vmem:[%s220 + $0x1d8] sm:$0xff]
        %v324 = vld [vmem:[%s220 + $0x1e0] sm:$0xff]
        %v325 = vld [vmem:[%s220 + $0x1e8] sm:$0xff]
        %v326 = vld [vmem:[%s220 + $0x1f0] sm:$0xff]
        %v327 = vld [vmem:[%s220 + $0x1f8] sm:$0xff]
        %v328 = vmax.f32 %v264, %v265
        %329 = vmax.xlane.f32.xlu0 %v328
        %v330 = vpop.xlane.xlu0 %329
        %v331 = vmax.f32 %v266, %v267
        %332 = vmax.xlane.f32.xlu0 %v331
        %v333 = vpop.xlane.xlu0 %332
        %v334 = vmax.f32 %v268, %v269
        %335 = vmax.xlane.f32.xlu0 %v334
        %v336 = vpop.xlane.xlu0 %335
        %v337 = vmax.f32 %v270, %v271
        %338 = vmax.xlane.f32.xlu0 %v337
        %v339 = vpop.xlane.xlu0 %338
        %v340 = vmax.f32 %v272, %v273
        %341 = vmax.xlane.f32.xlu0 %v340
        %v342 = vpop.xlane.xlu0 %341
        %v343 = vmax.f32 %v274, %v275
        %344 = vmax.xlane.f32.xlu0 %v343
        %v345 = vpop.xlane.xlu0 %344
        %v346 = vmax.f32 %v276, %v277
        %347 = vmax.xlane.f32.xlu0 %v346
        %v348 = vpop.xlane.xlu0 %347
        %v349 = vmax.f32 %v278, %v279
        %350 = vmax.xlane.f32.xlu0 %v349
        %v351 = vpop.xlane.xlu0 %350
        %v352 = vmax.f32 %v280, %v281
        %353 = vmax.xlane.f32.xlu0 %v352
        %v354 = vpop.xlane.xlu0 %353
        %v355 = vmax.f32 %v282, %v283
        %356 = vmax.xlane.f32.xlu0 %v355
        %v357 = vpop.xlane.xlu0 %356
        %v358 = vmax.f32 %v284, %v285
        %359 = vmax.xlane.f32.xlu0 %v358
        %v360 = vpop.xlane.xlu0 %359
        %v361 = vmax.f32 %v286, %v287
        %362 = vmax.xlane.f32.xlu0 %v361
        %v363 = vpop.xlane.xlu0 %362
        %v364 = vmax.f32 %v288, %v289
        %365 = vmax.xlane.f32.xlu0 %v364
        %v366 = vpop.xlane.xlu0 %365
        %v367 = vmax.f32 %v290, %v291
        %368 = vmax.xlane.f32.xlu0 %v367
        %v369 = vpop.xlane.xlu0 %368
        %v370 = vmax.f32 %v292, %v293
        %371 = vmax.xlane.f32.xlu0 %v370
        %v372 = vpop.xlane.xlu0 %371
        %v373 = vmax.f32 %v294, %v295
        %374 = vmax.xlane.f32.xlu0 %v373
        %v375 = vpop.xlane.xlu0 %374
        %v376 = vmax.f32 %v296, %v297
        %377 = vmax.xlane.f32.xlu0 %v376
        %v378 = vpop.xlane.xlu0 %377
        %v379 = vmax.f32 %v298, %v299
        %380 = vmax.xlane.f32.xlu0 %v379
        %v381 = vpop.xlane.xlu0 %380
        %v382 = vmax.f32 %v300, %v301
        %383 = vmax.xlane.f32.xlu0 %v382
        %v384 = vpop.xlane.xlu0 %383
        %v385 = vmax.f32 %v302, %v303
        %386 = vmax.xlane.f32.xlu0 %v385
        %v387 = vpop.xlane.xlu0 %386
        %v388 = vmax.f32 %v304, %v305
        %389 = vmax.xlane.f32.xlu0 %v388
        %v390 = vpop.xlane.xlu0 %389
        %v391 = vmax.f32 %v306, %v307
        %392 = vmax.xlane.f32.xlu0 %v391
        %v393 = vpop.xlane.xlu0 %392
        %v394 = vmax.f32 %v308, %v309
        %395 = vmax.xlane.f32.xlu0 %v394
        %v396 = vpop.xlane.xlu0 %395
        %v397 = vmax.f32 %v310, %v311
        %398 = vmax.xlane.f32.xlu0 %v397
        %v399 = vpop.xlane.xlu0 %398
        %v400 = vmax.f32 %v312, %v313
        %401 = vmax.xlane.f32.xlu0 %v400
        %v402 = vpop.xlane.xlu0 %401
        %v403 = vmax.f32 %v314, %v315
        %404 = vmax.xlane.f32.xlu0 %v403
        %v405 = vpop.xlane.xlu0 %404
        %v406 = vmax.f32 %v316, %v317
        %407 = vmax.xlane.f32.xlu0 %v406
        %v408 = vpop.xlane.xlu0 %407
        %v409 = vmax.f32 %v318, %v319
        %410 = vmax.xlane.f32.xlu0 %v409
        %v411 = vpop.xlane.xlu0 %410
        %v412 = vmax.f32 %v320, %v321
        %413 = vmax.xlane.f32.xlu0 %v412
        %v414 = vpop.xlane.xlu0 %413
        %v415 = vmax.f32 %v322, %v323
        %416 = vmax.xlane.f32.xlu0 %v415
        %v417 = vpop.xlane.xlu0 %416
        %v418 = vmax.f32 %v324, %v325
        %419 = vmax.xlane.f32.xlu0 %v418
        %v420 = vpop.xlane.xlu0 %419
        %v421 = vmax.f32 %v326, %v327
        %422 = vmax.xlane.f32.xlu0 %v421
        %v423 = vpop.xlane.xlu0 %422
        %v424 = vadd.f32 %v264, %v265
        %425 = vadd.xlane.f32.xlu0 %v424
        %v426 = vpop.xlane.xlu0 %425
        %v427 = vadd.f32 %v266, %v267
        %428 = vadd.xlane.f32.xlu0 %v427
        %v429 = vpop.xlane.xlu0 %428
        %v430 = vadd.f32 %v268, %v269
        %431 = vadd.xlane.f32.xlu0 %v430
        %v432 = vpop.xlane.xlu0 %431
        %v433 = vadd.f32 %v270, %v271
        %434 = vadd.xlane.f32.xlu0 %v433
        %v435 = vpop.xlane.xlu0 %434
        %v436 = vadd.f32 %v272, %v273
        %437 = vadd.xlane.f32.xlu0 %v436
        %v438 = vpop.xlane.xlu0 %437
        %v439 = vadd.f32 %v274, %v275
        %440 = vadd.xlane.f32.xlu0 %v439
        %v441 = vpop.xlane.xlu0 %440
        %v442 = vadd.f32 %v276, %v277
        %443 = vadd.xlane.f32.xlu0 %v442
        %v444 = vpop.xlane.xlu0 %443
        %v445 = vadd.f32 %v278, %v279
        %446 = vadd.xlane.f32.xlu0 %v445
        %v447 = vpop.xlane.xlu0 %446
        %v448 = vadd.f32 %v280, %v281
        %449 = vadd.xlane.f32.xlu0 %v448
        %v450 = vpop.xlane.xlu0 %449
        %v451 = vadd.f32 %v282, %v283
        %452 = vadd.xlane.f32.xlu0 %v451
        %v453 = vpop.xlane.xlu0 %452
        %v454 = vadd.f32 %v284, %v285
        %455 = vadd.xlane.f32.xlu0 %v454
        %v456 = vpop.xlane.xlu0 %455
        %v457 = vadd.f32 %v286, %v287
        %458 = vadd.xlane.f32.xlu0 %v457
        %v459 = vpop.xlane.xlu0 %458
        %v460 = vadd.f32 %v288, %v289
        %461 = vadd.xlane.f32.xlu0 %v460
        %v462 = vpop.xlane.xlu0 %461
        %v463 = vadd.f32 %v290, %v291
        %464 = vadd.xlane.f32.xlu0 %v463
        %v465 = vpop.xlane.xlu0 %464
        %v466 = vadd.f32 %v292, %v293
        %467 = vadd.xlane.f32.xlu0 %v466
        %v468 = vpop.xlane.xlu0 %467
        %v469 = vadd.f32 %v294, %v295
        %470 = vadd.xlane.f32.xlu0 %v469
        %v471 = vpop.xlane.xlu0 %470
        %v472 = vadd.f32 %v296, %v297
        %473 = vadd.xlane.f32.xlu0 %v472
        %v474 = vpop.xlane.xlu0 %473
        %v475 = vadd.f32 %v298, %v299
        %476 = vadd.xlane.f32.xlu0 %v475
        %v477 = vpop.xlane.xlu0 %476
        %v478 = vadd.f32 %v300, %v301
        %479 = vadd.xlane.f32.xlu0 %v478
        %v480 = vpop.xlane.xlu0 %479
        %v481 = vadd.f32 %v302, %v303
        %482 = vadd.xlane.f32.xlu0 %v481
        %v483 = vpop.xlane.xlu0 %482
        %v484 = vadd.f32 %v304, %v305
        %485 = vadd.xlane.f32.xlu0 %v484
        %v486 = vpop.xlane.xlu0 %485
        %v487 = vadd.f32 %v306, %v307
        %488 = vadd.xlane.f32.xlu0 %v487
        %v489 = vpop.xlane.xlu0 %488
        %v490 = vadd.f32 %v308, %v309
        %491 = vadd.xlane.f32.xlu0 %v490
        %v492 = vpop.xlane.xlu0 %491
        %v493 = vadd.f32 %v310, %v311
        %494 = vadd.xlane.f32.xlu0 %v493
        %v495 = vpop.xlane.xlu0 %494
        %v496 = vadd.f32 %v312, %v313
        %497 = vadd.xlane.f32.xlu0 %v496
        %v498 = vpop.xlane.xlu0 %497
        %v499 = vadd.f32 %v314, %v315
        %500 = vadd.xlane.f32.xlu0 %v499
        %v501 = vpop.xlane.xlu0 %500
        %v502 = vadd.f32 %v316, %v317
        %503 = vadd.xlane.f32.xlu0 %v502
        %v504 = vpop.xlane.xlu0 %503
        %v505 = vadd.f32 %v318, %v319
        %506 = vadd.xlane.f32.xlu0 %v505
        %v507 = vpop.xlane.xlu0 %506
        %v508 = vadd.f32 %v320, %v321
        %509 = vadd.xlane.f32.xlu0 %v508
        %v510 = vpop.xlane.xlu0 %509
        %v511 = vadd.f32 %v322, %v323
        %512 = vadd.xlane.f32.xlu0 %v511
        %v513 = vpop.xlane.xlu0 %512
        %v514 = vadd.f32 %v324, %v325
        %515 = vadd.xlane.f32.xlu0 %v514
        %v516 = vpop.xlane.xlu0 %515
        %v517 = vadd.f32 %v326, %v327
        %518 = vadd.xlane.f32.xlu0 %v517
        %v519 = vpop.xlane.xlu0 %518
        %v520 = vmul.f32 %v426, 0.00390625
        %v521 = vmul.f32 %v429, 0.00390625
        %v522 = vmul.f32 %v432, 0.00390625
        %v523 = vmul.f32 %v435, 0.00390625
        %v524 = vmul.f32 %v438, 0.00390625
        %v525 = vmul.f32 %v441, 0.00390625
        %v526 = vmul.f32 %v444, 0.00390625
        %v527 = vmul.f32 %v447, 0.00390625
        %v528 = vmul.f32 %v450, 0.00390625
        %v529 = vmul.f32 %v453, 0.00390625
        %v530 = vmul.f32 %v456, 0.00390625
        %v531 = vmul.f32 %v459, 0.00390625
        %v532 = vmul.f32 %v462, 0.00390625
        %v533 = vmul.f32 %v465, 0.00390625
        %v534 = vmul.f32 %v468, 0.00390625
        %v535 = vmul.f32 %v471, 0.00390625
        %v536 = vmul.f32 %v474, 0.00390625
        %v537 = vmul.f32 %v477, 0.00390625
        %v538 = vmul.f32 %v480, 0.00390625
        %v539 = vmul.f32 %v483, 0.00390625
        %v540 = vmul.f32 %v486, 0.00390625
        %v541 = vmul.f32 %v489, 0.00390625
        %v542 = vmul.f32 %v492, 0.00390625
        %v543 = vmul.f32 %v495, 0.00390625
        %v544 = vmul.f32 %v498, 0.00390625
        %v545 = vmul.f32 %v501, 0.00390625
        %v546 = vmul.f32 %v504, 0.00390625
        %v547 = vmul.f32 %v507, 0.00390625
        %v548 = vmul.f32 %v510, 0.00390625
        %v549 = vmul.f32 %v513, 0.00390625
        %v550 = vmul.f32 %v516, 0.00390625
        %v551 = vmul.f32 %v519, 0.00390625
        %v584 = vlaneseq
        %v585 = vand.u32 %v584, 127
        %v586 = vperm.slane %v330, %v585
        %v587 = vadd.s32 %v585, 4294967288
        %v588 = vperm.slane %v333, %v587
        %vm589 = vcmask 130112
        %v590 = vsel %vm589, %v588, %v586
        %v591 = vadd.s32 %v585, 4294967280
        %v592 = vperm.slane %v336, %v591
        %vm593 = vcmask 195712
        %v594 = vsel %vm593, %v592, %v590
        %v595 = vadd.s32 %v585, 4294967272
        %v596 = vperm.slane %v339, %v595
        %vm597 = vcmask 261312
        %v598 = vsel %vm597, %v596, %v594
        %v599 = vadd.s32 %v585, 4294967264
        %v600 = vperm.slane %v342, %v599
        %vm601 = vcmask 326912
        %v602 = vsel %vm601, %v600, %v598
        %v603 = vadd.s32 %v585, 4294967256
        %v604 = vperm.slane %v345, %v603
        %vm605 = vcmask 392512
        %v606 = vsel %vm605, %v604, %v602
        %v607 = vadd.s32 %v585, 4294967248
        %v608 = vperm.slane %v348, %v607
        %vm609 = vcmask 458112
        %v610 = vsel %vm609, %v608, %v606
        %v611 = vadd.s32 %v585, 4294967240
        %v612 = vperm.slane %v351, %v611
        %vm613 = vcmask 523712
        %v614 = vsel %vm613, %v612, %v610
        %v615 = vadd.s32 %v585, 4294967232
        %v616 = vperm.slane %v354, %v615
        %vm617 = vcmask 589312
        %v618 = vsel %vm617, %v616, %v614
        %v619 = vadd.s32 %v585, 4294967224
        %v620 = vperm.slane %v357, %v619
        %vm621 = vcmask 654912
        %v622 = vsel %vm621, %v620, %v618
        %v623 = vadd.s32 %v585, 4294967216
        %v624 = vperm.slane %v360, %v623
        %vm625 = vcmask 720512
        %v626 = vsel %vm625, %v624, %v622
        %v627 = vadd.s32 %v585, 4294967208
        %v628 = vperm.slane %v363, %v627
        %vm629 = vcmask 786112
        %v630 = vsel %vm629, %v628, %v626
        %v631 = vadd.s32 %v585, 4294967200
        %v632 = vperm.slane %v366, %v631
        %vm633 = vcmask 851712
        %v634 = vsel %vm633, %v632, %v630
        %v635 = vadd.s32 %v585, 4294967192
        %v636 = vperm.slane %v369, %v635
        %vm637 = vcmask 917312
        %v638 = vsel %vm637, %v636, %v634
        %v639 = vadd.s32 %v585, 4294967184
        %v640 = vperm.slane %v372, %v639
        %vm641 = vcmask 982912
        %v642 = vsel %vm641, %v640, %v638
        %v643 = vadd.s32 %v585, 4294967176
        %v644 = vperm.slane %v375, %v643
        %vm645 = vcmask 1048512
        %v646 = vsel %vm645, %v644, %v642
        %v647 = vperm.slane %v378, %v585
        %v648 = vperm.slane %v381, %v587
        %v649 = vsel %vm589, %v648, %v647
        %v650 = vperm.slane %v384, %v591
        %v651 = vsel %vm593, %v650, %v649
        %v652 = vperm.slane %v387, %v595
        %v653 = vsel %vm597, %v652, %v651
        %v654 = vperm.slane %v390, %v599
        %v655 = vsel %vm601, %v654, %v653
        %v656 = vperm.slane %v393, %v603
        %v657 = vsel %vm605, %v656, %v655
        %v658 = vperm.slane %v396, %v607
        %v659 = vsel %vm609, %v658, %v657
        %v660 = vperm.slane %v399, %v611
        %v661 = vsel %vm613, %v660, %v659
        %v662 = vperm.slane %v402, %v615
        %v663 = vsel %vm617, %v662, %v661
        %v664 = vperm.slane %v405, %v619
        %v665 = vsel %vm621, %v664, %v663
        %v666 = vperm.slane %v408, %v623
        %v667 = vsel %vm625, %v666, %v665
        %v668 = vperm.slane %v411, %v627
        %v669 = vsel %vm629, %v668, %v667
        %v670 = vperm.slane %v414, %v631
        %v671 = vsel %vm633, %v670, %v669
        %v672 = vperm.slane %v417, %v635
        %v673 = vsel %vm637, %v672, %v671
        %v674 = vperm.slane %v420, %v639
        %v675 = vsel %vm641, %v674, %v673
        %v676 = vperm.slane %v423, %v643
        %v677 = vsel %vm645, %v676, %v675
        %vm678 = vcmask 1041409
        %v679 = vsel %vm678, %v677, %v646
        %v713 = vperm.slane %v520, %v585
        %v714 = vperm.slane %v521, %v587
        %v715 = vsel %vm589, %v714, %v713
        %v716 = vperm.slane %v522, %v591
        %v717 = vsel %vm593, %v716, %v715
        %v718 = vperm.slane %v523, %v595
        %v719 = vsel %vm597, %v718, %v717
        %v720 = vperm.slane %v524, %v599
        %v721 = vsel %vm601, %v720, %v719
        %v722 = vperm.slane %v525, %v603
        %v723 = vsel %vm605, %v722, %v721
        %v724 = vperm.slane %v526, %v607
        %v725 = vsel %vm609, %v724, %v723
        %v726 = vperm.slane %v527, %v611
        %v727 = vsel %vm613, %v726, %v725
        %v728 = vperm.slane %v528, %v615
        %v729 = vsel %vm617, %v728, %v727
        %v730 = vperm.slane %v529, %v619
        %v731 = vsel %vm621, %v730, %v729
        %v732 = vperm.slane %v530, %v623
        %v733 = vsel %vm625, %v732, %v731
        %v734 = vperm.slane %v531, %v627
        %v735 = vsel %vm629, %v734, %v733
        %v736 = vperm.slane %v532, %v631
        %v737 = vsel %vm633, %v736, %v735
        %v738 = vperm.slane %v533, %v635
        %v739 = vsel %vm637, %v738, %v737
        %v740 = vperm.slane %v534, %v639
        %v741 = vsel %vm641, %v740, %v739
        %v742 = vperm.slane %v535, %v643
        %v743 = vsel %vm645, %v742, %v741
        %v744 = vperm.slane %v536, %v585
        %v745 = vperm.slane %v537, %v587
        %v746 = vsel %vm589, %v745, %v744
        %v747 = vperm.slane %v538, %v591
        %v748 = vsel %vm593, %v747, %v746
        %v749 = vperm.slane %v539, %v595
        %v750 = vsel %vm597, %v749, %v748
        %v751 = vperm.slane %v540, %v599
        %v752 = vsel %vm601, %v751, %v750
        %v753 = vperm.slane %v541, %v603
        %v754 = vsel %vm605, %v753, %v752
        %v755 = vperm.slane %v542, %v607
        %v756 = vsel %vm609, %v755, %v754
        %v757 = vperm.slane %v543, %v611
        %v758 = vsel %vm613, %v757, %v756
        %v759 = vperm.slane %v544, %v615
        %v760 = vsel %vm617, %v759, %v758
        %v761 = vperm.slane %v545, %v619
        %v762 = vsel %vm621, %v761, %v760
        %v763 = vperm.slane %v546, %v623
        %v764 = vsel %vm625, %v763, %v762
        %v765 = vperm.slane %v547, %v627
        %v766 = vsel %vm629, %v765, %v764
        %v767 = vperm.slane %v548, %v631
        %v768 = vsel %vm633, %v767, %v766
        %v769 = vperm.slane %v549, %v635
        %v770 = vsel %vm637, %v769, %v768
        %v771 = vperm.slane %v550, %v639
        %v772 = vsel %vm641, %v771, %v770
        %v773 = vperm.slane %v551, %v643
        %v774 = vsel %vm645, %v773, %v772
        %vm775 = vcmask 1043459
        %v776 = vsel %vm775, %v774, %v743
        %vm778 = vcmask 1041408
        %v779 = vsel %vm778, %v679, %v776
        %v780 = vld [vmem:[#allocation6] sm:$0xff]
        %v781 = vld [vmem:[#allocation8] sm:$0xff]
        %v783 = vrot.slane %v779, 1
        %v784 = vrot.slane %v779, 2
        %v785 = vrot.slane %v779, 3
        %v786 = vperm.slane %v779, 0
        %v787 = vperm.slane %v783, 0
        %v788 = vperm.slane %v784, 0
        %v789 = vperm.slane %v785, 0
        %v794 = vmul.f32 %v786, %v780
        %v795 = vmul.f32 %v787, %v780
        %v796 = vmul.f32 %v788, %v780
        %v797 = vmul.f32 %v789, %v780
        %798 = vadd.xlane.f32.xlu0 %v794
        %v799 = vpop.xlane.xlu0 %798
        %800 = vadd.xlane.f32.xlu0 %v795
        %v801 = vpop.xlane.xlu0 %800
        %802 = vadd.xlane.f32.xlu0 %v796
        %v803 = vpop.xlane.xlu0 %802
        %804 = vadd.xlane.f32.xlu0 %v797
        %v805 = vpop.xlane.xlu0 %804
        %v806 = vxor.u32 %v799, 2147483648
        %v807 = vxor.u32 %v801, 2147483648
        %v808 = vxor.u32 %v803, 2147483648
        %v809 = vxor.u32 %v805, 2147483648
        %v810 = vmul.f32 %v806, 1.442695
        %v811 = vpow.pop %v810
        %v812 = vmul.f32 %v807, 1.442695
        %v813 = vpow.pop %v812
        %v814 = vmul.f32 %v808, 1.442695
        %v815 = vpow.pop %v814
        %v816 = vmul.f32 %v809, 1.442695
        %v817 = vpow.pop %v816
        %v818 = vadd.f32 %v811, 1.0
        %v819 = vadd.f32 %v813, 1.0
        %v820 = vadd.f32 %v815, 1.0
        %v821 = vadd.f32 %v817, 1.0
        %v822 = vrcp.pop %v818
        %v823 = vmul.f32 %v818, %v822
        %v824 = vsub.f32 1.0, %v823
        %v825 = vmul.f32 %v822, %v824
        %v826 = vadd.f32 %v822, %v825
        %vm827 = vweird.f32 %v818
        %vm828 = vweird.f32 %v822
        %vm829 = vmor %vm827, %vm828
        %v830 = vsel %vm829, %v822, %v826
        %v831 = vand.u32 2147483647, %v818
        %vm832 = vcmp.eq.f32.partialorder %v831, 8.507059e+37
        %v833 = vand.u32 %v818, 2147483648
        %v834 = vor.u32 1.1754944e-38, %v833
        %v835 = vsel %vm832, %v834, %v830
        %v836 = vmul.f32 1.0, %v835
        %v837 = vrcp.pop %v819
        %v838 = vmul.f32 %v819, %v837
        %v839 = vsub.f32 1.0, %v838
        %v840 = vmul.f32 %v837, %v839
        %v841 = vadd.f32 %v837, %v840
        %vm842 = vweird.f32 %v819
        %vm843 = vweird.f32 %v837
        %vm844 = vmor %vm842, %vm843
        %v845 = vsel %vm844, %v837, %v841
        %v846 = vand.u32 2147483647, %v819
        %vm847 = vcmp.eq.f32.partialorder %v846, 8.507059e+37
        %v848 = vand.u32 %v819, 2147483648
        %v849 = vor.u32 1.1754944e-38, %v848
        %v850 = vsel %vm847, %v849, %v845
        %v851 = vmul.f32 1.0, %v850
        %v852 = vrcp.pop %v820
        %v853 = vmul.f32 %v820, %v852
        %v854 = vsub.f32 1.0, %v853
        %v855 = vmul.f32 %v852, %v854
        %v856 = vadd.f32 %v852, %v855
        %vm857 = vweird.f32 %v820
        %vm858 = vweird.f32 %v852
        %vm859 = vmor %vm857, %vm858
        %v860 = vsel %vm859, %v852, %v856
        %v861 = vand.u32 2147483647, %v820
        %vm862 = vcmp.eq.f32.partialorder %v861, 8.507059e+37
        %v863 = vand.u32 %v820, 2147483648
        %v864 = vor.u32 1.1754944e-38, %v863
        %v865 = vsel %vm862, %v864, %v860
        %v866 = vmul.f32 1.0, %v865
        %v867 = vrcp.pop %v821
        %v868 = vmul.f32 %v821, %v867
        %v869 = vsub.f32 1.0, %v868
        %v870 = vmul.f32 %v867, %v869
        %v871 = vadd.f32 %v867, %v870
        %vm872 = vweird.f32 %v821
        %vm873 = vweird.f32 %v867
        %vm874 = vmor %vm872, %vm873
        %v875 = vsel %vm874, %v867, %v871
        %v876 = vand.u32 2147483647, %v821
        %vm877 = vcmp.eq.f32.partialorder %v876, 8.507059e+37
        %v878 = vand.u32 %v821, 2147483648
        %v879 = vor.u32 1.1754944e-38, %v878
        %v880 = vsel %vm877, %v879, %v875
        %v881 = vmul.f32 1.0, %v880
        %v882 = vmul.f32 %v799, %v836
        %v883 = vmul.f32 %v801, %v851
        %v884 = vmul.f32 %v803, %v866
        %v885 = vmul.f32 %v805, %v881
        %v886 = vperm.slane %v882, 0
        %v887 = vperm.slane %v883, 0
        %v888 = vperm.slane %v884, 0
        %v889 = vperm.slane %v885, 0
        %v890 = vperm.slane %v781, 0
        %v892 = vlaneseq
        %v893 = vshrl.u32 %v892, 7
        %895 = vset.pattern.permute.xlu0 %v893
        %896 = vperm.xlu0 %895, %v890
        %v897 = vpop.permute.xlu0 %896
        %v898 = vlaneseq
        %v899 = vshrl.u32 %v898, 7
        %v900 = vadd.s32 %v899, 8
        %901 = vset.pattern.permute.xlu0 %v900
        %902 = vperm.xlu0 %901, %v890
        %v903 = vpop.permute.xlu0 %902
        %v904 = vlaneseq
        %v905 = vshrl.u32 %v904, 7
        %v906 = vadd.s32 %v905, 16
        %907 = vset.pattern.permute.xlu0 %v906
        %908 = vperm.xlu0 %907, %v890
        %v909 = vpop.permute.xlu0 %908
        %v910 = vlaneseq
        %v911 = vshrl.u32 %v910, 7
        %v912 = vadd.s32 %v911, 24
        %913 = vset.pattern.permute.xlu0 %v912
        %914 = vperm.xlu0 %913, %v890
        %v915 = vpop.permute.xlu0 %914
        %v916 = vlaneseq
        %v917 = vshrl.u32 %v916, 7
        %v918 = vadd.s32 %v917, 32
        %919 = vset.pattern.permute.xlu0 %v918
        %920 = vperm.xlu0 %919, %v890
        %v921 = vpop.permute.xlu0 %920
        %v922 = vlaneseq
        %v923 = vshrl.u32 %v922, 7
        %v924 = vadd.s32 %v923, 40
        %925 = vset.pattern.permute.xlu0 %v924
        %926 = vperm.xlu0 %925, %v890
        %v927 = vpop.permute.xlu0 %926
        %v928 = vlaneseq
        %v929 = vshrl.u32 %v928, 7
        %v930 = vadd.s32 %v929, 48
        %931 = vset.pattern.permute.xlu0 %v930
        %932 = vperm.xlu0 %931, %v890
        %v933 = vpop.permute.xlu0 %932
        %v934 = vlaneseq
        %v935 = vshrl.u32 %v934, 7
        %v936 = vadd.s32 %v935, 56
        %937 = vset.pattern.permute.xlu0 %v936
        %938 = vperm.xlu0 %937, %v890
        %v939 = vpop.permute.xlu0 %938
        %v940 = vlaneseq
        %v941 = vshrl.u32 %v940, 7
        %v942 = vadd.s32 %v941, 64
        %943 = vset.pattern.permute.xlu0 %v942
        %944 = vperm.xlu0 %943, %v890
        %v945 = vpop.permute.xlu0 %944
        %v946 = vlaneseq
        %v947 = vshrl.u32 %v946, 7
        %v948 = vadd.s32 %v947, 72
        %949 = vset.pattern.permute.xlu0 %v948
        %950 = vperm.xlu0 %949, %v890
        %v951 = vpop.permute.xlu0 %950
        %v952 = vlaneseq
        %v953 = vshrl.u32 %v952, 7
        %v954 = vadd.s32 %v953, 80
        %955 = vset.pattern.permute.xlu0 %v954
        %956 = vperm.xlu0 %955, %v890
        %v957 = vpop.permute.xlu0 %956
        %v958 = vlaneseq
        %v959 = vshrl.u32 %v958, 7
        %v960 = vadd.s32 %v959, 88
        %961 = vset.pattern.permute.xlu0 %v960
        %962 = vperm.xlu0 %961, %v890
        %v963 = vpop.permute.xlu0 %962
        %v964 = vlaneseq
        %v965 = vshrl.u32 %v964, 7
        %v966 = vadd.s32 %v965, 96
        %967 = vset.pattern.permute.xlu0 %v966
        %968 = vperm.xlu0 %967, %v890
        %v969 = vpop.permute.xlu0 %968
        %v970 = vlaneseq
        %v971 = vshrl.u32 %v970, 7
        %v972 = vadd.s32 %v971, 104
        %973 = vset.pattern.permute.xlu0 %v972
        %974 = vperm.xlu0 %973, %v890
        %v975 = vpop.permute.xlu0 %974
        %v976 = vlaneseq
        %v977 = vshrl.u32 %v976, 7
        %v978 = vadd.s32 %v977, 112
        %979 = vset.pattern.permute.xlu0 %v978
        %980 = vperm.xlu0 %979, %v890
        %v981 = vpop.permute.xlu0 %980
        %v982 = vlaneseq
        %v983 = vshrl.u32 %v982, 7
        %v984 = vadd.s32 %v983, 120
        %985 = vset.pattern.permute.xlu0 %v984
        %986 = vperm.xlu0 %985, %v890
        %v987 = vpop.permute.xlu0 %986
        %v1004 = vmul.f32 %v886, %v897
        %v1005 = vmul.f32 %v886, %v903
        %v1006 = vmul.f32 %v886, %v909
        %v1007 = vmul.f32 %v886, %v915
        %v1008 = vmul.f32 %v886, %v921
        %v1009 = vmul.f32 %v886, %v927
        %v1010 = vmul.f32 %v886, %v933
        %v1011 = vmul.f32 %v886, %v939
        %v1012 = vmul.f32 %v886, %v945
        %v1013 = vmul.f32 %v886, %v951
        %v1014 = vmul.f32 %v886, %v957
        %v1015 = vmul.f32 %v886, %v963
        %v1016 = vmul.f32 %v886, %v969
        %v1017 = vmul.f32 %v886, %v975
        %v1018 = vmul.f32 %v886, %v981
        %v1019 = vmul.f32 %v886, %v987
        %v1020 = vmul.f32 %v887, %v897
        %v1021 = vmul.f32 %v887, %v903
        %v1022 = vmul.f32 %v887, %v909
        %v1023 = vmul.f32 %v887, %v915
        %v1024 = vmul.f32 %v887, %v921
        %v1025 = vmul.f32 %v887, %v927
        %v1026 = vmul.f32 %v887, %v933
        %v1027 = vmul.f32 %v887, %v939
        %v1028 = vmul.f32 %v887, %v945
        %v1029 = vmul.f32 %v887, %v951
        %v1030 = vmul.f32 %v887, %v957
        %v1031 = vmul.f32 %v887, %v963
        %v1032 = vmul.f32 %v887, %v969
        %v1033 = vmul.f32 %v887, %v975
        %v1034 = vmul.f32 %v887, %v981
        %v1035 = vmul.f32 %v887, %v987
        %v1036 = vmul.f32 %v888, %v897
        %v1037 = vmul.f32 %v888, %v903
        %v1038 = vmul.f32 %v888, %v909
        %v1039 = vmul.f32 %v888, %v915
        %v1040 = vmul.f32 %v888, %v921
        %v1041 = vmul.f32 %v888, %v927
        %v1042 = vmul.f32 %v888, %v933
        %v1043 = vmul.f32 %v888, %v939
        %v1044 = vmul.f32 %v888, %v945
        %v1045 = vmul.f32 %v888, %v951
        %v1046 = vmul.f32 %v888, %v957
        %v1047 = vmul.f32 %v888, %v963
        %v1048 = vmul.f32 %v888, %v969
        %v1049 = vmul.f32 %v888, %v975
        %v1050 = vmul.f32 %v888, %v981
        %v1051 = vmul.f32 %v888, %v987
        %v1052 = vmul.f32 %v889, %v897
        %v1053 = vmul.f32 %v889, %v903
        %v1054 = vmul.f32 %v889, %v909
        %v1055 = vmul.f32 %v889, %v915
        %v1056 = vmul.f32 %v889, %v921
        %v1057 = vmul.f32 %v889, %v927
        %v1058 = vmul.f32 %v889, %v933
        %v1059 = vmul.f32 %v889, %v939
        %v1060 = vmul.f32 %v889, %v945
        %v1061 = vmul.f32 %v889, %v951
        %v1062 = vmul.f32 %v889, %v957
        %v1063 = vmul.f32 %v889, %v963
        %v1064 = vmul.f32 %v889, %v969
        %v1065 = vmul.f32 %v889, %v975
        %v1066 = vmul.f32 %v889, %v981
        %v1067 = vmul.f32 %v889, %v987
        %v1068 = vadd.f32 %v1004, 0.0
        %v1069 = vadd.f32 %v1005, 0.0
        %v1070 = vadd.f32 %v1006, 0.0
        %v1071 = vadd.f32 %v1007, 0.0
        %v1072 = vadd.f32 %v1008, 0.0
        %v1073 = vadd.f32 %v1009, 0.0
        %v1074 = vadd.f32 %v1010, 0.0
        %v1075 = vadd.f32 %v1011, 0.0
        %v1076 = vadd.f32 %v1012, 0.0
        %v1077 = vadd.f32 %v1013, 0.0
        %v1078 = vadd.f32 %v1014, 0.0
        %v1079 = vadd.f32 %v1015, 0.0
        %v1080 = vadd.f32 %v1016, 0.0
        %v1081 = vadd.f32 %v1017, 0.0
        %v1082 = vadd.f32 %v1018, 0.0
        %v1083 = vadd.f32 %v1019, 0.0
        %v1084 = vadd.f32 %v1020, 0.0
        %v1085 = vadd.f32 %v1021, 0.0
        %v1086 = vadd.f32 %v1022, 0.0
        %v1087 = vadd.f32 %v1023, 0.0
        %v1088 = vadd.f32 %v1024, 0.0
        %v1089 = vadd.f32 %v1025, 0.0
        %v1090 = vadd.f32 %v1026, 0.0
        %v1091 = vadd.f32 %v1027, 0.0
        %v1092 = vadd.f32 %v1028, 0.0
        %v1093 = vadd.f32 %v1029, 0.0
        %v1094 = vadd.f32 %v1030, 0.0
        %v1095 = vadd.f32 %v1031, 0.0
        %v1096 = vadd.f32 %v1032, 0.0
        %v1097 = vadd.f32 %v1033, 0.0
        %v1098 = vadd.f32 %v1034, 0.0
        %v1099 = vadd.f32 %v1035, 0.0
        %v1100 = vadd.f32 %v1036, 0.0
        %v1101 = vadd.f32 %v1037, 0.0
        %v1102 = vadd.f32 %v1038, 0.0
        %v1103 = vadd.f32 %v1039, 0.0
        %v1104 = vadd.f32 %v1040, 0.0
        %v1105 = vadd.f32 %v1041, 0.0
        %v1106 = vadd.f32 %v1042, 0.0
        %v1107 = vadd.f32 %v1043, 0.0
        %v1108 = vadd.f32 %v1044, 0.0
        %v1109 = vadd.f32 %v1045, 0.0
        %v1110 = vadd.f32 %v1046, 0.0
        %v1111 = vadd.f32 %v1047, 0.0
        %v1112 = vadd.f32 %v1048, 0.0
        %v1113 = vadd.f32 %v1049, 0.0
        %v1114 = vadd.f32 %v1050, 0.0
        %v1115 = vadd.f32 %v1051, 0.0
        %v1116 = vadd.f32 %v1052, 0.0
        %v1117 = vadd.f32 %v1053, 0.0
        %v1118 = vadd.f32 %v1054, 0.0
        %v1119 = vadd.f32 %v1055, 0.0
        %v1120 = vadd.f32 %v1056, 0.0
        %v1121 = vadd.f32 %v1057, 0.0
        %v1122 = vadd.f32 %v1058, 0.0
        %v1123 = vadd.f32 %v1059, 0.0
        %v1124 = vadd.f32 %v1060, 0.0
        %v1125 = vadd.f32 %v1061, 0.0
        %v1126 = vadd.f32 %v1062, 0.0
        %v1127 = vadd.f32 %v1063, 0.0
        %v1128 = vadd.f32 %v1064, 0.0
        %v1129 = vadd.f32 %v1065, 0.0
        %v1130 = vadd.f32 %v1066, 0.0
        %v1131 = vadd.f32 %v1067, 0.0
        %v1132 = vperm.slane %v882, 1
        %v1133 = vperm.slane %v883, 1
        %v1134 = vperm.slane %v884, 1
        %v1135 = vperm.slane %v885, 1
        %v1136 = vperm.slane %v781, 1
        %v1138 = vlaneseq
        %v1139 = vshrl.u32 %v1138, 7
        %1141 = vset.pattern.permute.xlu0 %v1139
        %1142 = vperm.xlu0 %1141, %v1136
        %v1143 = vpop.permute.xlu0 %1142
        %v1144 = vlaneseq
        %v1145 = vshrl.u32 %v1144, 7
        %v1146 = vadd.s32 %v1145, 8
        %1147 = vset.pattern.permute.xlu0 %v1146
        %1148 = vperm.xlu0 %1147, %v1136
        %v1149 = vpop.permute.xlu0 %1148
        %v1150 = vlaneseq
        %v1151 = vshrl.u32 %v1150, 7
        %v1152 = vadd.s32 %v1151, 16
        %1153 = vset.pattern.permute.xlu0 %v1152
        %1154 = vperm.xlu0 %1153, %v1136
        %v1155 = vpop.permute.xlu0 %1154
        %v1156 = vlaneseq
        %v1157 = vshrl.u32 %v1156, 7
        %v1158 = vadd.s32 %v1157, 24
        %1159 = vset.pattern.permute.xlu0 %v1158
        %1160 = vperm.xlu0 %1159, %v1136
        %v1161 = vpop.permute.xlu0 %1160
        %v1162 = vlaneseq
        %v1163 = vshrl.u32 %v1162, 7
        %v1164 = vadd.s32 %v1163, 32
        %1165 = vset.pattern.permute.xlu0 %v1164
        %1166 = vperm.xlu0 %1165, %v1136
        %v1167 = vpop.permute.xlu0 %1166
        %v1168 = vlaneseq
        %v1169 = vshrl.u32 %v1168, 7
        %v1170 = vadd.s32 %v1169, 40
        %1171 = vset.pattern.permute.xlu0 %v1170
        %1172 = vperm.xlu0 %1171, %v1136
        %v1173 = vpop.permute.xlu0 %1172
        %v1174 = vlaneseq
        %v1175 = vshrl.u32 %v1174, 7
        %v1176 = vadd.s32 %v1175, 48
        %1177 = vset.pattern.permute.xlu0 %v1176
        %1178 = vperm.xlu0 %1177, %v1136
        %v1179 = vpop.permute.xlu0 %1178
        %v1180 = vlaneseq
        %v1181 = vshrl.u32 %v1180, 7
        %v1182 = vadd.s32 %v1181, 56
        %1183 = vset.pattern.permute.xlu0 %v1182
        %1184 = vperm.xlu0 %1183, %v1136
        %v1185 = vpop.permute.xlu0 %1184
        %v1186 = vlaneseq
        %v1187 = vshrl.u32 %v1186, 7
        %v1188 = vadd.s32 %v1187, 64
        %1189 = vset.pattern.permute.xlu0 %v1188
        %1190 = vperm.xlu0 %1189, %v1136
        %v1191 = vpop.permute.xlu0 %1190
        %v1192 = vlaneseq
        %v1193 = vshrl.u32 %v1192, 7
        %v1194 = vadd.s32 %v1193, 72
        %1195 = vset.pattern.permute.xlu0 %v1194
        %1196 = vperm.xlu0 %1195, %v1136
        %v1197 = vpop.permute.xlu0 %1196
        %v1198 = vlaneseq
        %v1199 = vshrl.u32 %v1198, 7
        %v1200 = vadd.s32 %v1199, 80
        %1201 = vset.pattern.permute.xlu0 %v1200
        %1202 = vperm.xlu0 %1201, %v1136
        %v1203 = vpop.permute.xlu0 %1202
        %v1204 = vlaneseq
        %v1205 = vshrl.u32 %v1204, 7
        %v1206 = vadd.s32 %v1205, 88
        %1207 = vset.pattern.permute.xlu0 %v1206
        %1208 = vperm.xlu0 %1207, %v1136
        %v1209 = vpop.permute.xlu0 %1208
        %v1210 = vlaneseq
        %v1211 = vshrl.u32 %v1210, 7
        %v1212 = vadd.s32 %v1211, 96
        %1213 = vset.pattern.permute.xlu0 %v1212
        %1214 = vperm.xlu0 %1213, %v1136
        %v1215 = vpop.permute.xlu0 %1214
        %v1216 = vlaneseq
        %v1217 = vshrl.u32 %v1216, 7
        %v1218 = vadd.s32 %v1217, 104
        %1219 = vset.pattern.permute.xlu0 %v1218
        %1220 = vperm.xlu0 %1219, %v1136
        %v1221 = vpop.permute.xlu0 %1220
        %v1222 = vlaneseq
        %v1223 = vshrl.u32 %v1222, 7
        %v1224 = vadd.s32 %v1223, 112
        %1225 = vset.pattern.permute.xlu0 %v1224
        %1226 = vperm.xlu0 %1225, %v1136
        %v1227 = vpop.permute.xlu0 %1226
        %v1228 = vlaneseq
        %v1229 = vshrl.u32 %v1228, 7
        %v1230 = vadd.s32 %v1229, 120
        %1231 = vset.pattern.permute.xlu0 %v1230
        %1232 = vperm.xlu0 %1231, %v1136
        %v1233 = vpop.permute.xlu0 %1232
        %v1250 = vmul.f32 %v1132, %v1143
        %v1251 = vmul.f32 %v1132, %v1149
        %v1252 = vmul.f32 %v1132, %v1155
        %v1253 = vmul.f32 %v1132, %v1161
        %v1254 = vmul.f32 %v1132, %v1167
        %v1255 = vmul.f32 %v1132, %v1173
        %v1256 = vmul.f32 %v1132, %v1179
        %v1257 = vmul.f32 %v1132, %v1185
        %v1258 = vmul.f32 %v1132, %v1191
        %v1259 = vmul.f32 %v1132, %v1197
        %v1260 = vmul.f32 %v1132, %v1203
        %v1261 = vmul.f32 %v1132, %v1209
        %v1262 = vmul.f32 %v1132, %v1215
        %v1263 = vmul.f32 %v1132, %v1221
        %v1264 = vmul.f32 %v1132, %v1227
        %v1265 = vmul.f32 %v1132, %v1233
        %v1266 = vmul.f32 %v1133, %v1143
        %v1267 = vmul.f32 %v1133, %v1149
        %v1268 = vmul.f32 %v1133, %v1155
        %v1269 = vmul.f32 %v1133, %v1161
        %v1270 = vmul.f32 %v1133, %v1167
        %v1271 = vmul.f32 %v1133, %v1173
        %v1272 = vmul.f32 %v1133, %v1179
        %v1273 = vmul.f32 %v1133, %v1185
        %v1274 = vmul.f32 %v1133, %v1191
        %v1275 = vmul.f32 %v1133, %v1197
        %v1276 = vmul.f32 %v1133, %v1203
        %v1277 = vmul.f32 %v1133, %v1209
        %v1278 = vmul.f32 %v1133, %v1215
        %v1279 = vmul.f32 %v1133, %v1221
        %v1280 = vmul.f32 %v1133, %v1227
        %v1281 = vmul.f32 %v1133, %v1233
        %v1282 = vmul.f32 %v1134, %v1143
        %v1283 = vmul.f32 %v1134, %v1149
        %v1284 = vmul.f32 %v1134, %v1155
        %v1285 = vmul.f32 %v1134, %v1161
        %v1286 = vmul.f32 %v1134, %v1167
        %v1287 = vmul.f32 %v1134, %v1173
        %v1288 = vmul.f32 %v1134, %v1179
        %v1289 = vmul.f32 %v1134, %v1185
        %v1290 = vmul.f32 %v1134, %v1191
        %v1291 = vmul.f32 %v1134, %v1197
        %v1292 = vmul.f32 %v1134, %v1203
        %v1293 = vmul.f32 %v1134, %v1209
        %v1294 = vmul.f32 %v1134, %v1215
        %v1295 = vmul.f32 %v1134, %v1221
        %v1296 = vmul.f32 %v1134, %v1227
        %v1297 = vmul.f32 %v1134, %v1233
        %v1298 = vmul.f32 %v1135, %v1143
        %v1299 = vmul.f32 %v1135, %v1149
        %v1300 = vmul.f32 %v1135, %v1155
        %v1301 = vmul.f32 %v1135, %v1161
        %v1302 = vmul.f32 %v1135, %v1167
        %v1303 = vmul.f32 %v1135, %v1173
        %v1304 = vmul.f32 %v1135, %v1179
        %v1305 = vmul.f32 %v1135, %v1185
        %v1306 = vmul.f32 %v1135, %v1191
        %v1307 = vmul.f32 %v1135, %v1197
        %v1308 = vmul.f32 %v1135, %v1203
        %v1309 = vmul.f32 %v1135, %v1209
        %v1310 = vmul.f32 %v1135, %v1215
        %v1311 = vmul.f32 %v1135, %v1221
        %v1312 = vmul.f32 %v1135, %v1227
        %v1313 = vmul.f32 %v1135, %v1233
        %v1314 = vadd.f32 %v1068, %v1250
        %v1315 = vadd.f32 %v1069, %v1251
        %v1316 = vadd.f32 %v1070, %v1252
        %v1317 = vadd.f32 %v1071, %v1253
        %v1318 = vadd.f32 %v1072, %v1254
        %v1319 = vadd.f32 %v1073, %v1255
        %v1320 = vadd.f32 %v1074, %v1256
        %v1321 = vadd.f32 %v1075, %v1257
        %v1322 = vadd.f32 %v1076, %v1258
        %v1323 = vadd.f32 %v1077, %v1259
        %v1324 = vadd.f32 %v1078, %v1260
        %v1325 = vadd.f32 %v1079, %v1261
        %v1326 = vadd.f32 %v1080, %v1262
        %v1327 = vadd.f32 %v1081, %v1263
        %v1328 = vadd.f32 %v1082, %v1264
        %v1329 = vadd.f32 %v1083, %v1265
        %v1330 = vadd.f32 %v1084, %v1266
        %v1331 = vadd.f32 %v1085, %v1267
        %v1332 = vadd.f32 %v1086, %v1268
        %v1333 = vadd.f32 %v1087, %v1269
        %v1334 = vadd.f32 %v1088, %v1270
        %v1335 = vadd.f32 %v1089, %v1271
        %v1336 = vadd.f32 %v1090, %v1272
        %v1337 = vadd.f32 %v1091, %v1273
        %v1338 = vadd.f32 %v1092, %v1274
        %v1339 = vadd.f32 %v1093, %v1275
        %v1340 = vadd.f32 %v1094, %v1276
        %v1341 = vadd.f32 %v1095, %v1277
        %v1342 = vadd.f32 %v1096, %v1278
        %v1343 = vadd.f32 %v1097, %v1279
        %v1344 = vadd.f32 %v1098, %v1280
        %v1345 = vadd.f32 %v1099, %v1281
        %v1346 = vadd.f32 %v1100, %v1282
        %v1347 = vadd.f32 %v1101, %v1283
        %v1348 = vadd.f32 %v1102, %v1284
        %v1349 = vadd.f32 %v1103, %v1285
        %v1350 = vadd.f32 %v1104, %v1286
        %v1351 = vadd.f32 %v1105, %v1287
        %v1352 = vadd.f32 %v1106, %v1288
        %v1353 = vadd.f32 %v1107, %v1289
        %v1354 = vadd.f32 %v1108, %v1290
        %v1355 = vadd.f32 %v1109, %v1291
        %v1356 = vadd.f32 %v1110, %v1292
        %v1357 = vadd.f32 %v1111, %v1293
        %v1358 = vadd.f32 %v1112, %v1294
        %v1359 = vadd.f32 %v1113, %v1295
        %v1360 = vadd.f32 %v1114, %v1296
        %v1361 = vadd.f32 %v1115, %v1297
        %v1362 = vadd.f32 %v1116, %v1298
        %v1363 = vadd.f32 %v1117, %v1299
        %v1364 = vadd.f32 %v1118, %v1300
        %v1365 = vadd.f32 %v1119, %v1301
        %v1366 = vadd.f32 %v1120, %v1302
        %v1367 = vadd.f32 %v1121, %v1303
        %v1368 = vadd.f32 %v1122, %v1304
        %v1369 = vadd.f32 %v1123, %v1305
        %v1370 = vadd.f32 %v1124, %v1306
        %v1371 = vadd.f32 %v1125, %v1307
        %v1372 = vadd.f32 %v1126, %v1308
        %v1373 = vadd.f32 %v1127, %v1309
        %v1374 = vadd.f32 %v1128, %v1310
        %v1375 = vadd.f32 %v1129, %v1311
        %v1376 = vadd.f32 %v1130, %v1312
        %v1377 = vadd.f32 %v1131, %v1313
        %v1378 = vperm.slane %v882, 2
        %v1379 = vperm.slane %v883, 2
        %v1380 = vperm.slane %v884, 2
        %v1381 = vperm.slane %v885, 2
        %v1382 = vperm.slane %v781, 2
        %v1384 = vlaneseq
        %v1385 = vshrl.u32 %v1384, 7
        %1387 = vset.pattern.permute.xlu0 %v1385
        %1388 = vperm.xlu0 %1387, %v1382
        %v1389 = vpop.permute.xlu0 %1388
        %v1390 = vlaneseq
        %v1391 = vshrl.u32 %v1390, 7
        %v1392 = vadd.s32 %v1391, 8
        %1393 = vset.pattern.permute.xlu0 %v1392
        %1394 = vperm.xlu0 %1393, %v1382
        %v1395 = vpop.permute.xlu0 %1394
        %v1396 = vlaneseq
        %v1397 = vshrl.u32 %v1396, 7
        %v1398 = vadd.s32 %v1397, 16
        %1399 = vset.pattern.permute.xlu0 %v1398
        %1400 = vperm.xlu0 %1399, %v1382
        %v1401 = vpop.permute.xlu0 %1400
        %v1402 = vlaneseq
        %v1403 = vshrl.u32 %v1402, 7
        %v1404 = vadd.s32 %v1403, 24
        %1405 = vset.pattern.permute.xlu0 %v1404
        %1406 = vperm.xlu0 %1405, %v1382
        %v1407 = vpop.permute.xlu0 %1406
        %v1408 = vlaneseq
        %v1409 = vshrl.u32 %v1408, 7
        %v1410 = vadd.s32 %v1409, 32
        %1411 = vset.pattern.permute.xlu0 %v1410
        %1412 = vperm.xlu0 %1411, %v1382
        %v1413 = vpop.permute.xlu0 %1412
        %v1414 = vlaneseq
        %v1415 = vshrl.u32 %v1414, 7
        %v1416 = vadd.s32 %v1415, 40
        %1417 = vset.pattern.permute.xlu0 %v1416
        %1418 = vperm.xlu0 %1417, %v1382
        %v1419 = vpop.permute.xlu0 %1418
        %v1420 = vlaneseq
        %v1421 = vshrl.u32 %v1420, 7
        %v1422 = vadd.s32 %v1421, 48
        %1423 = vset.pattern.permute.xlu0 %v1422
        %1424 = vperm.xlu0 %1423, %v1382
        %v1425 = vpop.permute.xlu0 %1424
        %v1426 = vlaneseq
        %v1427 = vshrl.u32 %v1426, 7
        %v1428 = vadd.s32 %v1427, 56
        %1429 = vset.pattern.permute.xlu0 %v1428
        %1430 = vperm.xlu0 %1429, %v1382
        %v1431 = vpop.permute.xlu0 %1430
        %v1432 = vlaneseq
        %v1433 = vshrl.u32 %v1432, 7
        %v1434 = vadd.s32 %v1433, 64
        %1435 = vset.pattern.permute.xlu0 %v1434
        %1436 = vperm.xlu0 %1435, %v1382
        %v1437 = vpop.permute.xlu0 %1436
        %v1438 = vlaneseq
        %v1439 = vshrl.u32 %v1438, 7
        %v1440 = vadd.s32 %v1439, 72
        %1441 = vset.pattern.permute.xlu0 %v1440
        %1442 = vperm.xlu0 %1441, %v1382
        %v1443 = vpop.permute.xlu0 %1442
        %v1444 = vlaneseq
        %v1445 = vshrl.u32 %v1444, 7
        %v1446 = vadd.s32 %v1445, 80
        %1447 = vset.pattern.permute.xlu0 %v1446
        %1448 = vperm.xlu0 %1447, %v1382
        %v1449 = vpop.permute.xlu0 %1448
        %v1450 = vlaneseq
        %v1451 = vshrl.u32 %v1450, 7
        %v1452 = vadd.s32 %v1451, 88
        %1453 = vset.pattern.permute.xlu0 %v1452
        %1454 = vperm.xlu0 %1453, %v1382
        %v1455 = vpop.permute.xlu0 %1454
        %v1456 = vlaneseq
        %v1457 = vshrl.u32 %v1456, 7
        %v1458 = vadd.s32 %v1457, 96
        %1459 = vset.pattern.permute.xlu0 %v1458
        %1460 = vperm.xlu0 %1459, %v1382
        %v1461 = vpop.permute.xlu0 %1460
        %v1462 = vlaneseq
        %v1463 = vshrl.u32 %v1462, 7
        %v1464 = vadd.s32 %v1463, 104
        %1465 = vset.pattern.permute.xlu0 %v1464
        %1466 = vperm.xlu0 %1465, %v1382
        %v1467 = vpop.permute.xlu0 %1466
        %v1468 = vlaneseq
        %v1469 = vshrl.u32 %v1468, 7
        %v1470 = vadd.s32 %v1469, 112
        %1471 = vset.pattern.permute.xlu0 %v1470
        %1472 = vperm.xlu0 %1471, %v1382
        %v1473 = vpop.permute.xlu0 %1472
        %v1474 = vlaneseq
        %v1475 = vshrl.u32 %v1474, 7
        %v1476 = vadd.s32 %v1475, 120
        %1477 = vset.pattern.permute.xlu0 %v1476
        %1478 = vperm.xlu0 %1477, %v1382
        %v1479 = vpop.permute.xlu0 %1478
        %v1496 = vmul.f32 %v1378, %v1389
        %v1497 = vmul.f32 %v1378, %v1395
        %v1498 = vmul.f32 %v1378, %v1401
        %v1499 = vmul.f32 %v1378, %v1407
        %v1500 = vmul.f32 %v1378, %v1413
        %v1501 = vmul.f32 %v1378, %v1419
        %v1502 = vmul.f32 %v1378, %v1425
        %v1503 = vmul.f32 %v1378, %v1431
        %v1504 = vmul.f32 %v1378, %v1437
        %v1505 = vmul.f32 %v1378, %v1443
        %v1506 = vmul.f32 %v1378, %v1449
        %v1507 = vmul.f32 %v1378, %v1455
        %v1508 = vmul.f32 %v1378, %v1461
        %v1509 = vmul.f32 %v1378, %v1467
        %v1510 = vmul.f32 %v1378, %v1473
        %v1511 = vmul.f32 %v1378, %v1479
        %v1512 = vmul.f32 %v1379, %v1389
        %v1513 = vmul.f32 %v1379, %v1395
        %v1514 = vmul.f32 %v1379, %v1401
        %v1515 = vmul.f32 %v1379, %v1407
        %v1516 = vmul.f32 %v1379, %v1413
        %v1517 = vmul.f32 %v1379, %v1419
        %v1518 = vmul.f32 %v1379, %v1425
        %v1519 = vmul.f32 %v1379, %v1431
        %v1520 = vmul.f32 %v1379, %v1437
        %v1521 = vmul.f32 %v1379, %v1443
        %v1522 = vmul.f32 %v1379, %v1449
        %v1523 = vmul.f32 %v1379, %v1455
        %v1524 = vmul.f32 %v1379, %v1461
        %v1525 = vmul.f32 %v1379, %v1467
        %v1526 = vmul.f32 %v1379, %v1473
        %v1527 = vmul.f32 %v1379, %v1479
        %v1528 = vmul.f32 %v1380, %v1389
        %v1529 = vmul.f32 %v1380, %v1395
        %v1530 = vmul.f32 %v1380, %v1401
        %v1531 = vmul.f32 %v1380, %v1407
        %v1532 = vmul.f32 %v1380, %v1413
        %v1533 = vmul.f32 %v1380, %v1419
        %v1534 = vmul.f32 %v1380, %v1425
        %v1535 = vmul.f32 %v1380, %v1431
        %v1536 = vmul.f32 %v1380, %v1437
        %v1537 = vmul.f32 %v1380, %v1443
        %v1538 = vmul.f32 %v1380, %v1449
        %v1539 = vmul.f32 %v1380, %v1455
        %v1540 = vmul.f32 %v1380, %v1461
        %v1541 = vmul.f32 %v1380, %v1467
        %v1542 = vmul.f32 %v1380, %v1473
        %v1543 = vmul.f32 %v1380, %v1479
        %v1544 = vmul.f32 %v1381, %v1389
        %v1545 = vmul.f32 %v1381, %v1395
        %v1546 = vmul.f32 %v1381, %v1401
        %v1547 = vmul.f32 %v1381, %v1407
        %v1548 = vmul.f32 %v1381, %v1413
        %v1549 = vmul.f32 %v1381, %v1419
        %v1550 = vmul.f32 %v1381, %v1425
        %v1551 = vmul.f32 %v1381, %v1431
        %v1552 = vmul.f32 %v1381, %v1437
        %v1553 = vmul.f32 %v1381, %v1443
        %v1554 = vmul.f32 %v1381, %v1449
        %v1555 = vmul.f32 %v1381, %v1455
        %v1556 = vmul.f32 %v1381, %v1461
        %v1557 = vmul.f32 %v1381, %v1467
        %v1558 = vmul.f32 %v1381, %v1473
        %v1559 = vmul.f32 %v1381, %v1479
        %v1560 = vadd.f32 %v1314, %v1496
        %v1561 = vadd.f32 %v1315, %v1497
        %v1562 = vadd.f32 %v1316, %v1498
        %v1563 = vadd.f32 %v1317, %v1499
        %v1564 = vadd.f32 %v1318, %v1500
        %v1565 = vadd.f32 %v1319, %v1501
        %v1566 = vadd.f32 %v1320, %v1502
        %v1567 = vadd.f32 %v1321, %v1503
        %v1568 = vadd.f32 %v1322, %v1504
        %v1569 = vadd.f32 %v1323, %v1505
        %v1570 = vadd.f32 %v1324, %v1506
        %v1571 = vadd.f32 %v1325, %v1507
        %v1572 = vadd.f32 %v1326, %v1508
        %v1573 = vadd.f32 %v1327, %v1509
        %v1574 = vadd.f32 %v1328, %v1510
        %v1575 = vadd.f32 %v1329, %v1511
        %v1576 = vadd.f32 %v1330, %v1512
        %v1577 = vadd.f32 %v1331, %v1513
        %v1578 = vadd.f32 %v1332, %v1514
        %v1579 = vadd.f32 %v1333, %v1515
        %v1580 = vadd.f32 %v1334, %v1516
        %v1581 = vadd.f32 %v1335, %v1517
        %v1582 = vadd.f32 %v1336, %v1518
        %v1583 = vadd.f32 %v1337, %v1519
        %v1584 = vadd.f32 %v1338, %v1520
        %v1585 = vadd.f32 %v1339, %v1521
        %v1586 = vadd.f32 %v1340, %v1522
        %v1587 = vadd.f32 %v1341, %v1523
        %v1588 = vadd.f32 %v1342, %v1524
        %v1589 = vadd.f32 %v1343, %v1525
        %v1590 = vadd.f32 %v1344, %v1526
        %v1591 = vadd.f32 %v1345, %v1527
        %v1592 = vadd.f32 %v1346, %v1528
        %v1593 = vadd.f32 %v1347, %v1529
        %v1594 = vadd.f32 %v1348, %v1530
        %v1595 = vadd.f32 %v1349, %v1531
        %v1596 = vadd.f32 %v1350, %v1532
        %v1597 = vadd.f32 %v1351, %v1533
        %v1598 = vadd.f32 %v1352, %v1534
        %v1599 = vadd.f32 %v1353, %v1535
        %v1600 = vadd.f32 %v1354, %v1536
        %v1601 = vadd.f32 %v1355, %v1537
        %v1602 = vadd.f32 %v1356, %v1538
        %v1603 = vadd.f32 %v1357, %v1539
        %v1604 = vadd.f32 %v1358, %v1540
        %v1605 = vadd.f32 %v1359, %v1541
        %v1606 = vadd.f32 %v1360, %v1542
        %v1607 = vadd.f32 %v1361, %v1543
        %v1608 = vadd.f32 %v1362, %v1544
        %v1609 = vadd.f32 %v1363, %v1545
        %v1610 = vadd.f32 %v1364, %v1546
        %v1611 = vadd.f32 %v1365, %v1547
        %v1612 = vadd.f32 %v1366, %v1548
        %v1613 = vadd.f32 %v1367, %v1549
        %v1614 = vadd.f32 %v1368, %v1550
        %v1615 = vadd.f32 %v1369, %v1551
        %v1616 = vadd.f32 %v1370, %v1552
        %v1617 = vadd.f32 %v1371, %v1553
        %v1618 = vadd.f32 %v1372, %v1554
        %v1619 = vadd.f32 %v1373, %v1555
        %v1620 = vadd.f32 %v1374, %v1556
        %v1621 = vadd.f32 %v1375, %v1557
        %v1622 = vadd.f32 %v1376, %v1558
        %v1623 = vadd.f32 %v1377, %v1559
        %v1624 = vperm.slane %v882, 3
        %v1625 = vperm.slane %v883, 3
        %v1626 = vperm.slane %v884, 3
        %v1627 = vperm.slane %v885, 3
        %v1628 = vperm.slane %v781, 3
        %v1630 = vlaneseq
        %v1631 = vshrl.u32 %v1630, 7
        %1633 = vset.pattern.permute.xlu0 %v1631
        %1634 = vperm.xlu0 %1633, %v1628
        %v1635 = vpop.permute.xlu0 %1634
        %v1636 = vlaneseq
        %v1637 = vshrl.u32 %v1636, 7
        %v1638 = vadd.s32 %v1637, 8
        %1639 = vset.pattern.permute.xlu0 %v1638
        %1640 = vperm.xlu0 %1639, %v1628
        %v1641 = vpop.permute.xlu0 %1640
        %v1642 = vlaneseq
        %v1643 = vshrl.u32 %v1642, 7
        %v1644 = vadd.s32 %v1643, 16
        %1645 = vset.pattern.permute.xlu0 %v1644
        %1646 = vperm.xlu0 %1645, %v1628
        %v1647 = vpop.permute.xlu0 %1646
        %v1648 = vlaneseq
        %v1649 = vshrl.u32 %v1648, 7
        %v1650 = vadd.s32 %v1649, 24
        %1651 = vset.pattern.permute.xlu0 %v1650
        %1652 = vperm.xlu0 %1651, %v1628
        %v1653 = vpop.permute.xlu0 %1652
        %v1654 = vlaneseq
        %v1655 = vshrl.u32 %v1654, 7
        %v1656 = vadd.s32 %v1655, 32
        %1657 = vset.pattern.permute.xlu0 %v1656
        %1658 = vperm.xlu0 %1657, %v1628
        %v1659 = vpop.permute.xlu0 %1658
        %v1660 = vlaneseq
        %v1661 = vshrl.u32 %v1660, 7
        %v1662 = vadd.s32 %v1661, 40
        %1663 = vset.pattern.permute.xlu0 %v1662
        %1664 = vperm.xlu0 %1663, %v1628
        %v1665 = vpop.permute.xlu0 %1664
        %v1666 = vlaneseq
        %v1667 = vshrl.u32 %v1666, 7
        %v1668 = vadd.s32 %v1667, 48
        %1669 = vset.pattern.permute.xlu0 %v1668
        %1670 = vperm.xlu0 %1669, %v1628
        %v1671 = vpop.permute.xlu0 %1670
        %v1672 = vlaneseq
        %v1673 = vshrl.u32 %v1672, 7
        %v1674 = vadd.s32 %v1673, 56
        %1675 = vset.pattern.permute.xlu0 %v1674
        %1676 = vperm.xlu0 %1675, %v1628
        %v1677 = vpop.permute.xlu0 %1676
        %v1678 = vlaneseq
        %v1679 = vshrl.u32 %v1678, 7
        %v1680 = vadd.s32 %v1679, 64
        %1681 = vset.pattern.permute.xlu0 %v1680
        %1682 = vperm.xlu0 %1681, %v1628
        %v1683 = vpop.permute.xlu0 %1682
        %v1684 = vlaneseq
        %v1685 = vshrl.u32 %v1684, 7
        %v1686 = vadd.s32 %v1685, 72
        %1687 = vset.pattern.permute.xlu0 %v1686
        %1688 = vperm.xlu0 %1687, %v1628
        %v1689 = vpop.permute.xlu0 %1688
        %v1690 = vlaneseq
        %v1691 = vshrl.u32 %v1690, 7
        %v1692 = vadd.s32 %v1691, 80
        %1693 = vset.pattern.permute.xlu0 %v1692
        %1694 = vperm.xlu0 %1693, %v1628
        %v1695 = vpop.permute.xlu0 %1694
        %v1696 = vlaneseq
        %v1697 = vshrl.u32 %v1696, 7
        %v1698 = vadd.s32 %v1697, 88
        %1699 = vset.pattern.permute.xlu0 %v1698
        %1700 = vperm.xlu0 %1699, %v1628
        %v1701 = vpop.permute.xlu0 %1700
        %v1702 = vlaneseq
        %v1703 = vshrl.u32 %v1702, 7
        %v1704 = vadd.s32 %v1703, 96
        %1705 = vset.pattern.permute.xlu0 %v1704
        %1706 = vperm.xlu0 %1705, %v1628
        %v1707 = vpop.permute.xlu0 %1706
        %v1708 = vlaneseq
        %v1709 = vshrl.u32 %v1708, 7
        %v1710 = vadd.s32 %v1709, 104
        %1711 = vset.pattern.permute.xlu0 %v1710
        %1712 = vperm.xlu0 %1711, %v1628
        %v1713 = vpop.permute.xlu0 %1712
        %v1714 = vlaneseq
        %v1715 = vshrl.u32 %v1714, 7
        %v1716 = vadd.s32 %v1715, 112
        %1717 = vset.pattern.permute.xlu0 %v1716
        %1718 = vperm.xlu0 %1717, %v1628
        %v1719 = vpop.permute.xlu0 %1718
        %v1720 = vlaneseq
        %v1721 = vshrl.u32 %v1720, 7
        %v1722 = vadd.s32 %v1721, 120
        %1723 = vset.pattern.permute.xlu0 %v1722
        %1724 = vperm.xlu0 %1723, %v1628
        %v1725 = vpop.permute.xlu0 %1724
        %v1742 = vmul.f32 %v1624, %v1635
        %v1743 = vmul.f32 %v1624, %v1641
        %v1744 = vmul.f32 %v1624, %v1647
        %v1745 = vmul.f32 %v1624, %v1653
        %v1746 = vmul.f32 %v1624, %v1659
        %v1747 = vmul.f32 %v1624, %v1665
        %v1748 = vmul.f32 %v1624, %v1671
        %v1749 = vmul.f32 %v1624, %v1677
        %v1750 = vmul.f32 %v1624, %v1683
        %v1751 = vmul.f32 %v1624, %v1689
        %v1752 = vmul.f32 %v1624, %v1695
        %v1753 = vmul.f32 %v1624, %v1701
        %v1754 = vmul.f32 %v1624, %v1707
        %v1755 = vmul.f32 %v1624, %v1713
        %v1756 = vmul.f32 %v1624, %v1719
        %v1757 = vmul.f32 %v1624, %v1725
        %v1758 = vmul.f32 %v1625, %v1635
        %v1759 = vmul.f32 %v1625, %v1641
        %v1760 = vmul.f32 %v1625, %v1647
        %v1761 = vmul.f32 %v1625, %v1653
        %v1762 = vmul.f32 %v1625, %v1659
        %v1763 = vmul.f32 %v1625, %v1665
        %v1764 = vmul.f32 %v1625, %v1671
        %v1765 = vmul.f32 %v1625, %v1677
        %v1766 = vmul.f32 %v1625, %v1683
        %v1767 = vmul.f32 %v1625, %v1689
        %v1768 = vmul.f32 %v1625, %v1695
        %v1769 = vmul.f32 %v1625, %v1701
        %v1770 = vmul.f32 %v1625, %v1707
        %v1771 = vmul.f32 %v1625, %v1713
        %v1772 = vmul.f32 %v1625, %v1719
        %v1773 = vmul.f32 %v1625, %v1725
        %v1774 = vmul.f32 %v1626, %v1635
        %v1775 = vmul.f32 %v1626, %v1641
        %v1776 = vmul.f32 %v1626, %v1647
        %v1777 = vmul.f32 %v1626, %v1653
        %v1778 = vmul.f32 %v1626, %v1659
        %v1779 = vmul.f32 %v1626, %v1665
        %v1780 = vmul.f32 %v1626, %v1671
        %v1781 = vmul.f32 %v1626, %v1677
        %v1782 = vmul.f32 %v1626, %v1683
        %v1783 = vmul.f32 %v1626, %v1689
        %v1784 = vmul.f32 %v1626, %v1695
        %v1785 = vmul.f32 %v1626, %v1701
        %v1786 = vmul.f32 %v1626, %v1707
        %v1787 = vmul.f32 %v1626, %v1713
        %v1788 = vmul.f32 %v1626, %v1719
        %v1789 = vmul.f32 %v1626, %v1725
        %v1790 = vmul.f32 %v1627, %v1635
        %v1791 = vmul.f32 %v1627, %v1641
        %v1792 = vmul.f32 %v1627, %v1647
        %v1793 = vmul.f32 %v1627, %v1653
        %v1794 = vmul.f32 %v1627, %v1659
        %v1795 = vmul.f32 %v1627, %v1665
        %v1796 = vmul.f32 %v1627, %v1671
        %v1797 = vmul.f32 %v1627, %v1677
        %v1798 = vmul.f32 %v1627, %v1683
        %v1799 = vmul.f32 %v1627, %v1689
        %v1800 = vmul.f32 %v1627, %v1695
        %v1801 = vmul.f32 %v1627, %v1701
        %v1802 = vmul.f32 %v1627, %v1707
        %v1803 = vmul.f32 %v1627, %v1713
        %v1804 = vmul.f32 %v1627, %v1719
        %v1805 = vmul.f32 %v1627, %v1725
        %v1806 = vadd.f32 %v1560, %v1742
        %v1807 = vadd.f32 %v1561, %v1743
        %v1808 = vadd.f32 %v1562, %v1744
        %v1809 = vadd.f32 %v1563, %v1745
        %v1810 = vadd.f32 %v1564, %v1746
        %v1811 = vadd.f32 %v1565, %v1747
        %v1812 = vadd.f32 %v1566, %v1748
        %v1813 = vadd.f32 %v1567, %v1749
        %v1814 = vadd.f32 %v1568, %v1750
        %v1815 = vadd.f32 %v1569, %v1751
        %v1816 = vadd.f32 %v1570, %v1752
        %v1817 = vadd.f32 %v1571, %v1753
        %v1818 = vadd.f32 %v1572, %v1754
        %v1819 = vadd.f32 %v1573, %v1755
        %v1820 = vadd.f32 %v1574, %v1756
        %v1821 = vadd.f32 %v1575, %v1757
        %v1822 = vadd.f32 %v1576, %v1758
        %v1823 = vadd.f32 %v1577, %v1759
        %v1824 = vadd.f32 %v1578, %v1760
        %v1825 = vadd.f32 %v1579, %v1761
        %v1826 = vadd.f32 %v1580, %v1762
        %v1827 = vadd.f32 %v1581, %v1763
        %v1828 = vadd.f32 %v1582, %v1764
        %v1829 = vadd.f32 %v1583, %v1765
        %v1830 = vadd.f32 %v1584, %v1766
        %v1831 = vadd.f32 %v1585, %v1767
        %v1832 = vadd.f32 %v1586, %v1768
        %v1833 = vadd.f32 %v1587, %v1769
        %v1834 = vadd.f32 %v1588, %v1770
        %v1835 = vadd.f32 %v1589, %v1771
        %v1836 = vadd.f32 %v1590, %v1772
        %v1837 = vadd.f32 %v1591, %v1773
        %v1838 = vadd.f32 %v1592, %v1774
        %v1839 = vadd.f32 %v1593, %v1775
        %v1840 = vadd.f32 %v1594, %v1776
        %v1841 = vadd.f32 %v1595, %v1777
        %v1842 = vadd.f32 %v1596, %v1778
        %v1843 = vadd.f32 %v1597, %v1779
        %v1844 = vadd.f32 %v1598, %v1780
        %v1845 = vadd.f32 %v1599, %v1781
        %v1846 = vadd.f32 %v1600, %v1782
        %v1847 = vadd.f32 %v1601, %v1783
        %v1848 = vadd.f32 %v1602, %v1784
        %v1849 = vadd.f32 %v1603, %v1785
        %v1850 = vadd.f32 %v1604, %v1786
        %v1851 = vadd.f32 %v1605, %v1787
        %v1852 = vadd.f32 %v1606, %v1788
        %v1853 = vadd.f32 %v1607, %v1789
        %v1854 = vadd.f32 %v1608, %v1790
        %v1855 = vadd.f32 %v1609, %v1791
        %v1856 = vadd.f32 %v1610, %v1792
        %v1857 = vadd.f32 %v1611, %v1793
        %v1858 = vadd.f32 %v1612, %v1794
        %v1859 = vadd.f32 %v1613, %v1795
        %v1860 = vadd.f32 %v1614, %v1796
        %v1861 = vadd.f32 %v1615, %v1797
        %v1862 = vadd.f32 %v1616, %v1798
        %v1863 = vadd.f32 %v1617, %v1799
        %v1864 = vadd.f32 %v1618, %v1800
        %v1865 = vadd.f32 %v1619, %v1801
        %v1866 = vadd.f32 %v1620, %v1802
        %v1867 = vadd.f32 %v1621, %v1803
        %v1868 = vadd.f32 %v1622, %v1804
        %v1869 = vadd.f32 %v1623, %v1805
        %v1870 = vperm.slane %v882, 4
        %v1871 = vperm.slane %v883, 4
        %v1872 = vperm.slane %v884, 4
        %v1873 = vperm.slane %v885, 4
        %v1874 = vperm.slane %v781, 4
        %v1876 = vlaneseq
        %v1877 = vshrl.u32 %v1876, 7
        %1879 = vset.pattern.permute.xlu0 %v1877
        %1880 = vperm.xlu0 %1879, %v1874
        %v1881 = vpop.permute.xlu0 %1880
        %v1882 = vlaneseq
        %v1883 = vshrl.u32 %v1882, 7
        %v1884 = vadd.s32 %v1883, 8
        %1885 = vset.pattern.permute.xlu0 %v1884
        %1886 = vperm.xlu0 %1885, %v1874
        %v1887 = vpop.permute.xlu0 %1886
        %v1888 = vlaneseq
        %v1889 = vshrl.u32 %v1888, 7
        %v1890 = vadd.s32 %v1889, 16
        %1891 = vset.pattern.permute.xlu0 %v1890
        %1892 = vperm.xlu0 %1891, %v1874
        %v1893 = vpop.permute.xlu0 %1892
        %v1894 = vlaneseq
        %v1895 = vshrl.u32 %v1894, 7
        %v1896 = vadd.s32 %v1895, 24
        %1897 = vset.pattern.permute.xlu0 %v1896
        %1898 = vperm.xlu0 %1897, %v1874
        %v1899 = vpop.permute.xlu0 %1898
        %v1900 = vlaneseq
        %v1901 = vshrl.u32 %v1900, 7
        %v1902 = vadd.s32 %v1901, 32
        %1903 = vset.pattern.permute.xlu0 %v1902
        %1904 = vperm.xlu0 %1903, %v1874
        %v1905 = vpop.permute.xlu0 %1904
        %v1906 = vlaneseq
        %v1907 = vshrl.u32 %v1906, 7
        %v1908 = vadd.s32 %v1907, 40
        %1909 = vset.pattern.permute.xlu0 %v1908
        %1910 = vperm.xlu0 %1909, %v1874
        %v1911 = vpop.permute.xlu0 %1910
        %v1912 = vlaneseq
        %v1913 = vshrl.u32 %v1912, 7
        %v1914 = vadd.s32 %v1913, 48
        %1915 = vset.pattern.permute.xlu0 %v1914
        %1916 = vperm.xlu0 %1915, %v1874
        %v1917 = vpop.permute.xlu0 %1916
        %v1918 = vlaneseq
        %v1919 = vshrl.u32 %v1918, 7
        %v1920 = vadd.s32 %v1919, 56
        %1921 = vset.pattern.permute.xlu0 %v1920
        %1922 = vperm.xlu0 %1921, %v1874
        %v1923 = vpop.permute.xlu0 %1922
        %v1924 = vlaneseq
        %v1925 = vshrl.u32 %v1924, 7
        %v1926 = vadd.s32 %v1925, 64
        %1927 = vset.pattern.permute.xlu0 %v1926
        %1928 = vperm.xlu0 %1927, %v1874
        %v1929 = vpop.permute.xlu0 %1928
        %v1930 = vlaneseq
        %v1931 = vshrl.u32 %v1930, 7
        %v1932 = vadd.s32 %v1931, 72
        %1933 = vset.pattern.permute.xlu0 %v1932
        %1934 = vperm.xlu0 %1933, %v1874
        %v1935 = vpop.permute.xlu0 %1934
        %v1936 = vlaneseq
        %v1937 = vshrl.u32 %v1936, 7
        %v1938 = vadd.s32 %v1937, 80
        %1939 = vset.pattern.permute.xlu0 %v1938
        %1940 = vperm.xlu0 %1939, %v1874
        %v1941 = vpop.permute.xlu0 %1940
        %v1942 = vlaneseq
        %v1943 = vshrl.u32 %v1942, 7
        %v1944 = vadd.s32 %v1943, 88
        %1945 = vset.pattern.permute.xlu0 %v1944
        %1946 = vperm.xlu0 %1945, %v1874
        %v1947 = vpop.permute.xlu0 %1946
        %v1948 = vlaneseq
        %v1949 = vshrl.u32 %v1948, 7
        %v1950 = vadd.s32 %v1949, 96
        %1951 = vset.pattern.permute.xlu0 %v1950
        %1952 = vperm.xlu0 %1951, %v1874
        %v1953 = vpop.permute.xlu0 %1952
        %v1954 = vlaneseq
        %v1955 = vshrl.u32 %v1954, 7
        %v1956 = vadd.s32 %v1955, 104
        %1957 = vset.pattern.permute.xlu0 %v1956
        %1958 = vperm.xlu0 %1957, %v1874
        %v1959 = vpop.permute.xlu0 %1958
        %v1960 = vlaneseq
        %v1961 = vshrl.u32 %v1960, 7
        %v1962 = vadd.s32 %v1961, 112
        %1963 = vset.pattern.permute.xlu0 %v1962
        %1964 = vperm.xlu0 %1963, %v1874
        %v1965 = vpop.permute.xlu0 %1964
        %v1966 = vlaneseq
        %v1967 = vshrl.u32 %v1966, 7
        %v1968 = vadd.s32 %v1967, 120
        %1969 = vset.pattern.permute.xlu0 %v1968
        %1970 = vperm.xlu0 %1969, %v1874
        %v1971 = vpop.permute.xlu0 %1970
        %v1988 = vmul.f32 %v1870, %v1881
        %v1989 = vmul.f32 %v1870, %v1887
        %v1990 = vmul.f32 %v1870, %v1893
        %v1991 = vmul.f32 %v1870, %v1899
        %v1992 = vmul.f32 %v1870, %v1905
        %v1993 = vmul.f32 %v1870, %v1911
        %v1994 = vmul.f32 %v1870, %v1917
        %v1995 = vmul.f32 %v1870, %v1923
        %v1996 = vmul.f32 %v1870, %v1929
        %v1997 = vmul.f32 %v1870, %v1935
        %v1998 = vmul.f32 %v1870, %v1941
        %v1999 = vmul.f32 %v1870, %v1947
        %v2000 = vmul.f32 %v1870, %v1953
        %v2001 = vmul.f32 %v1870, %v1959
        %v2002 = vmul.f32 %v1870, %v1965
        %v2003 = vmul.f32 %v1870, %v1971
        %v2004 = vmul.f32 %v1871, %v1881
        %v2005 = vmul.f32 %v1871, %v1887
        %v2006 = vmul.f32 %v1871, %v1893
        %v2007 = vmul.f32 %v1871, %v1899
        %v2008 = vmul.f32 %v1871, %v1905
        %v2009 = vmul.f32 %v1871, %v1911
        %v2010 = vmul.f32 %v1871, %v1917
        %v2011 = vmul.f32 %v1871, %v1923
        %v2012 = vmul.f32 %v1871, %v1929
        %v2013 = vmul.f32 %v1871, %v1935
        %v2014 = vmul.f32 %v1871, %v1941
        %v2015 = vmul.f32 %v1871, %v1947
        %v2016 = vmul.f32 %v1871, %v1953
        %v2017 = vmul.f32 %v1871, %v1959
        %v2018 = vmul.f32 %v1871, %v1965
        %v2019 = vmul.f32 %v1871, %v1971
        %v2020 = vmul.f32 %v1872, %v1881
        %v2021 = vmul.f32 %v1872, %v1887
        %v2022 = vmul.f32 %v1872, %v1893
        %v2023 = vmul.f32 %v1872, %v1899
        %v2024 = vmul.f32 %v1872, %v1905
        %v2025 = vmul.f32 %v1872, %v1911
        %v2026 = vmul.f32 %v1872, %v1917
        %v2027 = vmul.f32 %v1872, %v1923
        %v2028 = vmul.f32 %v1872, %v1929
        %v2029 = vmul.f32 %v1872, %v1935
        %v2030 = vmul.f32 %v1872, %v1941
        %v2031 = vmul.f32 %v1872, %v1947
        %v2032 = vmul.f32 %v1872, %v1953
        %v2033 = vmul.f32 %v1872, %v1959
        %v2034 = vmul.f32 %v1872, %v1965
        %v2035 = vmul.f32 %v1872, %v1971
        %v2036 = vmul.f32 %v1873, %v1881
        %v2037 = vmul.f32 %v1873, %v1887
        %v2038 = vmul.f32 %v1873, %v1893
        %v2039 = vmul.f32 %v1873, %v1899
        %v2040 = vmul.f32 %v1873, %v1905
        %v2041 = vmul.f32 %v1873, %v1911
        %v2042 = vmul.f32 %v1873, %v1917
        %v2043 = vmul.f32 %v1873, %v1923
        %v2044 = vmul.f32 %v1873, %v1929
        %v2045 = vmul.f32 %v1873, %v1935
        %v2046 = vmul.f32 %v1873, %v1941
        %v2047 = vmul.f32 %v1873, %v1947
        %v2048 = vmul.f32 %v1873, %v1953
        %v2049 = vmul.f32 %v1873, %v1959
        %v2050 = vmul.f32 %v1873, %v1965
        %v2051 = vmul.f32 %v1873, %v1971
        %v2052 = vadd.f32 %v1806, %v1988
        %v2053 = vadd.f32 %v1807, %v1989
        %v2054 = vadd.f32 %v1808, %v1990
        %v2055 = vadd.f32 %v1809, %v1991
        %v2056 = vadd.f32 %v1810, %v1992
        %v2057 = vadd.f32 %v1811, %v1993
        %v2058 = vadd.f32 %v1812, %v1994
        %v2059 = vadd.f32 %v1813, %v1995
        %v2060 = vadd.f32 %v1814, %v1996
        %v2061 = vadd.f32 %v1815, %v1997
        %v2062 = vadd.f32 %v1816, %v1998
        %v2063 = vadd.f32 %v1817, %v1999
        %v2064 = vadd.f32 %v1818, %v2000
        %v2065 = vadd.f32 %v1819, %v2001
        %v2066 = vadd.f32 %v1820, %v2002
        %v2067 = vadd.f32 %v1821, %v2003
        %v2068 = vadd.f32 %v1822, %v2004
        %v2069 = vadd.f32 %v1823, %v2005
        %v2070 = vadd.f32 %v1824, %v2006
        %v2071 = vadd.f32 %v1825, %v2007
        %v2072 = vadd.f32 %v1826, %v2008
        %v2073 = vadd.f32 %v1827, %v2009
        %v2074 = vadd.f32 %v1828, %v2010
        %v2075 = vadd.f32 %v1829, %v2011
        %v2076 = vadd.f32 %v1830, %v2012
        %v2077 = vadd.f32 %v1831, %v2013
        %v2078 = vadd.f32 %v1832, %v2014
        %v2079 = vadd.f32 %v1833, %v2015
        %v2080 = vadd.f32 %v1834, %v2016
        %v2081 = vadd.f32 %v1835, %v2017
        %v2082 = vadd.f32 %v1836, %v2018
        %v2083 = vadd.f32 %v1837, %v2019
        %v2084 = vadd.f32 %v1838, %v2020
        %v2085 = vadd.f32 %v1839, %v2021
        %v2086 = vadd.f32 %v1840, %v2022
        %v2087 = vadd.f32 %v1841, %v2023
        %v2088 = vadd.f32 %v1842, %v2024
        %v2089 = vadd.f32 %v1843, %v2025
        %v2090 = vadd.f32 %v1844, %v2026
        %v2091 = vadd.f32 %v1845, %v2027
        %v2092 = vadd.f32 %v1846, %v2028
        %v2093 = vadd.f32 %v1847, %v2029
        %v2094 = vadd.f32 %v1848, %v2030
        %v2095 = vadd.f32 %v1849, %v2031
        %v2096 = vadd.f32 %v1850, %v2032
        %v2097 = vadd.f32 %v1851, %v2033
        %v2098 = vadd.f32 %v1852, %v2034
        %v2099 = vadd.f32 %v1853, %v2035
        %v2100 = vadd.f32 %v1854, %v2036
        %v2101 = vadd.f32 %v1855, %v2037
        %v2102 = vadd.f32 %v1856, %v2038
        %v2103 = vadd.f32 %v1857, %v2039
        %v2104 = vadd.f32 %v1858, %v2040
        %v2105 = vadd.f32 %v1859, %v2041
        %v2106 = vadd.f32 %v1860, %v2042
        %v2107 = vadd.f32 %v1861, %v2043
        %v2108 = vadd.f32 %v1862, %v2044
        %v2109 = vadd.f32 %v1863, %v2045
        %v2110 = vadd.f32 %v1864, %v2046
        %v2111 = vadd.f32 %v1865, %v2047
        %v2112 = vadd.f32 %v1866, %v2048
        %v2113 = vadd.f32 %v1867, %v2049
        %v2114 = vadd.f32 %v1868, %v2050
        %v2115 = vadd.f32 %v1869, %v2051
        %v2116 = vperm.slane %v882, 5
        %v2117 = vperm.slane %v883, 5
        %v2118 = vperm.slane %v884, 5
        %v2119 = vperm.slane %v885, 5
        %v2120 = vperm.slane %v781, 5
        %v2122 = vlaneseq
        %v2123 = vshrl.u32 %v2122, 7
        %2125 = vset.pattern.permute.xlu0 %v2123
        %2126 = vperm.xlu0 %2125, %v2120
        %v2127 = vpop.permute.xlu0 %2126
        %v2128 = vlaneseq
        %v2129 = vshrl.u32 %v2128, 7
        %v2130 = vadd.s32 %v2129, 8
        %2131 = vset.pattern.permute.xlu0 %v2130
        %2132 = vperm.xlu0 %2131, %v2120
        %v2133 = vpop.permute.xlu0 %2132
        %v2134 = vlaneseq
        %v2135 = vshrl.u32 %v2134, 7
        %v2136 = vadd.s32 %v2135, 16
        %2137 = vset.pattern.permute.xlu0 %v2136
        %2138 = vperm.xlu0 %2137, %v2120
        %v2139 = vpop.permute.xlu0 %2138
        %v2140 = vlaneseq
        %v2141 = vshrl.u32 %v2140, 7
        %v2142 = vadd.s32 %v2141, 24
        %2143 = vset.pattern.permute.xlu0 %v2142
        %2144 = vperm.xlu0 %2143, %v2120
        %v2145 = vpop.permute.xlu0 %2144
        %v2146 = vlaneseq
        %v2147 = vshrl.u32 %v2146, 7
        %v2148 = vadd.s32 %v2147, 32
        %2149 = vset.pattern.permute.xlu0 %v2148
        %2150 = vperm.xlu0 %2149, %v2120
        %v2151 = vpop.permute.xlu0 %2150
        %v2152 = vlaneseq
        %v2153 = vshrl.u32 %v2152, 7
        %v2154 = vadd.s32 %v2153, 40
        %2155 = vset.pattern.permute.xlu0 %v2154
        %2156 = vperm.xlu0 %2155, %v2120
        %v2157 = vpop.permute.xlu0 %2156
        %v2158 = vlaneseq
        %v2159 = vshrl.u32 %v2158, 7
        %v2160 = vadd.s32 %v2159, 48
        %2161 = vset.pattern.permute.xlu0 %v2160
        %2162 = vperm.xlu0 %2161, %v2120
        %v2163 = vpop.permute.xlu0 %2162
        %v2164 = vlaneseq
        %v2165 = vshrl.u32 %v2164, 7
        %v2166 = vadd.s32 %v2165, 56
        %2167 = vset.pattern.permute.xlu0 %v2166
        %2168 = vperm.xlu0 %2167, %v2120
        %v2169 = vpop.permute.xlu0 %2168
        %v2170 = vlaneseq
        %v2171 = vshrl.u32 %v2170, 7
        %v2172 = vadd.s32 %v2171, 64
        %2173 = vset.pattern.permute.xlu0 %v2172
        %2174 = vperm.xlu0 %2173, %v2120
        %v2175 = vpop.permute.xlu0 %2174
        %v2176 = vlaneseq
        %v2177 = vshrl.u32 %v2176, 7
        %v2178 = vadd.s32 %v2177, 72
        %2179 = vset.pattern.permute.xlu0 %v2178
        %2180 = vperm.xlu0 %2179, %v2120
        %v2181 = vpop.permute.xlu0 %2180
        %v2182 = vlaneseq
        %v2183 = vshrl.u32 %v2182, 7
        %v2184 = vadd.s32 %v2183, 80
        %2185 = vset.pattern.permute.xlu0 %v2184
        %2186 = vperm.xlu0 %2185, %v2120
        %v2187 = vpop.permute.xlu0 %2186
        %v2188 = vlaneseq
        %v2189 = vshrl.u32 %v2188, 7
        %v2190 = vadd.s32 %v2189, 88
        %2191 = vset.pattern.permute.xlu0 %v2190
        %2192 = vperm.xlu0 %2191, %v2120
        %v2193 = vpop.permute.xlu0 %2192
        %v2194 = vlaneseq
        %v2195 = vshrl.u32 %v2194, 7
        %v2196 = vadd.s32 %v2195, 96
        %2197 = vset.pattern.permute.xlu0 %v2196
        %2198 = vperm.xlu0 %2197, %v2120
        %v2199 = vpop.permute.xlu0 %2198
        %v2200 = vlaneseq
        %v2201 = vshrl.u32 %v2200, 7
        %v2202 = vadd.s32 %v2201, 104
        %2203 = vset.pattern.permute.xlu0 %v2202
        %2204 = vperm.xlu0 %2203, %v2120
        %v2205 = vpop.permute.xlu0 %2204
        %v2206 = vlaneseq
        %v2207 = vshrl.u32 %v2206, 7
        %v2208 = vadd.s32 %v2207, 112
        %2209 = vset.pattern.permute.xlu0 %v2208
        %2210 = vperm.xlu0 %2209, %v2120
        %v2211 = vpop.permute.xlu0 %2210
        %v2212 = vlaneseq
        %v2213 = vshrl.u32 %v2212, 7
        %v2214 = vadd.s32 %v2213, 120
        %2215 = vset.pattern.permute.xlu0 %v2214
        %2216 = vperm.xlu0 %2215, %v2120
        %v2217 = vpop.permute.xlu0 %2216
        %v2234 = vmul.f32 %v2116, %v2127
        %v2235 = vmul.f32 %v2116, %v2133
        %v2236 = vmul.f32 %v2116, %v2139
        %v2237 = vmul.f32 %v2116, %v2145
        %v2238 = vmul.f32 %v2116, %v2151
        %v2239 = vmul.f32 %v2116, %v2157
        %v2240 = vmul.f32 %v2116, %v2163
        %v2241 = vmul.f32 %v2116, %v2169
        %v2242 = vmul.f32 %v2116, %v2175
        %v2243 = vmul.f32 %v2116, %v2181
        %v2244 = vmul.f32 %v2116, %v2187
        %v2245 = vmul.f32 %v2116, %v2193
        %v2246 = vmul.f32 %v2116, %v2199
        %v2247 = vmul.f32 %v2116, %v2205
        %v2248 = vmul.f32 %v2116, %v2211
        %v2249 = vmul.f32 %v2116, %v2217
        %v2250 = vmul.f32 %v2117, %v2127
        %v2251 = vmul.f32 %v2117, %v2133
        %v2252 = vmul.f32 %v2117, %v2139
        %v2253 = vmul.f32 %v2117, %v2145
        %v2254 = vmul.f32 %v2117, %v2151
        %v2255 = vmul.f32 %v2117, %v2157
        %v2256 = vmul.f32 %v2117, %v2163
        %v2257 = vmul.f32 %v2117, %v2169
        %v2258 = vmul.f32 %v2117, %v2175
        %v2259 = vmul.f32 %v2117, %v2181
        %v2260 = vmul.f32 %v2117, %v2187
        %v2261 = vmul.f32 %v2117, %v2193
        %v2262 = vmul.f32 %v2117, %v2199
        %v2263 = vmul.f32 %v2117, %v2205
        %v2264 = vmul.f32 %v2117, %v2211
        %v2265 = vmul.f32 %v2117, %v2217
        %v2266 = vmul.f32 %v2118, %v2127
        %v2267 = vmul.f32 %v2118, %v2133
        %v2268 = vmul.f32 %v2118, %v2139
        %v2269 = vmul.f32 %v2118, %v2145
        %v2270 = vmul.f32 %v2118, %v2151
        %v2271 = vmul.f32 %v2118, %v2157
        %v2272 = vmul.f32 %v2118, %v2163
        %v2273 = vmul.f32 %v2118, %v2169
        %v2274 = vmul.f32 %v2118, %v2175
        %v2275 = vmul.f32 %v2118, %v2181
        %v2276 = vmul.f32 %v2118, %v2187
        %v2277 = vmul.f32 %v2118, %v2193
        %v2278 = vmul.f32 %v2118, %v2199
        %v2279 = vmul.f32 %v2118, %v2205
        %v2280 = vmul.f32 %v2118, %v2211
        %v2281 = vmul.f32 %v2118, %v2217
        %v2282 = vmul.f32 %v2119, %v2127
        %v2283 = vmul.f32 %v2119, %v2133
        %v2284 = vmul.f32 %v2119, %v2139
        %v2285 = vmul.f32 %v2119, %v2145
        %v2286 = vmul.f32 %v2119, %v2151
        %v2287 = vmul.f32 %v2119, %v2157
        %v2288 = vmul.f32 %v2119, %v2163
        %v2289 = vmul.f32 %v2119, %v2169
        %v2290 = vmul.f32 %v2119, %v2175
        %v2291 = vmul.f32 %v2119, %v2181
        %v2292 = vmul.f32 %v2119, %v2187
        %v2293 = vmul.f32 %v2119, %v2193
        %v2294 = vmul.f32 %v2119, %v2199
        %v2295 = vmul.f32 %v2119, %v2205
        %v2296 = vmul.f32 %v2119, %v2211
        %v2297 = vmul.f32 %v2119, %v2217
        %v2298 = vadd.f32 %v2052, %v2234
        %v2299 = vadd.f32 %v2053, %v2235
        %v2300 = vadd.f32 %v2054, %v2236
        %v2301 = vadd.f32 %v2055, %v2237
        %v2302 = vadd.f32 %v2056, %v2238
        %v2303 = vadd.f32 %v2057, %v2239
        %v2304 = vadd.f32 %v2058, %v2240
        %v2305 = vadd.f32 %v2059, %v2241
        %v2306 = vadd.f32 %v2060, %v2242
        %v2307 = vadd.f32 %v2061, %v2243
        %v2308 = vadd.f32 %v2062, %v2244
        %v2309 = vadd.f32 %v2063, %v2245
        %v2310 = vadd.f32 %v2064, %v2246
        %v2311 = vadd.f32 %v2065, %v2247
        %v2312 = vadd.f32 %v2066, %v2248
        %v2313 = vadd.f32 %v2067, %v2249
        %v2314 = vadd.f32 %v2068, %v2250
        %v2315 = vadd.f32 %v2069, %v2251
        %v2316 = vadd.f32 %v2070, %v2252
        %v2317 = vadd.f32 %v2071, %v2253
        %v2318 = vadd.f32 %v2072, %v2254
        %v2319 = vadd.f32 %v2073, %v2255
        %v2320 = vadd.f32 %v2074, %v2256
        %v2321 = vadd.f32 %v2075, %v2257
        %v2322 = vadd.f32 %v2076, %v2258
        %v2323 = vadd.f32 %v2077, %v2259
        %v2324 = vadd.f32 %v2078, %v2260
        %v2325 = vadd.f32 %v2079, %v2261
        %v2326 = vadd.f32 %v2080, %v2262
        %v2327 = vadd.f32 %v2081, %v2263
        %v2328 = vadd.f32 %v2082, %v2264
        %v2329 = vadd.f32 %v2083, %v2265
        %v2330 = vadd.f32 %v2084, %v2266
        %v2331 = vadd.f32 %v2085, %v2267
        %v2332 = vadd.f32 %v2086, %v2268
        %v2333 = vadd.f32 %v2087, %v2269
        %v2334 = vadd.f32 %v2088, %v2270
        %v2335 = vadd.f32 %v2089, %v2271
        %v2336 = vadd.f32 %v2090, %v2272
        %v2337 = vadd.f32 %v2091, %v2273
        %v2338 = vadd.f32 %v2092, %v2274
        %v2339 = vadd.f32 %v2093, %v2275
        %v2340 = vadd.f32 %v2094, %v2276
        %v2341 = vadd.f32 %v2095, %v2277
        %v2342 = vadd.f32 %v2096, %v2278
        %v2343 = vadd.f32 %v2097, %v2279
        %v2344 = vadd.f32 %v2098, %v2280
        %v2345 = vadd.f32 %v2099, %v2281
        %v2346 = vadd.f32 %v2100, %v2282
        %v2347 = vadd.f32 %v2101, %v2283
        %v2348 = vadd.f32 %v2102, %v2284
        %v2349 = vadd.f32 %v2103, %v2285
        %v2350 = vadd.f32 %v2104, %v2286
        %v2351 = vadd.f32 %v2105, %v2287
        %v2352 = vadd.f32 %v2106, %v2288
        %v2353 = vadd.f32 %v2107, %v2289
        %v2354 = vadd.f32 %v2108, %v2290
        %v2355 = vadd.f32 %v2109, %v2291
        %v2356 = vadd.f32 %v2110, %v2292
        %v2357 = vadd.f32 %v2111, %v2293
        %v2358 = vadd.f32 %v2112, %v2294
        %v2359 = vadd.f32 %v2113, %v2295
        %v2360 = vadd.f32 %v2114, %v2296
        %v2361 = vadd.f32 %v2115, %v2297
        %v2362 = vperm.slane %v882, 6
        %v2363 = vperm.slane %v883, 6
        %v2364 = vperm.slane %v884, 6
        %v2365 = vperm.slane %v885, 6
        %v2366 = vperm.slane %v781, 6
        %v2368 = vlaneseq
        %v2369 = vshrl.u32 %v2368, 7
        %2371 = vset.pattern.permute.xlu0 %v2369
        %2372 = vperm.xlu0 %2371, %v2366
        %v2373 = vpop.permute.xlu0 %2372
        %v2374 = vlaneseq
        %v2375 = vshrl.u32 %v2374, 7
        %v2376 = vadd.s32 %v2375, 8
        %2377 = vset.pattern.permute.xlu0 %v2376
        %2378 = vperm.xlu0 %2377, %v2366
        %v2379 = vpop.permute.xlu0 %2378
        %v2380 = vlaneseq
        %v2381 = vshrl.u32 %v2380, 7
        %v2382 = vadd.s32 %v2381, 16
        %2383 = vset.pattern.permute.xlu0 %v2382
        %2384 = vperm.xlu0 %2383, %v2366
        %v2385 = vpop.permute.xlu0 %2384
        %v2386 = vlaneseq
        %v2387 = vshrl.u32 %v2386, 7
        %v2388 = vadd.s32 %v2387, 24
        %2389 = vset.pattern.permute.xlu0 %v2388
        %2390 = vperm.xlu0 %2389, %v2366
        %v2391 = vpop.permute.xlu0 %2390
        %v2392 = vlaneseq
        %v2393 = vshrl.u32 %v2392, 7
        %v2394 = vadd.s32 %v2393, 32
        %2395 = vset.pattern.permute.xlu0 %v2394
        %2396 = vperm.xlu0 %2395, %v2366
        %v2397 = vpop.permute.xlu0 %2396
        %v2398 = vlaneseq
        %v2399 = vshrl.u32 %v2398, 7
        %v2400 = vadd.s32 %v2399, 40
        %2401 = vset.pattern.permute.xlu0 %v2400
        %2402 = vperm.xlu0 %2401, %v2366
        %v2403 = vpop.permute.xlu0 %2402
        %v2404 = vlaneseq
        %v2405 = vshrl.u32 %v2404, 7
        %v2406 = vadd.s32 %v2405, 48
        %2407 = vset.pattern.permute.xlu0 %v2406
        %2408 = vperm.xlu0 %2407, %v2366
        %v2409 = vpop.permute.xlu0 %2408
        %v2410 = vlaneseq
        %v2411 = vshrl.u32 %v2410, 7
        %v2412 = vadd.s32 %v2411, 56
        %2413 = vset.pattern.permute.xlu0 %v2412
        %2414 = vperm.xlu0 %2413, %v2366
        %v2415 = vpop.permute.xlu0 %2414
        %v2416 = vlaneseq
        %v2417 = vshrl.u32 %v2416, 7
        %v2418 = vadd.s32 %v2417, 64
        %2419 = vset.pattern.permute.xlu0 %v2418
        %2420 = vperm.xlu0 %2419, %v2366
        %v2421 = vpop.permute.xlu0 %2420
        %v2422 = vlaneseq
        %v2423 = vshrl.u32 %v2422, 7
        %v2424 = vadd.s32 %v2423, 72
        %2425 = vset.pattern.permute.xlu0 %v2424
        %2426 = vperm.xlu0 %2425, %v2366
        %v2427 = vpop.permute.xlu0 %2426
        %v2428 = vlaneseq
        %v2429 = vshrl.u32 %v2428, 7
        %v2430 = vadd.s32 %v2429, 80
        %2431 = vset.pattern.permute.xlu0 %v2430
        %2432 = vperm.xlu0 %2431, %v2366
        %v2433 = vpop.permute.xlu0 %2432
        %v2434 = vlaneseq
        %v2435 = vshrl.u32 %v2434, 7
        %v2436 = vadd.s32 %v2435, 88
        %2437 = vset.pattern.permute.xlu0 %v2436
        %2438 = vperm.xlu0 %2437, %v2366
        %v2439 = vpop.permute.xlu0 %2438
        %v2440 = vlaneseq
        %v2441 = vshrl.u32 %v2440, 7
        %v2442 = vadd.s32 %v2441, 96
        %2443 = vset.pattern.permute.xlu0 %v2442
        %2444 = vperm.xlu0 %2443, %v2366
        %v2445 = vpop.permute.xlu0 %2444
        %v2446 = vlaneseq
        %v2447 = vshrl.u32 %v2446, 7
        %v2448 = vadd.s32 %v2447, 104
        %2449 = vset.pattern.permute.xlu0 %v2448
        %2450 = vperm.xlu0 %2449, %v2366
        %v2451 = vpop.permute.xlu0 %2450
        %v2452 = vlaneseq
        %v2453 = vshrl.u32 %v2452, 7
        %v2454 = vadd.s32 %v2453, 112
        %2455 = vset.pattern.permute.xlu0 %v2454
        %2456 = vperm.xlu0 %2455, %v2366
        %v2457 = vpop.permute.xlu0 %2456
        %v2458 = vlaneseq
        %v2459 = vshrl.u32 %v2458, 7
        %v2460 = vadd.s32 %v2459, 120
        %2461 = vset.pattern.permute.xlu0 %v2460
        %2462 = vperm.xlu0 %2461, %v2366
        %v2463 = vpop.permute.xlu0 %2462
        %v2480 = vmul.f32 %v2362, %v2373
        %v2481 = vmul.f32 %v2362, %v2379
        %v2482 = vmul.f32 %v2362, %v2385
        %v2483 = vmul.f32 %v2362, %v2391
        %v2484 = vmul.f32 %v2362, %v2397
        %v2485 = vmul.f32 %v2362, %v2403
        %v2486 = vmul.f32 %v2362, %v2409
        %v2487 = vmul.f32 %v2362, %v2415
        %v2488 = vmul.f32 %v2362, %v2421
        %v2489 = vmul.f32 %v2362, %v2427
        %v2490 = vmul.f32 %v2362, %v2433
        %v2491 = vmul.f32 %v2362, %v2439
        %v2492 = vmul.f32 %v2362, %v2445
        %v2493 = vmul.f32 %v2362, %v2451
        %v2494 = vmul.f32 %v2362, %v2457
        %v2495 = vmul.f32 %v2362, %v2463
        %v2496 = vmul.f32 %v2363, %v2373
        %v2497 = vmul.f32 %v2363, %v2379
        %v2498 = vmul.f32 %v2363, %v2385
        %v2499 = vmul.f32 %v2363, %v2391
        %v2500 = vmul.f32 %v2363, %v2397
        %v2501 = vmul.f32 %v2363, %v2403
        %v2502 = vmul.f32 %v2363, %v2409
        %v2503 = vmul.f32 %v2363, %v2415
        %v2504 = vmul.f32 %v2363, %v2421
        %v2505 = vmul.f32 %v2363, %v2427
        %v2506 = vmul.f32 %v2363, %v2433
        %v2507 = vmul.f32 %v2363, %v2439
        %v2508 = vmul.f32 %v2363, %v2445
        %v2509 = vmul.f32 %v2363, %v2451
        %v2510 = vmul.f32 %v2363, %v2457
        %v2511 = vmul.f32 %v2363, %v2463
        %v2512 = vmul.f32 %v2364, %v2373
        %v2513 = vmul.f32 %v2364, %v2379
        %v2514 = vmul.f32 %v2364, %v2385
        %v2515 = vmul.f32 %v2364, %v2391
        %v2516 = vmul.f32 %v2364, %v2397
        %v2517 = vmul.f32 %v2364, %v2403
        %v2518 = vmul.f32 %v2364, %v2409
        %v2519 = vmul.f32 %v2364, %v2415
        %v2520 = vmul.f32 %v2364, %v2421
        %v2521 = vmul.f32 %v2364, %v2427
        %v2522 = vmul.f32 %v2364, %v2433
        %v2523 = vmul.f32 %v2364, %v2439
        %v2524 = vmul.f32 %v2364, %v2445
        %v2525 = vmul.f32 %v2364, %v2451
        %v2526 = vmul.f32 %v2364, %v2457
        %v2527 = vmul.f32 %v2364, %v2463
        %v2528 = vmul.f32 %v2365, %v2373
        %v2529 = vmul.f32 %v2365, %v2379
        %v2530 = vmul.f32 %v2365, %v2385
        %v2531 = vmul.f32 %v2365, %v2391
        %v2532 = vmul.f32 %v2365, %v2397
        %v2533 = vmul.f32 %v2365, %v2403
        %v2534 = vmul.f32 %v2365, %v2409
        %v2535 = vmul.f32 %v2365, %v2415
        %v2536 = vmul.f32 %v2365, %v2421
        %v2537 = vmul.f32 %v2365, %v2427
        %v2538 = vmul.f32 %v2365, %v2433
        %v2539 = vmul.f32 %v2365, %v2439
        %v2540 = vmul.f32 %v2365, %v2445
        %v2541 = vmul.f32 %v2365, %v2451
        %v2542 = vmul.f32 %v2365, %v2457
        %v2543 = vmul.f32 %v2365, %v2463
        %v2544 = vadd.f32 %v2298, %v2480
        %v2545 = vadd.f32 %v2299, %v2481
        %v2546 = vadd.f32 %v2300, %v2482
        %v2547 = vadd.f32 %v2301, %v2483
        %v2548 = vadd.f32 %v2302, %v2484
        %v2549 = vadd.f32 %v2303, %v2485
        %v2550 = vadd.f32 %v2304, %v2486
        %v2551 = vadd.f32 %v2305, %v2487
        %v2552 = vadd.f32 %v2306, %v2488
        %v2553 = vadd.f32 %v2307, %v2489
        %v2554 = vadd.f32 %v2308, %v2490
        %v2555 = vadd.f32 %v2309, %v2491
        %v2556 = vadd.f32 %v2310, %v2492
        %v2557 = vadd.f32 %v2311, %v2493
        %v2558 = vadd.f32 %v2312, %v2494
        %v2559 = vadd.f32 %v2313, %v2495
        %v2560 = vadd.f32 %v2314, %v2496
        %v2561 = vadd.f32 %v2315, %v2497
        %v2562 = vadd.f32 %v2316, %v2498
        %v2563 = vadd.f32 %v2317, %v2499
        %v2564 = vadd.f32 %v2318, %v2500
        %v2565 = vadd.f32 %v2319, %v2501
        %v2566 = vadd.f32 %v2320, %v2502
        %v2567 = vadd.f32 %v2321, %v2503
        %v2568 = vadd.f32 %v2322, %v2504
        %v2569 = vadd.f32 %v2323, %v2505
        %v2570 = vadd.f32 %v2324, %v2506
        %v2571 = vadd.f32 %v2325, %v2507
        %v2572 = vadd.f32 %v2326, %v2508
        %v2573 = vadd.f32 %v2327, %v2509
        %v2574 = vadd.f32 %v2328, %v2510
        %v2575 = vadd.f32 %v2329, %v2511
        %v2576 = vadd.f32 %v2330, %v2512
        %v2577 = vadd.f32 %v2331, %v2513
        %v2578 = vadd.f32 %v2332, %v2514
        %v2579 = vadd.f32 %v2333, %v2515
        %v2580 = vadd.f32 %v2334, %v2516
        %v2581 = vadd.f32 %v2335, %v2517
        %v2582 = vadd.f32 %v2336, %v2518
        %v2583 = vadd.f32 %v2337, %v2519
        %v2584 = vadd.f32 %v2338, %v2520
        %v2585 = vadd.f32 %v2339, %v2521
        %v2586 = vadd.f32 %v2340, %v2522
        %v2587 = vadd.f32 %v2341, %v2523
        %v2588 = vadd.f32 %v2342, %v2524
        %v2589 = vadd.f32 %v2343, %v2525
        %v2590 = vadd.f32 %v2344, %v2526
        %v2591 = vadd.f32 %v2345, %v2527
        %v2592 = vadd.f32 %v2346, %v2528
        %v2593 = vadd.f32 %v2347, %v2529
        %v2594 = vadd.f32 %v2348, %v2530
        %v2595 = vadd.f32 %v2349, %v2531
        %v2596 = vadd.f32 %v2350, %v2532
        %v2597 = vadd.f32 %v2351, %v2533
        %v2598 = vadd.f32 %v2352, %v2534
        %v2599 = vadd.f32 %v2353, %v2535
        %v2600 = vadd.f32 %v2354, %v2536
        %v2601 = vadd.f32 %v2355, %v2537
        %v2602 = vadd.f32 %v2356, %v2538
        %v2603 = vadd.f32 %v2357, %v2539
        %v2604 = vadd.f32 %v2358, %v2540
        %v2605 = vadd.f32 %v2359, %v2541
        %v2606 = vadd.f32 %v2360, %v2542
        %v2607 = vadd.f32 %v2361, %v2543
        %v2608 = vperm.slane %v882, 7
        %v2609 = vperm.slane %v883, 7
        %v2610 = vperm.slane %v884, 7
        %v2611 = vperm.slane %v885, 7
        %v2612 = vperm.slane %v781, 7
        %v2614 = vlaneseq
        %v2615 = vshrl.u32 %v2614, 7
        %2617 = vset.pattern.permute.xlu0 %v2615
        %2618 = vperm.xlu0 %2617, %v2612
        %v2619 = vpop.permute.xlu0 %2618
        %v2620 = vlaneseq
        %v2621 = vshrl.u32 %v2620, 7
        %v2622 = vadd.s32 %v2621, 8
        %2623 = vset.pattern.permute.xlu0 %v2622
        %2624 = vperm.xlu0 %2623, %v2612
        %v2625 = vpop.permute.xlu0 %2624
        %v2626 = vlaneseq
        %v2627 = vshrl.u32 %v2626, 7
        %v2628 = vadd.s32 %v2627, 16
        %2629 = vset.pattern.permute.xlu0 %v2628
        %2630 = vperm.xlu0 %2629, %v2612
        %v2631 = vpop.permute.xlu0 %2630
        %v2632 = vlaneseq
        %v2633 = vshrl.u32 %v2632, 7
        %v2634 = vadd.s32 %v2633, 24
        %2635 = vset.pattern.permute.xlu0 %v2634
        %2636 = vperm.xlu0 %2635, %v2612
        %v2637 = vpop.permute.xlu0 %2636
        %v2638 = vlaneseq
        %v2639 = vshrl.u32 %v2638, 7
        %v2640 = vadd.s32 %v2639, 32
        %2641 = vset.pattern.permute.xlu0 %v2640
        %2642 = vperm.xlu0 %2641, %v2612
        %v2643 = vpop.permute.xlu0 %2642
        %v2644 = vlaneseq
        %v2645 = vshrl.u32 %v2644, 7
        %v2646 = vadd.s32 %v2645, 40
        %2647 = vset.pattern.permute.xlu0 %v2646
        %2648 = vperm.xlu0 %2647, %v2612
        %v2649 = vpop.permute.xlu0 %2648
        %v2650 = vlaneseq
        %v2651 = vshrl.u32 %v2650, 7
        %v2652 = vadd.s32 %v2651, 48
        %2653 = vset.pattern.permute.xlu0 %v2652
        %2654 = vperm.xlu0 %2653, %v2612
        %v2655 = vpop.permute.xlu0 %2654
        %v2656 = vlaneseq
        %v2657 = vshrl.u32 %v2656, 7
        %v2658 = vadd.s32 %v2657, 56
        %2659 = vset.pattern.permute.xlu0 %v2658
        %2660 = vperm.xlu0 %2659, %v2612
        %v2661 = vpop.permute.xlu0 %2660
        %v2662 = vlaneseq
        %v2663 = vshrl.u32 %v2662, 7
        %v2664 = vadd.s32 %v2663, 64
        %2665 = vset.pattern.permute.xlu0 %v2664
        %2666 = vperm.xlu0 %2665, %v2612
        %v2667 = vpop.permute.xlu0 %2666
        %v2668 = vlaneseq
        %v2669 = vshrl.u32 %v2668, 7
        %v2670 = vadd.s32 %v2669, 72
        %2671 = vset.pattern.permute.xlu0 %v2670
        %2672 = vperm.xlu0 %2671, %v2612
        %v2673 = vpop.permute.xlu0 %2672
        %v2674 = vlaneseq
        %v2675 = vshrl.u32 %v2674, 7
        %v2676 = vadd.s32 %v2675, 80
        %2677 = vset.pattern.permute.xlu0 %v2676
        %2678 = vperm.xlu0 %2677, %v2612
        %v2679 = vpop.permute.xlu0 %2678
        %v2680 = vlaneseq
        %v2681 = vshrl.u32 %v2680, 7
        %v2682 = vadd.s32 %v2681, 88
        %2683 = vset.pattern.permute.xlu0 %v2682
        %2684 = vperm.xlu0 %2683, %v2612
        %v2685 = vpop.permute.xlu0 %2684
        %v2686 = vlaneseq
        %v2687 = vshrl.u32 %v2686, 7
        %v2688 = vadd.s32 %v2687, 96
        %2689 = vset.pattern.permute.xlu0 %v2688
        %2690 = vperm.xlu0 %2689, %v2612
        %v2691 = vpop.permute.xlu0 %2690
        %v2692 = vlaneseq
        %v2693 = vshrl.u32 %v2692, 7
        %v2694 = vadd.s32 %v2693, 104
        %2695 = vset.pattern.permute.xlu0 %v2694
        %2696 = vperm.xlu0 %2695, %v2612
        %v2697 = vpop.permute.xlu0 %2696
        %v2698 = vlaneseq
        %v2699 = vshrl.u32 %v2698, 7
        %v2700 = vadd.s32 %v2699, 112
        %2701 = vset.pattern.permute.xlu0 %v2700
        %2702 = vperm.xlu0 %2701, %v2612
        %v2703 = vpop.permute.xlu0 %2702
        %v2704 = vlaneseq
        %v2705 = vshrl.u32 %v2704, 7
        %v2706 = vadd.s32 %v2705, 120
        %2707 = vset.pattern.permute.xlu0 %v2706
        %2708 = vperm.xlu0 %2707, %v2612
        %v2709 = vpop.permute.xlu0 %2708
        %v2726 = vmul.f32 %v2608, %v2619
        %v2727 = vmul.f32 %v2608, %v2625
        %v2728 = vmul.f32 %v2608, %v2631
        %v2729 = vmul.f32 %v2608, %v2637
        %v2730 = vmul.f32 %v2608, %v2643
        %v2731 = vmul.f32 %v2608, %v2649
        %v2732 = vmul.f32 %v2608, %v2655
        %v2733 = vmul.f32 %v2608, %v2661
        %v2734 = vmul.f32 %v2608, %v2667
        %v2735 = vmul.f32 %v2608, %v2673
        %v2736 = vmul.f32 %v2608, %v2679
        %v2737 = vmul.f32 %v2608, %v2685
        %v2738 = vmul.f32 %v2608, %v2691
        %v2739 = vmul.f32 %v2608, %v2697
        %v2740 = vmul.f32 %v2608, %v2703
        %v2741 = vmul.f32 %v2608, %v2709
        %v2742 = vmul.f32 %v2609, %v2619
        %v2743 = vmul.f32 %v2609, %v2625
        %v2744 = vmul.f32 %v2609, %v2631
        %v2745 = vmul.f32 %v2609, %v2637
        %v2746 = vmul.f32 %v2609, %v2643
        %v2747 = vmul.f32 %v2609, %v2649
        %v2748 = vmul.f32 %v2609, %v2655
        %v2749 = vmul.f32 %v2609, %v2661
        %v2750 = vmul.f32 %v2609, %v2667
        %v2751 = vmul.f32 %v2609, %v2673
        %v2752 = vmul.f32 %v2609, %v2679
        %v2753 = vmul.f32 %v2609, %v2685
        %v2754 = vmul.f32 %v2609, %v2691
        %v2755 = vmul.f32 %v2609, %v2697
        %v2756 = vmul.f32 %v2609, %v2703
        %v2757 = vmul.f32 %v2609, %v2709
        %v2758 = vmul.f32 %v2610, %v2619
        %v2759 = vmul.f32 %v2610, %v2625
        %v2760 = vmul.f32 %v2610, %v2631
        %v2761 = vmul.f32 %v2610, %v2637
        %v2762 = vmul.f32 %v2610, %v2643
        %v2763 = vmul.f32 %v2610, %v2649
        %v2764 = vmul.f32 %v2610, %v2655
        %v2765 = vmul.f32 %v2610, %v2661
        %v2766 = vmul.f32 %v2610, %v2667
        %v2767 = vmul.f32 %v2610, %v2673
        %v2768 = vmul.f32 %v2610, %v2679
        %v2769 = vmul.f32 %v2610, %v2685
        %v2770 = vmul.f32 %v2610, %v2691
        %v2771 = vmul.f32 %v2610, %v2697
        %v2772 = vmul.f32 %v2610, %v2703
        %v2773 = vmul.f32 %v2610, %v2709
        %v2774 = vmul.f32 %v2611, %v2619
        %v2775 = vmul.f32 %v2611, %v2625
        %v2776 = vmul.f32 %v2611, %v2631
        %v2777 = vmul.f32 %v2611, %v2637
        %v2778 = vmul.f32 %v2611, %v2643
        %v2779 = vmul.f32 %v2611, %v2649
        %v2780 = vmul.f32 %v2611, %v2655
        %v2781 = vmul.f32 %v2611, %v2661
        %v2782 = vmul.f32 %v2611, %v2667
        %v2783 = vmul.f32 %v2611, %v2673
        %v2784 = vmul.f32 %v2611, %v2679
        %v2785 = vmul.f32 %v2611, %v2685
        %v2786 = vmul.f32 %v2611, %v2691
        %v2787 = vmul.f32 %v2611, %v2697
        %v2788 = vmul.f32 %v2611, %v2703
        %v2789 = vmul.f32 %v2611, %v2709
        %v2790 = vadd.f32 %v2544, %v2726
        %v2791 = vadd.f32 %v2545, %v2727
        %v2792 = vadd.f32 %v2546, %v2728
        %v2793 = vadd.f32 %v2547, %v2729
        %v2794 = vadd.f32 %v2548, %v2730
        %v2795 = vadd.f32 %v2549, %v2731
        %v2796 = vadd.f32 %v2550, %v2732
        %v2797 = vadd.f32 %v2551, %v2733
        %v2798 = vadd.f32 %v2552, %v2734
        %v2799 = vadd.f32 %v2553, %v2735
        %v2800 = vadd.f32 %v2554, %v2736
        %v2801 = vadd.f32 %v2555, %v2737
        %v2802 = vadd.f32 %v2556, %v2738
        %v2803 = vadd.f32 %v2557, %v2739
        %v2804 = vadd.f32 %v2558, %v2740
        %v2805 = vadd.f32 %v2559, %v2741
        %v2806 = vadd.f32 %v2560, %v2742
        %v2807 = vadd.f32 %v2561, %v2743
        %v2808 = vadd.f32 %v2562, %v2744
        %v2809 = vadd.f32 %v2563, %v2745
        %v2810 = vadd.f32 %v2564, %v2746
        %v2811 = vadd.f32 %v2565, %v2747
        %v2812 = vadd.f32 %v2566, %v2748
        %v2813 = vadd.f32 %v2567, %v2749
        %v2814 = vadd.f32 %v2568, %v2750
        %v2815 = vadd.f32 %v2569, %v2751
        %v2816 = vadd.f32 %v2570, %v2752
        %v2817 = vadd.f32 %v2571, %v2753
        %v2818 = vadd.f32 %v2572, %v2754
        %v2819 = vadd.f32 %v2573, %v2755
        %v2820 = vadd.f32 %v2574, %v2756
        %v2821 = vadd.f32 %v2575, %v2757
        %v2822 = vadd.f32 %v2576, %v2758
        %v2823 = vadd.f32 %v2577, %v2759
        %v2824 = vadd.f32 %v2578, %v2760
        %v2825 = vadd.f32 %v2579, %v2761
        %v2826 = vadd.f32 %v2580, %v2762
        %v2827 = vadd.f32 %v2581, %v2763
        %v2828 = vadd.f32 %v2582, %v2764
        %v2829 = vadd.f32 %v2583, %v2765
        %v2830 = vadd.f32 %v2584, %v2766
        %v2831 = vadd.f32 %v2585, %v2767
        %v2832 = vadd.f32 %v2586, %v2768
        %v2833 = vadd.f32 %v2587, %v2769
        %v2834 = vadd.f32 %v2588, %v2770
        %v2835 = vadd.f32 %v2589, %v2771
        %v2836 = vadd.f32 %v2590, %v2772
        %v2837 = vadd.f32 %v2591, %v2773
        %v2838 = vadd.f32 %v2592, %v2774
        %v2839 = vadd.f32 %v2593, %v2775
        %v2840 = vadd.f32 %v2594, %v2776
        %v2841 = vadd.f32 %v2595, %v2777
        %v2842 = vadd.f32 %v2596, %v2778
        %v2843 = vadd.f32 %v2597, %v2779
        %v2844 = vadd.f32 %v2598, %v2780
        %v2845 = vadd.f32 %v2599, %v2781
        %v2846 = vadd.f32 %v2600, %v2782
        %v2847 = vadd.f32 %v2601, %v2783
        %v2848 = vadd.f32 %v2602, %v2784
        %v2849 = vadd.f32 %v2603, %v2785
        %v2850 = vadd.f32 %v2604, %v2786
        %v2851 = vadd.f32 %v2605, %v2787
        %v2852 = vadd.f32 %v2606, %v2788
        %v2853 = vadd.f32 %v2607, %v2789
        %v2854 = vadd.f32 %v2790, %v2822
        %v2855 = vadd.f32 %v2791, %v2823
        %v2856 = vadd.f32 %v2792, %v2824
        %v2857 = vadd.f32 %v2793, %v2825
        %v2858 = vadd.f32 %v2794, %v2826
        %v2859 = vadd.f32 %v2795, %v2827
        %v2860 = vadd.f32 %v2796, %v2828
        %v2861 = vadd.f32 %v2797, %v2829
        %v2862 = vadd.f32 %v2798, %v2830
        %v2863 = vadd.f32 %v2799, %v2831
        %v2864 = vadd.f32 %v2800, %v2832
        %v2865 = vadd.f32 %v2801, %v2833
        %v2866 = vadd.f32 %v2802, %v2834
        %v2867 = vadd.f32 %v2803, %v2835
        %v2868 = vadd.f32 %v2804, %v2836
        %v2869 = vadd.f32 %v2805, %v2837
        %v2870 = vadd.f32 %v2806, %v2838
        %v2871 = vadd.f32 %v2807, %v2839
        %v2872 = vadd.f32 %v2808, %v2840
        %v2873 = vadd.f32 %v2809, %v2841
        %v2874 = vadd.f32 %v2810, %v2842
        %v2875 = vadd.f32 %v2811, %v2843
        %v2876 = vadd.f32 %v2812, %v2844
        %v2877 = vadd.f32 %v2813, %v2845
        %v2878 = vadd.f32 %v2814, %v2846
        %v2879 = vadd.f32 %v2815, %v2847
        %v2880 = vadd.f32 %v2816, %v2848
        %v2881 = vadd.f32 %v2817, %v2849
        %v2882 = vadd.f32 %v2818, %v2850
        %v2883 = vadd.f32 %v2819, %v2851
        %v2884 = vadd.f32 %v2820, %v2852
        %v2885 = vadd.f32 %v2821, %v2853
        %v2886 = vxor.u32 %v2854, 2147483648
        %v2887 = vxor.u32 %v2855, 2147483648
        %v2888 = vxor.u32 %v2856, 2147483648
        %v2889 = vxor.u32 %v2857, 2147483648
        %v2890 = vxor.u32 %v2858, 2147483648
        %v2891 = vxor.u32 %v2859, 2147483648
        %v2892 = vxor.u32 %v2860, 2147483648
        %v2893 = vxor.u32 %v2861, 2147483648
        %v2894 = vxor.u32 %v2862, 2147483648
        %v2895 = vxor.u32 %v2863, 2147483648
        %v2896 = vxor.u32 %v2864, 2147483648
        %v2897 = vxor.u32 %v2865, 2147483648
        %v2898 = vxor.u32 %v2866, 2147483648
        %v2899 = vxor.u32 %v2867, 2147483648
        %v2900 = vxor.u32 %v2868, 2147483648
        %v2901 = vxor.u32 %v2869, 2147483648
        %v2902 = vxor.u32 %v2870, 2147483648
        %v2903 = vxor.u32 %v2871, 2147483648
        %v2904 = vxor.u32 %v2872, 2147483648
        %v2905 = vxor.u32 %v2873, 2147483648
        %v2906 = vxor.u32 %v2874, 2147483648
        %v2907 = vxor.u32 %v2875, 2147483648
        %v2908 = vxor.u32 %v2876, 2147483648
        %v2909 = vxor.u32 %v2877, 2147483648
        %v2910 = vxor.u32 %v2878, 2147483648
        %v2911 = vxor.u32 %v2879, 2147483648
        %v2912 = vxor.u32 %v2880, 2147483648
        %v2913 = vxor.u32 %v2881, 2147483648
        %v2914 = vxor.u32 %v2882, 2147483648
        %v2915 = vxor.u32 %v2883, 2147483648
        %v2916 = vxor.u32 %v2884, 2147483648
        %v2917 = vxor.u32 %v2885, 2147483648
        %v2918 = vmul.f32 %v2886, 1.442695
        %v2919 = vpow.pop %v2918
        %v2920 = vmul.f32 %v2887, 1.442695
        %v2921 = vpow.pop %v2920
        %v2922 = vmul.f32 %v2888, 1.442695
        %v2923 = vpow.pop %v2922
        %v2924 = vmul.f32 %v2889, 1.442695
        %v2925 = vpow.pop %v2924
        %v2926 = vmul.f32 %v2890, 1.442695
        %v2927 = vpow.pop %v2926
        %v2928 = vmul.f32 %v2891, 1.442695
        %v2929 = vpow.pop %v2928
        %v2930 = vmul.f32 %v2892, 1.442695
        %v2931 = vpow.pop %v2930
        %v2932 = vmul.f32 %v2893, 1.442695
        %v2933 = vpow.pop %v2932
        %v2934 = vmul.f32 %v2894, 1.442695
        %v2935 = vpow.pop %v2934
        %v2936 = vmul.f32 %v2895, 1.442695
        %v2937 = vpow.pop %v2936
        %v2938 = vmul.f32 %v2896, 1.442695
        %v2939 = vpow.pop %v2938
        %v2940 = vmul.f32 %v2897, 1.442695
        %v2941 = vpow.pop %v2940
        %v2942 = vmul.f32 %v2898, 1.442695
        %v2943 = vpow.pop %v2942
        %v2944 = vmul.f32 %v2899, 1.442695
        %v2945 = vpow.pop %v2944
        %v2946 = vmul.f32 %v2900, 1.442695
        %v2947 = vpow.pop %v2946
        %v2948 = vmul.f32 %v2901, 1.442695
        %v2949 = vpow.pop %v2948
        %v2950 = vmul.f32 %v2902, 1.442695
        %v2951 = vpow.pop %v2950
        %v2952 = vmul.f32 %v2903, 1.442695
        %v2953 = vpow.pop %v2952
        %v2954 = vmul.f32 %v2904, 1.442695
        %v2955 = vpow.pop %v2954
        %v2956 = vmul.f32 %v2905, 1.442695
        %v2957 = vpow.pop %v2956
        %v2958 = vmul.f32 %v2906, 1.442695
        %v2959 = vpow.pop %v2958
        %v2960 = vmul.f32 %v2907, 1.442695
        %v2961 = vpow.pop %v2960
        %v2962 = vmul.f32 %v2908, 1.442695
        %v2963 = vpow.pop %v2962
        %v2964 = vmul.f32 %v2909, 1.442695
        %v2965 = vpow.pop %v2964
        %v2966 = vmul.f32 %v2910, 1.442695
        %v2967 = vpow.pop %v2966
        %v2968 = vmul.f32 %v2911, 1.442695
        %v2969 = vpow.pop %v2968
        %v2970 = vmul.f32 %v2912, 1.442695
        %v2971 = vpow.pop %v2970
        %v2972 = vmul.f32 %v2913, 1.442695
        %v2973 = vpow.pop %v2972
        %v2974 = vmul.f32 %v2914, 1.442695
        %v2975 = vpow.pop %v2974
        %v2976 = vmul.f32 %v2915, 1.442695
        %v2977 = vpow.pop %v2976
        %v2978 = vmul.f32 %v2916, 1.442695
        %v2979 = vpow.pop %v2978
        %v2980 = vmul.f32 %v2917, 1.442695
        %v2981 = vpow.pop %v2980
        %v2982 = vadd.f32 %v2919, 1.0
        %v2983 = vadd.f32 %v2921, 1.0
        %v2984 = vadd.f32 %v2923, 1.0
        %v2985 = vadd.f32 %v2925, 1.0
        %v2986 = vadd.f32 %v2927, 1.0
        %v2987 = vadd.f32 %v2929, 1.0
        %v2988 = vadd.f32 %v2931, 1.0
        %v2989 = vadd.f32 %v2933, 1.0
        %v2990 = vadd.f32 %v2935, 1.0
        %v2991 = vadd.f32 %v2937, 1.0
        %v2992 = vadd.f32 %v2939, 1.0
        %v2993 = vadd.f32 %v2941, 1.0
        %v2994 = vadd.f32 %v2943, 1.0
        %v2995 = vadd.f32 %v2945, 1.0
        %v2996 = vadd.f32 %v2947, 1.0
        %v2997 = vadd.f32 %v2949, 1.0
        %v2998 = vadd.f32 %v2951, 1.0
        %v2999 = vadd.f32 %v2953, 1.0
        %v3000 = vadd.f32 %v2955, 1.0
        %v3001 = vadd.f32 %v2957, 1.0
        %v3002 = vadd.f32 %v2959, 1.0
        %v3003 = vadd.f32 %v2961, 1.0
        %v3004 = vadd.f32 %v2963, 1.0
        %v3005 = vadd.f32 %v2965, 1.0
        %v3006 = vadd.f32 %v2967, 1.0
        %v3007 = vadd.f32 %v2969, 1.0
        %v3008 = vadd.f32 %v2971, 1.0
        %v3009 = vadd.f32 %v2973, 1.0
        %v3010 = vadd.f32 %v2975, 1.0
        %v3011 = vadd.f32 %v2977, 1.0
        %v3012 = vadd.f32 %v2979, 1.0
        %v3013 = vadd.f32 %v2981, 1.0
        %v3014 = vrcp.pop %v2982
        %v3015 = vmul.f32 %v2982, %v3014
        %v3016 = vsub.f32 1.0, %v3015
        %v3017 = vmul.f32 %v3014, %v3016
        %v3018 = vadd.f32 %v3014, %v3017
        %vm3019 = vweird.f32 %v2982
        %vm3020 = vweird.f32 %v3014
        %vm3021 = vmor %vm3019, %vm3020
        %v3022 = vsel %vm3021, %v3014, %v3018
        %v3023 = vand.u32 2147483647, %v2982
        %vm3024 = vcmp.eq.f32.partialorder %v3023, 8.507059e+37
        %v3025 = vand.u32 %v2982, 2147483648
        %v3026 = vor.u32 1.1754944e-38, %v3025
        %v3027 = vsel %vm3024, %v3026, %v3022
        %v3028 = vmul.f32 1.0, %v3027
        %v3029 = vrcp.pop %v2983
        %v3030 = vmul.f32 %v2983, %v3029
        %v3031 = vsub.f32 1.0, %v3030
        %v3032 = vmul.f32 %v3029, %v3031
        %v3033 = vadd.f32 %v3029, %v3032
        %vm3034 = vweird.f32 %v2983
        %vm3035 = vweird.f32 %v3029
        %vm3036 = vmor %vm3034, %vm3035
        %v3037 = vsel %vm3036, %v3029, %v3033
        %v3038 = vand.u32 2147483647, %v2983
        %vm3039 = vcmp.eq.f32.partialorder %v3038, 8.507059e+37
        %v3040 = vand.u32 %v2983, 2147483648
        %v3041 = vor.u32 1.1754944e-38, %v3040
        %v3042 = vsel %vm3039, %v3041, %v3037
        %v3043 = vmul.f32 1.0, %v3042
        %v3044 = vrcp.pop %v2984
        %v3045 = vmul.f32 %v2984, %v3044
        %v3046 = vsub.f32 1.0, %v3045
        %v3047 = vmul.f32 %v3044, %v3046
        %v3048 = vadd.f32 %v3044, %v3047
        %vm3049 = vweird.f32 %v2984
        %vm3050 = vweird.f32 %v3044
        %vm3051 = vmor %vm3049, %vm3050
        %v3052 = vsel %vm3051, %v3044, %v3048
        %v3053 = vand.u32 2147483647, %v2984
        %vm3054 = vcmp.eq.f32.partialorder %v3053, 8.507059e+37
        %v3055 = vand.u32 %v2984, 2147483648
        %v3056 = vor.u32 1.1754944e-38, %v3055
        %v3057 = vsel %vm3054, %v3056, %v3052
        %v3058 = vmul.f32 1.0, %v3057
        %v3059 = vrcp.pop %v2985
        %v3060 = vmul.f32 %v2985, %v3059
        %v3061 = vsub.f32 1.0, %v3060
        %v3062 = vmul.f32 %v3059, %v3061
        %v3063 = vadd.f32 %v3059, %v3062
        %vm3064 = vweird.f32 %v2985
        %vm3065 = vweird.f32 %v3059
        %vm3066 = vmor %vm3064, %vm3065
        %v3067 = vsel %vm3066, %v3059, %v3063
        %v3068 = vand.u32 2147483647, %v2985
        %vm3069 = vcmp.eq.f32.partialorder %v3068, 8.507059e+37
        %v3070 = vand.u32 %v2985, 2147483648
        %v3071 = vor.u32 1.1754944e-38, %v3070
        %v3072 = vsel %vm3069, %v3071, %v3067
        %v3073 = vmul.f32 1.0, %v3072
        %v3074 = vrcp.pop %v2986
        %v3075 = vmul.f32 %v2986, %v3074
        %v3076 = vsub.f32 1.0, %v3075
        %v3077 = vmul.f32 %v3074, %v3076
        %v3078 = vadd.f32 %v3074, %v3077
        %vm3079 = vweird.f32 %v2986
        %vm3080 = vweird.f32 %v3074
        %vm3081 = vmor %vm3079, %vm3080
        %v3082 = vsel %vm3081, %v3074, %v3078
        %v3083 = vand.u32 2147483647, %v2986
        %vm3084 = vcmp.eq.f32.partialorder %v3083, 8.507059e+37
        %v3085 = vand.u32 %v2986, 2147483648
        %v3086 = vor.u32 1.1754944e-38, %v3085
        %v3087 = vsel %vm3084, %v3086, %v3082
        %v3088 = vmul.f32 1.0, %v3087
        %v3089 = vrcp.pop %v2987
        %v3090 = vmul.f32 %v2987, %v3089
        %v3091 = vsub.f32 1.0, %v3090
        %v3092 = vmul.f32 %v3089, %v3091
        %v3093 = vadd.f32 %v3089, %v3092
        %vm3094 = vweird.f32 %v2987
        %vm3095 = vweird.f32 %v3089
        %vm3096 = vmor %vm3094, %vm3095
        %v3097 = vsel %vm3096, %v3089, %v3093
        %v3098 = vand.u32 2147483647, %v2987
        %vm3099 = vcmp.eq.f32.partialorder %v3098, 8.507059e+37
        %v3100 = vand.u32 %v2987, 2147483648
        %v3101 = vor.u32 1.1754944e-38, %v3100
        %v3102 = vsel %vm3099, %v3101, %v3097
        %v3103 = vmul.f32 1.0, %v3102
        %v3104 = vrcp.pop %v2988
        %v3105 = vmul.f32 %v2988, %v3104
        %v3106 = vsub.f32 1.0, %v3105
        %v3107 = vmul.f32 %v3104, %v3106
        %v3108 = vadd.f32 %v3104, %v3107
        %vm3109 = vweird.f32 %v2988
        %vm3110 = vweird.f32 %v3104
        %vm3111 = vmor %vm3109, %vm3110
        %v3112 = vsel %vm3111, %v3104, %v3108
        %v3113 = vand.u32 2147483647, %v2988
        %vm3114 = vcmp.eq.f32.partialorder %v3113, 8.507059e+37
        %v3115 = vand.u32 %v2988, 2147483648
        %v3116 = vor.u32 1.1754944e-38, %v3115
        %v3117 = vsel %vm3114, %v3116, %v3112
        %v3118 = vmul.f32 1.0, %v3117
        %v3119 = vrcp.pop %v2989
        %v3120 = vmul.f32 %v2989, %v3119
        %v3121 = vsub.f32 1.0, %v3120
        %v3122 = vmul.f32 %v3119, %v3121
        %v3123 = vadd.f32 %v3119, %v3122
        %vm3124 = vweird.f32 %v2989
        %vm3125 = vweird.f32 %v3119
        %vm3126 = vmor %vm3124, %vm3125
        %v3127 = vsel %vm3126, %v3119, %v3123
        %v3128 = vand.u32 2147483647, %v2989
        %vm3129 = vcmp.eq.f32.partialorder %v3128, 8.507059e+37
        %v3130 = vand.u32 %v2989, 2147483648
        %v3131 = vor.u32 1.1754944e-38, %v3130
        %v3132 = vsel %vm3129, %v3131, %v3127
        %v3133 = vmul.f32 1.0, %v3132
        %v3134 = vrcp.pop %v2990
        %v3135 = vmul.f32 %v2990, %v3134
        %v3136 = vsub.f32 1.0, %v3135
        %v3137 = vmul.f32 %v3134, %v3136
        %v3138 = vadd.f32 %v3134, %v3137
        %vm3139 = vweird.f32 %v2990
        %vm3140 = vweird.f32 %v3134
        %vm3141 = vmor %vm3139, %vm3140
        %v3142 = vsel %vm3141, %v3134, %v3138
        %v3143 = vand.u32 2147483647, %v2990
        %vm3144 = vcmp.eq.f32.partialorder %v3143, 8.507059e+37
        %v3145 = vand.u32 %v2990, 2147483648
        %v3146 = vor.u32 1.1754944e-38, %v3145
        %v3147 = vsel %vm3144, %v3146, %v3142
        %v3148 = vmul.f32 1.0, %v3147
        %v3149 = vrcp.pop %v2991
        %v3150 = vmul.f32 %v2991, %v3149
        %v3151 = vsub.f32 1.0, %v3150
        %v3152 = vmul.f32 %v3149, %v3151
        %v3153 = vadd.f32 %v3149, %v3152
        %vm3154 = vweird.f32 %v2991
        %vm3155 = vweird.f32 %v3149
        %vm3156 = vmor %vm3154, %vm3155
        %v3157 = vsel %vm3156, %v3149, %v3153
        %v3158 = vand.u32 2147483647, %v2991
        %vm3159 = vcmp.eq.f32.partialorder %v3158, 8.507059e+37
        %v3160 = vand.u32 %v2991, 2147483648
        %v3161 = vor.u32 1.1754944e-38, %v3160
        %v3162 = vsel %vm3159, %v3161, %v3157
        %v3163 = vmul.f32 1.0, %v3162
        %v3164 = vrcp.pop %v2992
        %v3165 = vmul.f32 %v2992, %v3164
        %v3166 = vsub.f32 1.0, %v3165
        %v3167 = vmul.f32 %v3164, %v3166
        %v3168 = vadd.f32 %v3164, %v3167
        %vm3169 = vweird.f32 %v2992
        %vm3170 = vweird.f32 %v3164
        %vm3171 = vmor %vm3169, %vm3170
        %v3172 = vsel %vm3171, %v3164, %v3168
        %v3173 = vand.u32 2147483647, %v2992
        %vm3174 = vcmp.eq.f32.partialorder %v3173, 8.507059e+37
        %v3175 = vand.u32 %v2992, 2147483648
        %v3176 = vor.u32 1.1754944e-38, %v3175
        %v3177 = vsel %vm3174, %v3176, %v3172
        %v3178 = vmul.f32 1.0, %v3177
        %v3179 = vrcp.pop %v2993
        %v3180 = vmul.f32 %v2993, %v3179
        %v3181 = vsub.f32 1.0, %v3180
        %v3182 = vmul.f32 %v3179, %v3181
        %v3183 = vadd.f32 %v3179, %v3182
        %vm3184 = vweird.f32 %v2993
        %vm3185 = vweird.f32 %v3179
        %vm3186 = vmor %vm3184, %vm3185
        %v3187 = vsel %vm3186, %v3179, %v3183
        %v3188 = vand.u32 2147483647, %v2993
        %vm3189 = vcmp.eq.f32.partialorder %v3188, 8.507059e+37
        %v3190 = vand.u32 %v2993, 2147483648
        %v3191 = vor.u32 1.1754944e-38, %v3190
        %v3192 = vsel %vm3189, %v3191, %v3187
        %v3193 = vmul.f32 1.0, %v3192
        %v3194 = vrcp.pop %v2994
        %v3195 = vmul.f32 %v2994, %v3194
        %v3196 = vsub.f32 1.0, %v3195
        %v3197 = vmul.f32 %v3194, %v3196
        %v3198 = vadd.f32 %v3194, %v3197
        %vm3199 = vweird.f32 %v2994
        %vm3200 = vweird.f32 %v3194
        %vm3201 = vmor %vm3199, %vm3200
        %v3202 = vsel %vm3201, %v3194, %v3198
        %v3203 = vand.u32 2147483647, %v2994
        %vm3204 = vcmp.eq.f32.partialorder %v3203, 8.507059e+37
        %v3205 = vand.u32 %v2994, 2147483648
        %v3206 = vor.u32 1.1754944e-38, %v3205
        %v3207 = vsel %vm3204, %v3206, %v3202
        %v3208 = vmul.f32 1.0, %v3207
        %v3209 = vrcp.pop %v2995
        %v3210 = vmul.f32 %v2995, %v3209
        %v3211 = vsub.f32 1.0, %v3210
        %v3212 = vmul.f32 %v3209, %v3211
        %v3213 = vadd.f32 %v3209, %v3212
        %vm3214 = vweird.f32 %v2995
        %vm3215 = vweird.f32 %v3209
        %vm3216 = vmor %vm3214, %vm3215
        %v3217 = vsel %vm3216, %v3209, %v3213
        %v3218 = vand.u32 2147483647, %v2995
        %vm3219 = vcmp.eq.f32.partialorder %v3218, 8.507059e+37
        %v3220 = vand.u32 %v2995, 2147483648
        %v3221 = vor.u32 1.1754944e-38, %v3220
        %v3222 = vsel %vm3219, %v3221, %v3217
        %v3223 = vmul.f32 1.0, %v3222
        %v3224 = vrcp.pop %v2996
        %v3225 = vmul.f32 %v2996, %v3224
        %v3226 = vsub.f32 1.0, %v3225
        %v3227 = vmul.f32 %v3224, %v3226
        %v3228 = vadd.f32 %v3224, %v3227
        %vm3229 = vweird.f32 %v2996
        %vm3230 = vweird.f32 %v3224
        %vm3231 = vmor %vm3229, %vm3230
        %v3232 = vsel %vm3231, %v3224, %v3228
        %v3233 = vand.u32 2147483647, %v2996
        %vm3234 = vcmp.eq.f32.partialorder %v3233, 8.507059e+37
        %v3235 = vand.u32 %v2996, 2147483648
        %v3236 = vor.u32 1.1754944e-38, %v3235
        %v3237 = vsel %vm3234, %v3236, %v3232
        %v3238 = vmul.f32 1.0, %v3237
        %v3239 = vrcp.pop %v2997
        %v3240 = vmul.f32 %v2997, %v3239
        %v3241 = vsub.f32 1.0, %v3240
        %v3242 = vmul.f32 %v3239, %v3241
        %v3243 = vadd.f32 %v3239, %v3242
        %vm3244 = vweird.f32 %v2997
        %vm3245 = vweird.f32 %v3239
        %vm3246 = vmor %vm3244, %vm3245
        %v3247 = vsel %vm3246, %v3239, %v3243
        %v3248 = vand.u32 2147483647, %v2997
        %vm3249 = vcmp.eq.f32.partialorder %v3248, 8.507059e+37
        %v3250 = vand.u32 %v2997, 2147483648
        %v3251 = vor.u32 1.1754944e-38, %v3250
        %v3252 = vsel %vm3249, %v3251, %v3247
        %v3253 = vmul.f32 1.0, %v3252
        %v3254 = vrcp.pop %v2998
        %v3255 = vmul.f32 %v2998, %v3254
        %v3256 = vsub.f32 1.0, %v3255
        %v3257 = vmul.f32 %v3254, %v3256
        %v3258 = vadd.f32 %v3254, %v3257
        %vm3259 = vweird.f32 %v2998
        %vm3260 = vweird.f32 %v3254
        %vm3261 = vmor %vm3259, %vm3260
        %v3262 = vsel %vm3261, %v3254, %v3258
        %v3263 = vand.u32 2147483647, %v2998
        %vm3264 = vcmp.eq.f32.partialorder %v3263, 8.507059e+37
        %v3265 = vand.u32 %v2998, 2147483648
        %v3266 = vor.u32 1.1754944e-38, %v3265
        %v3267 = vsel %vm3264, %v3266, %v3262
        %v3268 = vmul.f32 1.0, %v3267
        %v3269 = vrcp.pop %v2999
        %v3270 = vmul.f32 %v2999, %v3269
        %v3271 = vsub.f32 1.0, %v3270
        %v3272 = vmul.f32 %v3269, %v3271
        %v3273 = vadd.f32 %v3269, %v3272
        %vm3274 = vweird.f32 %v2999
        %vm3275 = vweird.f32 %v3269
        %vm3276 = vmor %vm3274, %vm3275
        %v3277 = vsel %vm3276, %v3269, %v3273
        %v3278 = vand.u32 2147483647, %v2999
        %vm3279 = vcmp.eq.f32.partialorder %v3278, 8.507059e+37
        %v3280 = vand.u32 %v2999, 2147483648
        %v3281 = vor.u32 1.1754944e-38, %v3280
        %v3282 = vsel %vm3279, %v3281, %v3277
        %v3283 = vmul.f32 1.0, %v3282
        %v3284 = vrcp.pop %v3000
        %v3285 = vmul.f32 %v3000, %v3284
        %v3286 = vsub.f32 1.0, %v3285
        %v3287 = vmul.f32 %v3284, %v3286
        %v3288 = vadd.f32 %v3284, %v3287
        %vm3289 = vweird.f32 %v3000
        %vm3290 = vweird.f32 %v3284
        %vm3291 = vmor %vm3289, %vm3290
        %v3292 = vsel %vm3291, %v3284, %v3288
        %v3293 = vand.u32 2147483647, %v3000
        %vm3294 = vcmp.eq.f32.partialorder %v3293, 8.507059e+37
        %v3295 = vand.u32 %v3000, 2147483648
        %v3296 = vor.u32 1.1754944e-38, %v3295
        %v3297 = vsel %vm3294, %v3296, %v3292
        %v3298 = vmul.f32 1.0, %v3297
        %v3299 = vrcp.pop %v3001
        %v3300 = vmul.f32 %v3001, %v3299
        %v3301 = vsub.f32 1.0, %v3300
        %v3302 = vmul.f32 %v3299, %v3301
        %v3303 = vadd.f32 %v3299, %v3302
        %vm3304 = vweird.f32 %v3001
        %vm3305 = vweird.f32 %v3299
        %vm3306 = vmor %vm3304, %vm3305
        %v3307 = vsel %vm3306, %v3299, %v3303
        %v3308 = vand.u32 2147483647, %v3001
        %vm3309 = vcmp.eq.f32.partialorder %v3308, 8.507059e+37
        %v3310 = vand.u32 %v3001, 2147483648
        %v3311 = vor.u32 1.1754944e-38, %v3310
        %v3312 = vsel %vm3309, %v3311, %v3307
        %v3313 = vmul.f32 1.0, %v3312
        %v3314 = vrcp.pop %v3002
        %v3315 = vmul.f32 %v3002, %v3314
        %v3316 = vsub.f32 1.0, %v3315
        %v3317 = vmul.f32 %v3314, %v3316
        %v3318 = vadd.f32 %v3314, %v3317
        %vm3319 = vweird.f32 %v3002
        %vm3320 = vweird.f32 %v3314
        %vm3321 = vmor %vm3319, %vm3320
        %v3322 = vsel %vm3321, %v3314, %v3318
        %v3323 = vand.u32 2147483647, %v3002
        %vm3324 = vcmp.eq.f32.partialorder %v3323, 8.507059e+37
        %v3325 = vand.u32 %v3002, 2147483648
        %v3326 = vor.u32 1.1754944e-38, %v3325
        %v3327 = vsel %vm3324, %v3326, %v3322
        %v3328 = vmul.f32 1.0, %v3327
        %v3329 = vrcp.pop %v3003
        %v3330 = vmul.f32 %v3003, %v3329
        %v3331 = vsub.f32 1.0, %v3330
        %v3332 = vmul.f32 %v3329, %v3331
        %v3333 = vadd.f32 %v3329, %v3332
        %vm3334 = vweird.f32 %v3003
        %vm3335 = vweird.f32 %v3329
        %vm3336 = vmor %vm3334, %vm3335
        %v3337 = vsel %vm3336, %v3329, %v3333
        %v3338 = vand.u32 2147483647, %v3003
        %vm3339 = vcmp.eq.f32.partialorder %v3338, 8.507059e+37
        %v3340 = vand.u32 %v3003, 2147483648
        %v3341 = vor.u32 1.1754944e-38, %v3340
        %v3342 = vsel %vm3339, %v3341, %v3337
        %v3343 = vmul.f32 1.0, %v3342
        %v3344 = vrcp.pop %v3004
        %v3345 = vmul.f32 %v3004, %v3344
        %v3346 = vsub.f32 1.0, %v3345
        %v3347 = vmul.f32 %v3344, %v3346
        %v3348 = vadd.f32 %v3344, %v3347
        %vm3349 = vweird.f32 %v3004
        %vm3350 = vweird.f32 %v3344
        %vm3351 = vmor %vm3349, %vm3350
        %v3352 = vsel %vm3351, %v3344, %v3348
        %v3353 = vand.u32 2147483647, %v3004
        %vm3354 = vcmp.eq.f32.partialorder %v3353, 8.507059e+37
        %v3355 = vand.u32 %v3004, 2147483648
        %v3356 = vor.u32 1.1754944e-38, %v3355
        %v3357 = vsel %vm3354, %v3356, %v3352
        %v3358 = vmul.f32 1.0, %v3357
        %v3359 = vrcp.pop %v3005
        %v3360 = vmul.f32 %v3005, %v3359
        %v3361 = vsub.f32 1.0, %v3360
        %v3362 = vmul.f32 %v3359, %v3361
        %v3363 = vadd.f32 %v3359, %v3362
        %vm3364 = vweird.f32 %v3005
        %vm3365 = vweird.f32 %v3359
        %vm3366 = vmor %vm3364, %vm3365
        %v3367 = vsel %vm3366, %v3359, %v3363
        %v3368 = vand.u32 2147483647, %v3005
        %vm3369 = vcmp.eq.f32.partialorder %v3368, 8.507059e+37
        %v3370 = vand.u32 %v3005, 2147483648
        %v3371 = vor.u32 1.1754944e-38, %v3370
        %v3372 = vsel %vm3369, %v3371, %v3367
        %v3373 = vmul.f32 1.0, %v3372
        %v3374 = vrcp.pop %v3006
        %v3375 = vmul.f32 %v3006, %v3374
        %v3376 = vsub.f32 1.0, %v3375
        %v3377 = vmul.f32 %v3374, %v3376
        %v3378 = vadd.f32 %v3374, %v3377
        %vm3379 = vweird.f32 %v3006
        %vm3380 = vweird.f32 %v3374
        %vm3381 = vmor %vm3379, %vm3380
        %v3382 = vsel %vm3381, %v3374, %v3378
        %v3383 = vand.u32 2147483647, %v3006
        %vm3384 = vcmp.eq.f32.partialorder %v3383, 8.507059e+37
        %v3385 = vand.u32 %v3006, 2147483648
        %v3386 = vor.u32 1.1754944e-38, %v3385
        %v3387 = vsel %vm3384, %v3386, %v3382
        %v3388 = vmul.f32 1.0, %v3387
        %v3389 = vrcp.pop %v3007
        %v3390 = vmul.f32 %v3007, %v3389
        %v3391 = vsub.f32 1.0, %v3390
        %v3392 = vmul.f32 %v3389, %v3391
        %v3393 = vadd.f32 %v3389, %v3392
        %vm3394 = vweird.f32 %v3007
        %vm3395 = vweird.f32 %v3389
        %vm3396 = vmor %vm3394, %vm3395
        %v3397 = vsel %vm3396, %v3389, %v3393
        %v3398 = vand.u32 2147483647, %v3007
        %vm3399 = vcmp.eq.f32.partialorder %v3398, 8.507059e+37
        %v3400 = vand.u32 %v3007, 2147483648
        %v3401 = vor.u32 1.1754944e-38, %v3400
        %v3402 = vsel %vm3399, %v3401, %v3397
        %v3403 = vmul.f32 1.0, %v3402
        %v3404 = vrcp.pop %v3008
        %v3405 = vmul.f32 %v3008, %v3404
        %v3406 = vsub.f32 1.0, %v3405
        %v3407 = vmul.f32 %v3404, %v3406
        %v3408 = vadd.f32 %v3404, %v3407
        %vm3409 = vweird.f32 %v3008
        %vm3410 = vweird.f32 %v3404
        %vm3411 = vmor %vm3409, %vm3410
        %v3412 = vsel %vm3411, %v3404, %v3408
        %v3413 = vand.u32 2147483647, %v3008
        %vm3414 = vcmp.eq.f32.partialorder %v3413, 8.507059e+37
        %v3415 = vand.u32 %v3008, 2147483648
        %v3416 = vor.u32 1.1754944e-38, %v3415
        %v3417 = vsel %vm3414, %v3416, %v3412
        %v3418 = vmul.f32 1.0, %v3417
        %v3419 = vrcp.pop %v3009
        %v3420 = vmul.f32 %v3009, %v3419
        %v3421 = vsub.f32 1.0, %v3420
        %v3422 = vmul.f32 %v3419, %v3421
        %v3423 = vadd.f32 %v3419, %v3422
        %vm3424 = vweird.f32 %v3009
        %vm3425 = vweird.f32 %v3419
        %vm3426 = vmor %vm3424, %vm3425
        %v3427 = vsel %vm3426, %v3419, %v3423
        %v3428 = vand.u32 2147483647, %v3009
        %vm3429 = vcmp.eq.f32.partialorder %v3428, 8.507059e+37
        %v3430 = vand.u32 %v3009, 2147483648
        %v3431 = vor.u32 1.1754944e-38, %v3430
        %v3432 = vsel %vm3429, %v3431, %v3427
        %v3433 = vmul.f32 1.0, %v3432
        %v3434 = vrcp.pop %v3010
        %v3435 = vmul.f32 %v3010, %v3434
        %v3436 = vsub.f32 1.0, %v3435
        %v3437 = vmul.f32 %v3434, %v3436
        %v3438 = vadd.f32 %v3434, %v3437
        %vm3439 = vweird.f32 %v3010
        %vm3440 = vweird.f32 %v3434
        %vm3441 = vmor %vm3439, %vm3440
        %v3442 = vsel %vm3441, %v3434, %v3438
        %v3443 = vand.u32 2147483647, %v3010
        %vm3444 = vcmp.eq.f32.partialorder %v3443, 8.507059e+37
        %v3445 = vand.u32 %v3010, 2147483648
        %v3446 = vor.u32 1.1754944e-38, %v3445
        %v3447 = vsel %vm3444, %v3446, %v3442
        %v3448 = vmul.f32 1.0, %v3447
        %v3449 = vrcp.pop %v3011
        %v3450 = vmul.f32 %v3011, %v3449
        %v3451 = vsub.f32 1.0, %v3450
        %v3452 = vmul.f32 %v3449, %v3451
        %v3453 = vadd.f32 %v3449, %v3452
        %vm3454 = vweird.f32 %v3011
        %vm3455 = vweird.f32 %v3449
        %vm3456 = vmor %vm3454, %vm3455
        %v3457 = vsel %vm3456, %v3449, %v3453
        %v3458 = vand.u32 2147483647, %v3011
        %vm3459 = vcmp.eq.f32.partialorder %v3458, 8.507059e+37
        %v3460 = vand.u32 %v3011, 2147483648
        %v3461 = vor.u32 1.1754944e-38, %v3460
        %v3462 = vsel %vm3459, %v3461, %v3457
        %v3463 = vmul.f32 1.0, %v3462
        %v3464 = vrcp.pop %v3012
        %v3465 = vmul.f32 %v3012, %v3464
        %v3466 = vsub.f32 1.0, %v3465
        %v3467 = vmul.f32 %v3464, %v3466
        %v3468 = vadd.f32 %v3464, %v3467
        %vm3469 = vweird.f32 %v3012
        %vm3470 = vweird.f32 %v3464
        %vm3471 = vmor %vm3469, %vm3470
        %v3472 = vsel %vm3471, %v3464, %v3468
        %v3473 = vand.u32 2147483647, %v3012
        %vm3474 = vcmp.eq.f32.partialorder %v3473, 8.507059e+37
        %v3475 = vand.u32 %v3012, 2147483648
        %v3476 = vor.u32 1.1754944e-38, %v3475
        %v3477 = vsel %vm3474, %v3476, %v3472
        %v3478 = vmul.f32 1.0, %v3477
        %v3479 = vrcp.pop %v3013
        %v3480 = vmul.f32 %v3013, %v3479
        %v3481 = vsub.f32 1.0, %v3480
        %v3482 = vmul.f32 %v3479, %v3481
        %v3483 = vadd.f32 %v3479, %v3482
        %vm3484 = vweird.f32 %v3013
        %vm3485 = vweird.f32 %v3479
        %vm3486 = vmor %vm3484, %vm3485
        %v3487 = vsel %vm3486, %v3479, %v3483
        %v3488 = vand.u32 2147483647, %v3013
        %vm3489 = vcmp.eq.f32.partialorder %v3488, 8.507059e+37
        %v3490 = vand.u32 %v3013, 2147483648
        %v3491 = vor.u32 1.1754944e-38, %v3490
        %v3492 = vsel %vm3489, %v3491, %v3487
        %v3493 = vmul.f32 1.0, %v3492
        %3495 = vset.pattern.permute.xlu0 0
        %3496 = vperm.xlu0 %3495, %v3028
        %v3497 = vpop.permute.xlu0 %3496
        %3500 = vset.pattern.permute.xlu0 0
        %3501 = vperm.xlu0 %3500, %v3043
        %v3502 = vpop.permute.xlu0 %3501
        %3505 = vset.pattern.permute.xlu0 0
        %3506 = vperm.xlu0 %3505, %v3058
        %v3507 = vpop.permute.xlu0 %3506
        %3510 = vset.pattern.permute.xlu0 0
        %3511 = vperm.xlu0 %3510, %v3073
        %v3512 = vpop.permute.xlu0 %3511
        %3515 = vset.pattern.permute.xlu0 0
        %3516 = vperm.xlu0 %3515, %v3088
        %v3517 = vpop.permute.xlu0 %3516
        %3520 = vset.pattern.permute.xlu0 0
        %3521 = vperm.xlu0 %3520, %v3103
        %v3522 = vpop.permute.xlu0 %3521
        %3525 = vset.pattern.permute.xlu0 0
        %3526 = vperm.xlu0 %3525, %v3118
        %v3527 = vpop.permute.xlu0 %3526
        %3530 = vset.pattern.permute.xlu0 0
        %3531 = vperm.xlu0 %3530, %v3133
        %v3532 = vpop.permute.xlu0 %3531
        %3535 = vset.pattern.permute.xlu0 0
        %3536 = vperm.xlu0 %3535, %v3148
        %v3537 = vpop.permute.xlu0 %3536
        %3540 = vset.pattern.permute.xlu0 0
        %3541 = vperm.xlu0 %3540, %v3163
        %v3542 = vpop.permute.xlu0 %3541
        %3545 = vset.pattern.permute.xlu0 0
        %3546 = vperm.xlu0 %3545, %v3178
        %v3547 = vpop.permute.xlu0 %3546
        %3550 = vset.pattern.permute.xlu0 0
        %3551 = vperm.xlu0 %3550, %v3193
        %v3552 = vpop.permute.xlu0 %3551
        %3555 = vset.pattern.permute.xlu0 0
        %3556 = vperm.xlu0 %3555, %v3208
        %v3557 = vpop.permute.xlu0 %3556
        %3560 = vset.pattern.permute.xlu0 0
        %3561 = vperm.xlu0 %3560, %v3223
        %v3562 = vpop.permute.xlu0 %3561
        %3565 = vset.pattern.permute.xlu0 0
        %3566 = vperm.xlu0 %3565, %v3238
        %v3567 = vpop.permute.xlu0 %3566
        %3570 = vset.pattern.permute.xlu0 0
        %3571 = vperm.xlu0 %3570, %v3253
        %v3572 = vpop.permute.xlu0 %3571
        %3575 = vset.pattern.permute.xlu0 0
        %3576 = vperm.xlu0 %3575, %v3268
        %v3577 = vpop.permute.xlu0 %3576
        %3580 = vset.pattern.permute.xlu0 0
        %3581 = vperm.xlu0 %3580, %v3283
        %v3582 = vpop.permute.xlu0 %3581
        %3585 = vset.pattern.permute.xlu0 0
        %3586 = vperm.xlu0 %3585, %v3298
        %v3587 = vpop.permute.xlu0 %3586
        %3590 = vset.pattern.permute.xlu0 0
        %3591 = vperm.xlu0 %3590, %v3313
        %v3592 = vpop.permute.xlu0 %3591
        %3595 = vset.pattern.permute.xlu0 0
        %3596 = vperm.xlu0 %3595, %v3328
        %v3597 = vpop.permute.xlu0 %3596
        %3600 = vset.pattern.permute.xlu0 0
        %3601 = vperm.xlu0 %3600, %v3343
        %v3602 = vpop.permute.xlu0 %3601
        %3605 = vset.pattern.permute.xlu0 0
        %3606 = vperm.xlu0 %3605, %v3358
        %v3607 = vpop.permute.xlu0 %3606
        %3610 = vset.pattern.permute.xlu0 0
        %3611 = vperm.xlu0 %3610, %v3373
        %v3612 = vpop.permute.xlu0 %3611
        %3615 = vset.pattern.permute.xlu0 0
        %3616 = vperm.xlu0 %3615, %v3388
        %v3617 = vpop.permute.xlu0 %3616
        %3620 = vset.pattern.permute.xlu0 0
        %3621 = vperm.xlu0 %3620, %v3403
        %v3622 = vpop.permute.xlu0 %3621
        %3625 = vset.pattern.permute.xlu0 0
        %3626 = vperm.xlu0 %3625, %v3418
        %v3627 = vpop.permute.xlu0 %3626
        %3630 = vset.pattern.permute.xlu0 0
        %3631 = vperm.xlu0 %3630, %v3433
        %v3632 = vpop.permute.xlu0 %3631
        %3635 = vset.pattern.permute.xlu0 0
        %3636 = vperm.xlu0 %3635, %v3448
        %v3637 = vpop.permute.xlu0 %3636
        %3640 = vset.pattern.permute.xlu0 0
        %3641 = vperm.xlu0 %3640, %v3463
        %v3642 = vpop.permute.xlu0 %3641
        %3645 = vset.pattern.permute.xlu0 0
        %3646 = vperm.xlu0 %3645, %v3478
        %v3647 = vpop.permute.xlu0 %3646
        %3650 = vset.pattern.permute.xlu0 0
        %3651 = vperm.xlu0 %3650, %v3493
        %v3652 = vpop.permute.xlu0 %3651
        %v3654 = vmul.f32 %v264, %v3497
        %v3655 = vmul.f32 %v265, %v3497
        %v3656 = vmul.f32 %v266, %v3502
        %v3657 = vmul.f32 %v267, %v3502
        %v3658 = vmul.f32 %v268, %v3507
        %v3659 = vmul.f32 %v269, %v3507
        %v3660 = vmul.f32 %v270, %v3512
        %v3661 = vmul.f32 %v271, %v3512
        %v3662 = vmul.f32 %v272, %v3517
        %v3663 = vmul.f32 %v273, %v3517
        %v3664 = vmul.f32 %v274, %v3522
        %v3665 = vmul.f32 %v275, %v3522
        %v3666 = vmul.f32 %v276, %v3527
        %v3667 = vmul.f32 %v277, %v3527
        %v3668 = vmul.f32 %v278, %v3532
        %v3669 = vmul.f32 %v279, %v3532
        %v3670 = vmul.f32 %v280, %v3537
        %v3671 = vmul.f32 %v281, %v3537
        %v3672 = vmul.f32 %v282, %v3542
        %v3673 = vmul.f32 %v283, %v3542
        %v3674 = vmul.f32 %v284, %v3547
        %v3675 = vmul.f32 %v285, %v3547
        %v3676 = vmul.f32 %v286, %v3552
        %v3677 = vmul.f32 %v287, %v3552
        %v3678 = vmul.f32 %v288, %v3557
        %v3679 = vmul.f32 %v289, %v3557
        %v3680 = vmul.f32 %v290, %v3562
        %v3681 = vmul.f32 %v291, %v3562
        %v3682 = vmul.f32 %v292, %v3567
        %v3683 = vmul.f32 %v293, %v3567
        %v3684 = vmul.f32 %v294, %v3572
        %v3685 = vmul.f32 %v295, %v3572
        %v3686 = vmul.f32 %v296, %v3577
        %v3687 = vmul.f32 %v297, %v3577
        %v3688 = vmul.f32 %v298, %v3582
        %v3689 = vmul.f32 %v299, %v3582
        %v3690 = vmul.f32 %v300, %v3587
        %v3691 = vmul.f32 %v301, %v3587
        %v3692 = vmul.f32 %v302, %v3592
        %v3693 = vmul.f32 %v303, %v3592
        %v3694 = vmul.f32 %v304, %v3597
        %v3695 = vmul.f32 %v305, %v3597
        %v3696 = vmul.f32 %v306, %v3602
        %v3697 = vmul.f32 %v307, %v3602
        %v3698 = vmul.f32 %v308, %v3607
        %v3699 = vmul.f32 %v309, %v3607
        %v3700 = vmul.f32 %v310, %v3612
        %v3701 = vmul.f32 %v311, %v3612
        %v3702 = vmul.f32 %v312, %v3617
        %v3703 = vmul.f32 %v313, %v3617
        %v3704 = vmul.f32 %v314, %v3622
        %v3705 = vmul.f32 %v315, %v3622
        %v3706 = vmul.f32 %v316, %v3627
        %v3707 = vmul.f32 %v317, %v3627
        %v3708 = vmul.f32 %v318, %v3632
        %v3709 = vmul.f32 %v319, %v3632
        %v3710 = vmul.f32 %v320, %v3637
        %v3711 = vmul.f32 %v321, %v3637
        %v3712 = vmul.f32 %v322, %v3642
        %v3713 = vmul.f32 %v323, %v3642
        %v3714 = vmul.f32 %v324, %v3647
        %v3715 = vmul.f32 %v325, %v3647
        %v3716 = vmul.f32 %v326, %v3652
        %v3717 = vmul.f32 %v327, %v3652
        %v3718 = vmax.f32 %v3654, %v3656
        %v3719 = vmax.f32 %v3718, %v3658
        %v3720 = vmax.f32 %v3719, %v3660
        %v3721 = vmax.f32 %v3720, %v3662
        %v3722 = vmax.f32 %v3721, %v3664
        %v3723 = vmax.f32 %v3722, %v3666
        %v3724 = vmax.f32 %v3723, %v3668
        %v3725 = vmax.f32 %v3724, %v3670
        %v3726 = vmax.f32 %v3725, %v3672
        %v3727 = vmax.f32 %v3726, %v3674
        %v3728 = vmax.f32 %v3727, %v3676
        %v3729 = vmax.f32 %v3728, %v3678
        %v3730 = vmax.f32 %v3729, %v3680
        %v3731 = vmax.f32 %v3730, %v3682
        %v3732 = vmax.f32 %v3731, %v3684
        %v3733 = vrot.slane %v3732, 4
        %v3734 = vmax.f32 %v3732, %v3733
        %v3735 = vrot.slane %v3734, 2
        %v3736 = vmax.f32 %v3734, %v3735
        %v3737 = vrot.slane %v3736, 1
        %v3738 = vmax.f32 %v3736, %v3737
        %v3739 = vmax.f32 %v3655, %v3657
        %v3740 = vmax.f32 %v3739, %v3659
        %v3741 = vmax.f32 %v3740, %v3661
        %v3742 = vmax.f32 %v3741, %v3663
        %v3743 = vmax.f32 %v3742, %v3665
        %v3744 = vmax.f32 %v3743, %v3667
        %v3745 = vmax.f32 %v3744, %v3669
        %v3746 = vmax.f32 %v3745, %v3671
        %v3747 = vmax.f32 %v3746, %v3673
        %v3748 = vmax.f32 %v3747, %v3675
        %v3749 = vmax.f32 %v3748, %v3677
        %v3750 = vmax.f32 %v3749, %v3679
        %v3751 = vmax.f32 %v3750, %v3681
        %v3752 = vmax.f32 %v3751, %v3683
        %v3753 = vmax.f32 %v3752, %v3685
        %v3754 = vrot.slane %v3753, 4
        %v3755 = vmax.f32 %v3753, %v3754
        %v3756 = vrot.slane %v3755, 2
        %v3757 = vmax.f32 %v3755, %v3756
        %v3758 = vrot.slane %v3757, 1
        %v3759 = vmax.f32 %v3757, %v3758
        %v3760 = vmax.f32 %v3686, %v3688
        %v3761 = vmax.f32 %v3760, %v3690
        %v3762 = vmax.f32 %v3761, %v3692
        %v3763 = vmax.f32 %v3762, %v3694
        %v3764 = vmax.f32 %v3763, %v3696
        %v3765 = vmax.f32 %v3764, %v3698
        %v3766 = vmax.f32 %v3765, %v3700
        %v3767 = vmax.f32 %v3766, %v3702
        %v3768 = vmax.f32 %v3767, %v3704
        %v3769 = vmax.f32 %v3768, %v3706
        %v3770 = vmax.f32 %v3769, %v3708
        %v3771 = vmax.f32 %v3770, %v3710
        %v3772 = vmax.f32 %v3771, %v3712
        %v3773 = vmax.f32 %v3772, %v3714
        %v3774 = vmax.f32 %v3773, %v3716
        %v3775 = vrot.slane %v3774, 4
        %v3776 = vmax.f32 %v3774, %v3775
        %v3777 = vrot.slane %v3776, 2
        %v3778 = vmax.f32 %v3776, %v3777
        %v3779 = vrot.slane %v3778, 1
        %v3780 = vmax.f32 %v3778, %v3779
        %v3781 = vmax.f32 %v3687, %v3689
        %v3782 = vmax.f32 %v3781, %v3691
        %v3783 = vmax.f32 %v3782, %v3693
        %v3784 = vmax.f32 %v3783, %v3695
        %v3785 = vmax.f32 %v3784, %v3697
        %v3786 = vmax.f32 %v3785, %v3699
        %v3787 = vmax.f32 %v3786, %v3701
        %v3788 = vmax.f32 %v3787, %v3703
        %v3789 = vmax.f32 %v3788, %v3705
        %v3790 = vmax.f32 %v3789, %v3707
        %v3791 = vmax.f32 %v3790, %v3709
        %v3792 = vmax.f32 %v3791, %v3711
        %v3793 = vmax.f32 %v3792, %v3713
        %v3794 = vmax.f32 %v3793, %v3715
        %v3795 = vmax.f32 %v3794, %v3717
        %v3796 = vrot.slane %v3795, 4
        %v3797 = vmax.f32 %v3795, %v3796
        %v3798 = vrot.slane %v3797, 2
        %v3799 = vmax.f32 %v3797, %v3798
        %v3800 = vrot.slane %v3799, 1
        %v3801 = vmax.f32 %v3799, %v3800
        %v3802 = vadd.f32 %v3654, %v3656
        %v3803 = vadd.f32 %v3802, %v3658
        %v3804 = vadd.f32 %v3803, %v3660
        %v3805 = vadd.f32 %v3804, %v3662
        %v3806 = vadd.f32 %v3805, %v3664
        %v3807 = vadd.f32 %v3806, %v3666
        %v3808 = vadd.f32 %v3807, %v3668
        %v3809 = vadd.f32 %v3808, %v3670
        %v3810 = vadd.f32 %v3809, %v3672
        %v3811 = vadd.f32 %v3810, %v3674
        %v3812 = vadd.f32 %v3811, %v3676
        %v3813 = vadd.f32 %v3812, %v3678
        %v3814 = vadd.f32 %v3813, %v3680
        %v3815 = vadd.f32 %v3814, %v3682
        %v3816 = vadd.f32 %v3815, %v3684
        %v3817 = vrot.slane %v3816, 4
        %v3818 = vadd.f32 %v3816, %v3817
        %v3819 = vrot.slane %v3818, 2
        %v3820 = vadd.f32 %v3818, %v3819
        %v3821 = vrot.slane %v3820, 1
        %v3822 = vadd.f32 %v3820, %v3821
        %v3823 = vadd.f32 %v3655, %v3657
        %v3824 = vadd.f32 %v3823, %v3659
        %v3825 = vadd.f32 %v3824, %v3661
        %v3826 = vadd.f32 %v3825, %v3663
        %v3827 = vadd.f32 %v3826, %v3665
        %v3828 = vadd.f32 %v3827, %v3667
        %v3829 = vadd.f32 %v3828, %v3669
        %v3830 = vadd.f32 %v3829, %v3671
        %v3831 = vadd.f32 %v3830, %v3673
        %v3832 = vadd.f32 %v3831, %v3675
        %v3833 = vadd.f32 %v3832, %v3677
        %v3834 = vadd.f32 %v3833, %v3679
        %v3835 = vadd.f32 %v3834, %v3681
        %v3836 = vadd.f32 %v3835, %v3683
        %v3837 = vadd.f32 %v3836, %v3685
        %v3838 = vrot.slane %v3837, 4
        %v3839 = vadd.f32 %v3837, %v3838
        %v3840 = vrot.slane %v3839, 2
        %v3841 = vadd.f32 %v3839, %v3840
        %v3842 = vrot.slane %v3841, 1
        %v3843 = vadd.f32 %v3841, %v3842
        %v3844 = vadd.f32 %v3686, %v3688
        %v3845 = vadd.f32 %v3844, %v3690
        %v3846 = vadd.f32 %v3845, %v3692
        %v3847 = vadd.f32 %v3846, %v3694
        %v3848 = vadd.f32 %v3847, %v3696
        %v3849 = vadd.f32 %v3848, %v3698
        %v3850 = vadd.f32 %v3849, %v3700
        %v3851 = vadd.f32 %v3850, %v3702
        %v3852 = vadd.f32 %v3851, %v3704
        %v3853 = vadd.f32 %v3852, %v3706
        %v3854 = vadd.f32 %v3853, %v3708
        %v3855 = vadd.f32 %v3854, %v3710
        %v3856 = vadd.f32 %v3855, %v3712
        %v3857 = vadd.f32 %v3856, %v3714
        %v3858 = vadd.f32 %v3857, %v3716
        %v3859 = vrot.slane %v3858, 4
        %v3860 = vadd.f32 %v3858, %v3859
        %v3861 = vrot.slane %v3860, 2
        %v3862 = vadd.f32 %v3860, %v3861
        %v3863 = vrot.slane %v3862, 1
        %v3864 = vadd.f32 %v3862, %v3863
        %v3865 = vadd.f32 %v3687, %v3689
        %v3866 = vadd.f32 %v3865, %v3691
        %v3867 = vadd.f32 %v3866, %v3693
        %v3868 = vadd.f32 %v3867, %v3695
        %v3869 = vadd.f32 %v3868, %v3697
        %v3870 = vadd.f32 %v3869, %v3699
        %v3871 = vadd.f32 %v3870, %v3701
        %v3872 = vadd.f32 %v3871, %v3703
        %v3873 = vadd.f32 %v3872, %v3705
        %v3874 = vadd.f32 %v3873, %v3707
        %v3875 = vadd.f32 %v3874, %v3709
        %v3876 = vadd.f32 %v3875, %v3711
        %v3877 = vadd.f32 %v3876, %v3713
        %v3878 = vadd.f32 %v3877, %v3715
        %v3879 = vadd.f32 %v3878, %v3717
        %v3880 = vrot.slane %v3879, 4
        %v3881 = vadd.f32 %v3879, %v3880
        %v3882 = vrot.slane %v3881, 2
        %v3883 = vadd.f32 %v3881, %v3882
        %v3884 = vrot.slane %v3883, 1
        %v3885 = vadd.f32 %v3883, %v3884
        %v3886 = vmul.f32 %v3822, 0.0078125
        %v3887 = vmul.f32 %v3843, 0.0078125
        %v3888 = vmul.f32 %v3864, 0.0078125
        %v3889 = vmul.f32 %v3885, 0.0078125
        %v3890 = vadd.s32 %v585, 128
        %v3891 = vand.u32 %v585, 15
        %v3892 = vand.u32 %v3890, 15
        %vm3893 = vcmp.ge.s32.totalorder %v585, 16
        %vm3894 = vcmp.ge.s32.totalorder %v3890, 16
        %vm3895 = vcmp.lt.s32.totalorder %v585, 240
        %vm3896 = vcmp.lt.s32.totalorder %v3890, 240
        %vm3897 = vcmp.ge.s32.totalorder %v3891, 1
        %vm3898 = vcmp.ge.s32.totalorder %v3892, 1
        %vm3899 = vcmp.lt.s32.totalorder %v3891, 15
        %vm3900 = vcmp.lt.s32.totalorder %v3892, 15
        %s3901 = sld [smem:[#allocation9 + $0x12]]
        %v3902 = vstv %s3901
        %v3903 = vadd.f32 %v3902, 0.0
        %vm3904 = vmand %vm3893, %vm3897
        %vm3905 = vmand %vm3894, %vm3898
        %s3906 = sld [smem:[#allocation9]]
        %v3911 = vsel %vm678, %v3780, %v3738
        %v3912 = vsel %vm678, %v3801, %v3759
        %3915 = vrot.lane.b32.xlu0 %v3911, 17
        %v3916 = vpop.permute.xlu0 %3915
        %3917 = vrot.lane.b32.xlu0 %v3912, 17
        %v3918 = vpop.permute.xlu0 %3917
        %vm3919 = vcmp.lt.s32.totalorder %v585, 17
        %v3920 = vsel %vm3919, %v3916, %v3918
        %v3921 = vsel %vm3919, %v3918, %v3916
        %v3922 = vsel %vm3904, 1, 0
        %v3923 = vsel %vm3905, 1, 0
        %vm3924 = vcmp.eq.s32.totalorder %v3922, 1
        %vm3925 = vcmp.eq.s32.totalorder %v3923, 1
        %v3926 = vsel %vm3924, %v3921, 0.0
        %v3927 = vsel %vm3925, %v3920, 0.0
        %v3928 = vstv %s3906
        %v3929 = vmul.f32 %v3928, %v3926
        %v3930 = vmul.f32 %v3928, %v3927
        %v3931 = vadd.f32 %v3903, %v3929
        %v3932 = vadd.f32 %v3903, %v3930
        %s3933 = sld [smem:[#allocation9 + $0x9]]
        %v3938 = vsel %vm678, %v3888, %v3886
        %v3939 = vsel %vm678, %v3889, %v3887
        %3942 = vrot.lane.b32.xlu0 %v3938, 17
        %v3943 = vpop.permute.xlu0 %3942
        %3944 = vrot.lane.b32.xlu0 %v3939, 17
        %v3945 = vpop.permute.xlu0 %3944
        %v3946 = vsel %vm3919, %v3943, %v3945
        %v3947 = vsel %vm3919, %v3945, %v3943
        %v3948 = vsel %vm3924, %v3947, 0.0
        %v3949 = vsel %vm3925, %v3946, 0.0
        %v3950 = vstv %s3933
        %v3951 = vmul.f32 %v3950, %v3948
        %v3952 = vmul.f32 %v3950, %v3949
        %v3953 = vadd.f32 %v3931, %v3951
        %v3954 = vadd.f32 %v3932, %v3952
        %s3955 = sld [smem:[#allocation9 + $0x1]]
        %3956 = vrot.lane.b32.xlu0 %v3911, 16
        %v3957 = vpop.permute.xlu0 %3956
        %3958 = vrot.lane.b32.xlu0 %v3912, 16
        %v3959 = vpop.permute.xlu0 %3958
        %vm3960 = vcmp.lt.s32.totalorder %v585, 16
        %v3961 = vsel %vm3960, %v3957, %v3959
        %v3962 = vsel %vm3960, %v3959, %v3957
        %v3963 = vsel %vm3893, 1, 0
        %v3964 = vsel %vm3894, 1, 0
        %vm3965 = vcmp.eq.s32.totalorder %v3963, 1
        %vm3966 = vcmp.eq.s32.totalorder %v3964, 1
        %v3967 = vsel %vm3965, %v3962, 0.0
        %v3968 = vsel %vm3966, %v3961, 0.0
        %v3969 = vstv %s3955
        %v3970 = vmul.f32 %v3969, %v3967
        %v3971 = vmul.f32 %v3969, %v3968
        %v3972 = vadd.f32 %v3953, %v3970
        %v3973 = vadd.f32 %v3954, %v3971
        %s3974 = sld [smem:[#allocation9 + $0xa]]
        %3975 = vrot.lane.b32.xlu0 %v3938, 16
        %v3976 = vpop.permute.xlu0 %3975
        %3977 = vrot.lane.b32.xlu0 %v3939, 16
        %v3978 = vpop.permute.xlu0 %3977
        %v3979 = vsel %vm3960, %v3976, %v3978
        %v3980 = vsel %vm3960, %v3978, %v3976
        %v3981 = vsel %vm3965, %v3980, 0.0
        %v3982 = vsel %vm3966, %v3979, 0.0
        %v3983 = vstv %s3974
        %v3984 = vmul.f32 %v3983, %v3981
        %v3985 = vmul.f32 %v3983, %v3982
        %v3986 = vadd.f32 %v3972, %v3984
        %v3987 = vadd.f32 %v3973, %v3985
        %vm3988 = vmand %vm3893, %vm3899
        %vm3989 = vmand %vm3894, %vm3900
        %s3990 = sld [smem:[#allocation9 + $0x2]]
        %3991 = vrot.lane.b32.xlu0 %v3911, 15
        %v3992 = vpop.permute.xlu0 %3991
        %3993 = vrot.lane.b32.xlu0 %v3912, 15
        %v3994 = vpop.permute.xlu0 %3993
        %vm3995 = vcmp.lt.s32.totalorder %v585, 15
        %v3996 = vsel %vm3995, %v3992, %v3994
        %v3997 = vsel %vm3995, %v3994, %v3992
        %v3998 = vsel %vm3988, 1, 0
        %v3999 = vsel %vm3989, 1, 0
        %vm4000 = vcmp.eq.s32.totalorder %v3998, 1
        %vm4001 = vcmp.eq.s32.totalorder %v3999, 1
        %v4002 = vsel %vm4000, %v3997, 0.0
        %v4003 = vsel %vm4001, %v3996, 0.0
        %v4004 = vstv %s3990
        %v4005 = vmul.f32 %v4004, %v4002
        %v4006 = vmul.f32 %v4004, %v4003
        %v4007 = vadd.f32 %v3986, %v4005
        %v4008 = vadd.f32 %v3987, %v4006
        %s4009 = sld [smem:[#allocation9 + $0xb]]
        %4010 = vrot.lane.b32.xlu0 %v3938, 15
        %v4011 = vpop.permute.xlu0 %4010
        %4012 = vrot.lane.b32.xlu0 %v3939, 15
        %v4013 = vpop.permute.xlu0 %4012
        %v4014 = vsel %vm3995, %v4011, %v4013
        %v4015 = vsel %vm3995, %v4013, %v4011
        %v4016 = vsel %vm4000, %v4015, 0.0
        %v4017 = vsel %vm4001, %v4014, 0.0
        %v4018 = vstv %s4009
        %v4019 = vmul.f32 %v4018, %v4016
        %v4020 = vmul.f32 %v4018, %v4017
        %v4021 = vadd.f32 %v4007, %v4019
        %v4022 = vadd.f32 %v4008, %v4020
        %s4023 = sld [smem:[#allocation9 + $0x3]]
        %4024 = vrot.lane.b32.xlu0 %v3911, 1
        %v4025 = vpop.permute.xlu0 %4024
        %4026 = vrot.lane.b32.xlu0 %v3912, 1
        %v4027 = vpop.permute.xlu0 %4026
        %vm4028 = vcmp.lt.s32.totalorder %v585, 1
        %v4029 = vsel %vm4028, %v4025, %v4027
        %v4030 = vsel %vm4028, %v4027, %v4025
        %v4031 = vsel %vm3897, 1, 0
        %v4032 = vsel %vm3898, 1, 0
        %vm4033 = vcmp.eq.s32.totalorder %v4031, 1
        %vm4034 = vcmp.eq.s32.totalorder %v4032, 1
        %v4035 = vsel %vm4033, %v4030, 0.0
        %v4036 = vsel %vm4034, %v4029, 0.0
        %v4037 = vstv %s4023
        %v4038 = vmul.f32 %v4037, %v4035
        %v4039 = vmul.f32 %v4037, %v4036
        %v4040 = vadd.f32 %v4021, %v4038
        %v4041 = vadd.f32 %v4022, %v4039
        %s4042 = sld [smem:[#allocation9 + $0xc]]
        %4043 = vrot.lane.b32.xlu0 %v3938, 1
        %v4044 = vpop.permute.xlu0 %4043
        %4045 = vrot.lane.b32.xlu0 %v3939, 1
        %v4046 = vpop.permute.xlu0 %4045
        %v4047 = vsel %vm4028, %v4044, %v4046
        %v4048 = vsel %vm4028, %v4046, %v4044
        %v4049 = vsel %vm4033, %v4048, 0.0
        %v4050 = vsel %vm4034, %v4047, 0.0
        %v4051 = vstv %s4042
        %v4052 = vmul.f32 %v4051, %v4049
        %v4053 = vmul.f32 %v4051, %v4050
        %v4054 = vadd.f32 %v4040, %v4052
        %v4055 = vadd.f32 %v4041, %v4053
        %s4056 = sld [smem:[#allocation9 + $0x4]]
        %v4057 = vstv %s4056
        %v4058 = vmul.f32 %v4057, %v3738
        %v4059 = vmul.f32 %v4057, %v3759
        %v4060 = vmul.f32 %v4057, %v3780
        %v4061 = vmul.f32 %v4057, %v3801
        %v4066 = vsel %vm678, %v4060, %v4058
        %v4067 = vsel %vm678, %v4061, %v4059
        %v4070 = vadd.f32 %v4054, %v4066
        %v4071 = vadd.f32 %v4055, %v4067
        %s4072 = sld [smem:[#allocation9 + $0xd]]
        %v4073 = vstv %s4072
        %v4074 = vmul.f32 %v4073, %v3886
        %v4075 = vmul.f32 %v4073, %v3887
        %v4076 = vmul.f32 %v4073, %v3888
        %v4077 = vmul.f32 %v4073, %v3889
        %v4082 = vsel %vm678, %v4076, %v4074
        %v4083 = vsel %vm678, %v4077, %v4075
        %v4086 = vadd.f32 %v4070, %v4082
        %v4087 = vadd.f32 %v4071, %v4083
        %s4088 = sld [smem:[#allocation9 + $0x5]]
        %4089 = vrot.lane.b32.xlu0 %v3911, 127
        %v4090 = vpop.permute.xlu0 %4089
        %4091 = vrot.lane.b32.xlu0 %v3912, 127
        %v4092 = vpop.permute.xlu0 %4091
        %vm4093 = vcmp.lt.s32.totalorder %v585, 127
        %v4094 = vsel %vm4093, %v4090, %v4092
        %v4095 = vsel %vm4093, %v4092, %v4090
        %v4096 = vsel %vm3899, 1, 0
        %v4097 = vsel %vm3900, 1, 0
        %vm4098 = vcmp.eq.s32.totalorder %v4096, 1
        %vm4099 = vcmp.eq.s32.totalorder %v4097, 1
        %v4100 = vsel %vm4098, %v4094, 0.0
        %v4101 = vsel %vm4099, %v4095, 0.0
        %v4102 = vstv %s4088
        %v4103 = vmul.f32 %v4102, %v4100
        %v4104 = vmul.f32 %v4102, %v4101
        %v4105 = vadd.f32 %v4086, %v4103
        %v4106 = vadd.f32 %v4087, %v4104
        %s4107 = sld [smem:[#allocation9 + $0xe]]
        %4108 = vrot.lane.b32.xlu0 %v3938, 127
        %v4109 = vpop.permute.xlu0 %4108
        %4110 = vrot.lane.b32.xlu0 %v3939, 127
        %v4111 = vpop.permute.xlu0 %4110
        %v4112 = vsel %vm4093, %v4109, %v4111
        %v4113 = vsel %vm4093, %v4111, %v4109
        %v4114 = vsel %vm4098, %v4112, 0.0
        %v4115 = vsel %vm4099, %v4113, 0.0
        %v4116 = vstv %s4107
        %v4117 = vmul.f32 %v4116, %v4114
        %v4118 = vmul.f32 %v4116, %v4115
        %v4119 = vadd.f32 %v4105, %v4117
        %v4120 = vadd.f32 %v4106, %v4118
        %vm4121 = vmand %vm3895, %vm3897
        %vm4122 = vmand %vm3896, %vm3898
        %s4123 = sld [smem:[#allocation9 + $0x6]]
        %4124 = vrot.lane.b32.xlu0 %v3911, 113
        %v4125 = vpop.permute.xlu0 %4124
        %4126 = vrot.lane.b32.xlu0 %v3912, 113
        %v4127 = vpop.permute.xlu0 %4126
        %vm4128 = vcmp.lt.s32.totalorder %v585, 113
        %v4129 = vsel %vm4128, %v4125, %v4127
        %v4130 = vsel %vm4128, %v4127, %v4125
        %v4131 = vsel %vm4121, 1, 0
        %v4132 = vsel %vm4122, 1, 0
        %vm4133 = vcmp.eq.s32.totalorder %v4131, 1
        %vm4134 = vcmp.eq.s32.totalorder %v4132, 1
        %v4135 = vsel %vm4133, %v4129, 0.0
        %v4136 = vsel %vm4134, %v4130, 0.0
        %v4137 = vstv %s4123
        %v4138 = vmul.f32 %v4137, %v4135
        %v4139 = vmul.f32 %v4137, %v4136
        %v4140 = vadd.f32 %v4119, %v4138
        %v4141 = vadd.f32 %v4120, %v4139
        %s4142 = sld [smem:[#allocation9 + $0xf]]
        %4143 = vrot.lane.b32.xlu0 %v3938, 113
        %v4144 = vpop.permute.xlu0 %4143
        %4145 = vrot.lane.b32.xlu0 %v3939, 113
        %v4146 = vpop.permute.xlu0 %4145
        %v4147 = vsel %vm4128, %v4144, %v4146
        %v4148 = vsel %vm4128, %v4146, %v4144
        %v4149 = vsel %vm4133, %v4147, 0.0
        %v4150 = vsel %vm4134, %v4148, 0.0
        %v4151 = vstv %s4142
        %v4152 = vmul.f32 %v4151, %v4149
        %v4153 = vmul.f32 %v4151, %v4150
        %v4154 = vadd.f32 %v4140, %v4152
        %v4155 = vadd.f32 %v4141, %v4153
        %s4156 = sld [smem:[#allocation9 + $0x7]]
        %4157 = vrot.lane.b32.xlu0 %v3911, 112
        %v4158 = vpop.permute.xlu0 %4157
        %4159 = vrot.lane.b32.xlu0 %v3912, 112
        %v4160 = vpop.permute.xlu0 %4159
        %vm4161 = vcmp.lt.s32.totalorder %v585, 112
        %v4162 = vsel %vm4161, %v4158, %v4160
        %v4163 = vsel %vm4161, %v4160, %v4158
        %v4164 = vsel %vm3895, 1, 0
        %v4165 = vsel %vm3896, 1, 0
        %vm4166 = vcmp.eq.s32.totalorder %v4164, 1
        %vm4167 = vcmp.eq.s32.totalorder %v4165, 1
        %v4168 = vsel %vm4166, %v4162, 0.0
        %v4169 = vsel %vm4167, %v4163, 0.0
        %v4170 = vstv %s4156
        %v4171 = vmul.f32 %v4170, %v4168
        %v4172 = vmul.f32 %v4170, %v4169
        %v4173 = vadd.f32 %v4154, %v4171
        %v4174 = vadd.f32 %v4155, %v4172
        %s4175 = sld [smem:[#allocation9 + $0x10]]
        %4176 = vrot.lane.b32.xlu0 %v3938, 112
        %v4177 = vpop.permute.xlu0 %4176
        %4178 = vrot.lane.b32.xlu0 %v3939, 112
        %v4179 = vpop.permute.xlu0 %4178
        %v4180 = vsel %vm4161, %v4177, %v4179
        %v4181 = vsel %vm4161, %v4179, %v4177
        %v4182 = vsel %vm4166, %v4180, 0.0
        %v4183 = vsel %vm4167, %v4181, 0.0
        %v4184 = vstv %s4175
        %v4185 = vmul.f32 %v4184, %v4182
        %v4186 = vmul.f32 %v4184, %v4183
        %v4187 = vadd.f32 %v4173, %v4185
        %v4188 = vadd.f32 %v4174, %v4186
        %vm4189 = vmand %vm3895, %vm3899
        %vm4190 = vmand %vm3896, %vm3900
        %s4191 = sld [smem:[#allocation9 + $0x8]]
        %4192 = vrot.lane.b32.xlu0 %v3911, 111
        %v4193 = vpop.permute.xlu0 %4192
        %4194 = vrot.lane.b32.xlu0 %v3912, 111
        %v4195 = vpop.permute.xlu0 %4194
        %vm4196 = vcmp.lt.s32.totalorder %v585, 111
        %v4197 = vsel %vm4196, %v4193, %v4195
        %v4198 = vsel %vm4196, %v4195, %v4193
        %v4199 = vsel %vm4189, 1, 0
        %v4200 = vsel %vm4190, 1, 0
        %vm4201 = vcmp.eq.s32.totalorder %v4199, 1
        %vm4202 = vcmp.eq.s32.totalorder %v4200, 1
        %v4203 = vsel %vm4201, %v4197, 0.0
        %v4204 = vsel %vm4202, %v4198, 0.0
        %v4205 = vstv %s4191
        %v4206 = vmul.f32 %v4205, %v4203
        %v4207 = vmul.f32 %v4205, %v4204
        %v4208 = vadd.f32 %v4187, %v4206
        %v4209 = vadd.f32 %v4188, %v4207
        %s4210 = sld [smem:[#allocation9 + $0x11]]
        %4211 = vrot.lane.b32.xlu0 %v3938, 111
        %v4212 = vpop.permute.xlu0 %4211
        %4213 = vrot.lane.b32.xlu0 %v3939, 111
        %v4214 = vpop.permute.xlu0 %4213
        %v4215 = vsel %vm4196, %v4212, %v4214
        %v4216 = vsel %vm4196, %v4214, %v4212
        %v4217 = vsel %vm4201, %v4215, 0.0
        %v4218 = vsel %vm4202, %v4216, 0.0
        %v4219 = vstv %s4210
        %v4220 = vmul.f32 %v4219, %v4217
        %v4221 = vmul.f32 %v4219, %v4218
        %v4222 = vadd.f32 %v4208, %v4220
        %v4223 = vadd.f32 %v4209, %v4221
        %v4224 = vxor.u32 %v4222, 2147483648
        %v4225 = vxor.u32 %v4223, 2147483648
        %v4226 = vmul.f32 %v4224, 1.442695
        %v4227 = vpow.pop %v4226
        %v4228 = vmul.f32 %v4225, 1.442695
        %v4229 = vpow.pop %v4228
        %v4230 = vadd.f32 %v4227, 1.0
        %v4231 = vadd.f32 %v4229, 1.0
        %v4232 = vrcp.pop %v4230
        %v4233 = vmul.f32 %v4230, %v4232
        %v4234 = vsub.f32 1.0, %v4233
        %v4235 = vmul.f32 %v4232, %v4234
        %v4236 = vadd.f32 %v4232, %v4235
        %vm4237 = vweird.f32 %v4230
        %vm4238 = vweird.f32 %v4232
        %vm4239 = vmor %vm4237, %vm4238
        %v4240 = vsel %vm4239, %v4232, %v4236
        %v4241 = vand.u32 2147483647, %v4230
        %vm4242 = vcmp.eq.f32.partialorder %v4241, 8.507059e+37
        %v4243 = vand.u32 %v4230, 2147483648
        %v4244 = vor.u32 1.1754944e-38, %v4243
        %v4245 = vsel %vm4242, %v4244, %v4240
        %v4246 = vmul.f32 1.0, %v4245
        %v4247 = vrcp.pop %v4231
        %v4248 = vmul.f32 %v4231, %v4247
        %v4249 = vsub.f32 1.0, %v4248
        %v4250 = vmul.f32 %v4247, %v4249
        %v4251 = vadd.f32 %v4247, %v4250
        %vm4252 = vweird.f32 %v4231
        %vm4253 = vweird.f32 %v4247
        %vm4254 = vmor %vm4252, %vm4253
        %v4255 = vsel %vm4254, %v4247, %v4251
        %v4256 = vand.u32 2147483647, %v4231
        %vm4257 = vcmp.eq.f32.partialorder %v4256, 8.507059e+37
        %v4258 = vand.u32 %v4231, 2147483648
        %v4259 = vor.u32 1.1754944e-38, %v4258
        %v4260 = vsel %vm4257, %v4259, %v4255
        %v4261 = vmul.f32 1.0, %v4260
        %v4264 = vrot.slane %v4261, 7
        %vm4265 = vcmask 1040384
        %v4266 = vsel %vm4265, %v4246, %v4264
        %v4267 = vsel %vm678, %v4246, %v4264
        %v4268 = vrot.slane %v4267, 1
        %v4269 = vperm.slane %v4266, 0
        %v4270 = vperm.slane %v4266, 1
        %v4271 = vperm.slane %v4268, 0
        %v4272 = vperm.slane %v4268, 1
        %v4277 = vmul.f32 %v3654, %v4269
        %v4278 = vmul.f32 %v3655, %v4270
        %v4279 = vmul.f32 %v3656, %v4269
        %v4280 = vmul.f32 %v3657, %v4270
        %v4281 = vmul.f32 %v3658, %v4269
        %v4282 = vmul.f32 %v3659, %v4270
        %v4283 = vmul.f32 %v3660, %v4269
        %v4284 = vmul.f32 %v3661, %v4270
        %v4285 = vmul.f32 %v3662, %v4269
        %v4286 = vmul.f32 %v3663, %v4270
        %v4287 = vmul.f32 %v3664, %v4269
        %v4288 = vmul.f32 %v3665, %v4270
        %v4289 = vmul.f32 %v3666, %v4269
        %v4290 = vmul.f32 %v3667, %v4270
        %v4291 = vmul.f32 %v3668, %v4269
        %v4292 = vmul.f32 %v3669, %v4270
        %v4293 = vmul.f32 %v3670, %v4269
        %v4294 = vmul.f32 %v3671, %v4270
        %v4295 = vmul.f32 %v3672, %v4269
        %v4296 = vmul.f32 %v3673, %v4270
        %v4297 = vmul.f32 %v3674, %v4269
        %v4298 = vmul.f32 %v3675, %v4270
        %v4299 = vmul.f32 %v3676, %v4269
        %v4300 = vmul.f32 %v3677, %v4270
        %v4301 = vmul.f32 %v3678, %v4269
        %v4302 = vmul.f32 %v3679, %v4270
        %v4303 = vmul.f32 %v3680, %v4269
        %v4304 = vmul.f32 %v3681, %v4270
        %v4305 = vmul.f32 %v3682, %v4269
        %v4306 = vmul.f32 %v3683, %v4270
        %v4307 = vmul.f32 %v3684, %v4269
        %v4308 = vmul.f32 %v3685, %v4270
        %v4309 = vmul.f32 %v3686, %v4271
        %v4310 = vmul.f32 %v3687, %v4272
        %v4311 = vmul.f32 %v3688, %v4271
        %v4312 = vmul.f32 %v3689, %v4272
        %v4313 = vmul.f32 %v3690, %v4271
        %v4314 = vmul.f32 %v3691, %v4272
        %v4315 = vmul.f32 %v3692, %v4271
        %v4316 = vmul.f32 %v3693, %v4272
        %v4317 = vmul.f32 %v3694, %v4271
        %v4318 = vmul.f32 %v3695, %v4272
        %v4319 = vmul.f32 %v3696, %v4271
        %v4320 = vmul.f32 %v3697, %v4272
        %v4321 = vmul.f32 %v3698, %v4271
        %v4322 = vmul.f32 %v3699, %v4272
        %v4323 = vmul.f32 %v3700, %v4271
        %v4324 = vmul.f32 %v3701, %v4272
        %v4325 = vmul.f32 %v3702, %v4271
        %v4326 = vmul.f32 %v3703, %v4272
        %v4327 = vmul.f32 %v3704, %v4271
        %v4328 = vmul.f32 %v3705, %v4272
        %v4329 = vmul.f32 %v3706, %v4271
        %v4330 = vmul.f32 %v3707, %v4272
        %v4331 = vmul.f32 %v3708, %v4271
        %v4332 = vmul.f32 %v3709, %v4272
        %v4333 = vmul.f32 %v3710, %v4271
        %v4334 = vmul.f32 %v3711, %v4272
        %v4335 = vmul.f32 %v3712, %v4271
        %v4336 = vmul.f32 %v3713, %v4272
        %v4337 = vmul.f32 %v3714, %v4271
        %v4338 = vmul.f32 %v3715, %v4272
        %v4339 = vmul.f32 %v3716, %v4271
        %v4340 = vmul.f32 %v3717, %v4272
        %v4341 = vadd.f32 %v4277, %v264
        %v4342 = vadd.f32 %v4278, %v265
        %v4343 = vadd.f32 %v4279, %v266
        %v4344 = vadd.f32 %v4280, %v267
        %v4345 = vadd.f32 %v4281, %v268
        %v4346 = vadd.f32 %v4282, %v269
        %v4347 = vadd.f32 %v4283, %v270
        %v4348 = vadd.f32 %v4284, %v271
        %v4349 = vadd.f32 %v4285, %v272
        %v4350 = vadd.f32 %v4286, %v273
        %v4351 = vadd.f32 %v4287, %v274
        %v4352 = vadd.f32 %v4288, %v275
        %v4353 = vadd.f32 %v4289, %v276
        %v4354 = vadd.f32 %v4290, %v277
        %v4355 = vadd.f32 %v4291, %v278
        %v4356 = vadd.f32 %v4292, %v279
        %v4357 = vadd.f32 %v4293, %v280
        %v4358 = vadd.f32 %v4294, %v281
        %v4359 = vadd.f32 %v4295, %v282
        %v4360 = vadd.f32 %v4296, %v283
        %v4361 = vadd.f32 %v4297, %v284
        %v4362 = vadd.f32 %v4298, %v285
        %v4363 = vadd.f32 %v4299, %v286
        %v4364 = vadd.f32 %v4300, %v287
        %v4365 = vadd.f32 %v4301, %v288
        %v4366 = vadd.f32 %v4302, %v289
        %v4367 = vadd.f32 %v4303, %v290
        %v4368 = vadd.f32 %v4304, %v291
        %v4369 = vadd.f32 %v4305, %v292
        %v4370 = vadd.f32 %v4306, %v293
        %v4371 = vadd.f32 %v4307, %v294
        %v4372 = vadd.f32 %v4308, %v295
        %v4373 = vadd.f32 %v4309, %v296
        %v4374 = vadd.f32 %v4310, %v297
        %v4375 = vadd.f32 %v4311, %v298
        %v4376 = vadd.f32 %v4312, %v299
        %v4377 = vadd.f32 %v4313, %v300
        %v4378 = vadd.f32 %v4314, %v301
        %v4379 = vadd.f32 %v4315, %v302
        %v4380 = vadd.f32 %v4316, %v303
        %v4381 = vadd.f32 %v4317, %v304
        %v4382 = vadd.f32 %v4318, %v305
        %v4383 = vadd.f32 %v4319, %v306
        %v4384 = vadd.f32 %v4320, %v307
        %v4385 = vadd.f32 %v4321, %v308
        %v4386 = vadd.f32 %v4322, %v309
        %v4387 = vadd.f32 %v4323, %v310
        %v4388 = vadd.f32 %v4324, %v311
        %v4389 = vadd.f32 %v4325, %v312
        %v4390 = vadd.f32 %v4326, %v313
        %v4391 = vadd.f32 %v4327, %v314
        %v4392 = vadd.f32 %v4328, %v315
        %v4393 = vadd.f32 %v4329, %v316
        %v4394 = vadd.f32 %v4330, %v317
        %v4395 = vadd.f32 %v4331, %v318
        %v4396 = vadd.f32 %v4332, %v319
        %v4397 = vadd.f32 %v4333, %v320
        %v4398 = vadd.f32 %v4334, %v321
        %v4399 = vadd.f32 %v4335, %v322
        %v4400 = vadd.f32 %v4336, %v323
        %v4401 = vadd.f32 %v4337, %v324
        %v4402 = vadd.f32 %v4338, %v325
        %v4403 = vadd.f32 %v4339, %v326
        %v4404 = vadd.f32 %v4340, %v327
        %4405 = vst [vmem:[%s261] sm:$0xff] %v4341
        %4406 = vst [vmem:[%s261 + $0x8] sm:$0xff] %v4342
        %4407 = vst [vmem:[%s261 + $0x10] sm:$0xff] %v4343
        %4408 = vst [vmem:[%s261 + $0x18] sm:$0xff] %v4344
        %4409 = vst [vmem:[%s261 + $0x20] sm:$0xff] %v4345
        %4410 = vst [vmem:[%s261 + $0x28] sm:$0xff] %v4346
        %4411 = vst [vmem:[%s261 + $0x30] sm:$0xff] %v4347
        %4412 = vst [vmem:[%s261 + $0x38] sm:$0xff] %v4348
        %4413 = vst [vmem:[%s261 + $0x40] sm:$0xff] %v4349
        %4414 = vst [vmem:[%s261 + $0x48] sm:$0xff] %v4350
        %4415 = vst [vmem:[%s261 + $0x50] sm:$0xff] %v4351
        %4416 = vst [vmem:[%s261 + $0x58] sm:$0xff] %v4352
        %4417 = vst [vmem:[%s261 + $0x60] sm:$0xff] %v4353
        %4418 = vst [vmem:[%s261 + $0x68] sm:$0xff] %v4354
        %4419 = vst [vmem:[%s261 + $0x70] sm:$0xff] %v4355
        %4420 = vst [vmem:[%s261 + $0x78] sm:$0xff] %v4356
        %4421 = vst [vmem:[%s261 + $0x80] sm:$0xff] %v4357
        %4422 = vst [vmem:[%s261 + $0x88] sm:$0xff] %v4358
        %4423 = vst [vmem:[%s261 + $0x90] sm:$0xff] %v4359
        %4424 = vst [vmem:[%s261 + $0x98] sm:$0xff] %v4360
        %4425 = vst [vmem:[%s261 + $0xa0] sm:$0xff] %v4361
        %4426 = vst [vmem:[%s261 + $0xa8] sm:$0xff] %v4362
        %4427 = vst [vmem:[%s261 + $0xb0] sm:$0xff] %v4363
        %4428 = vst [vmem:[%s261 + $0xb8] sm:$0xff] %v4364
        %4429 = vst [vmem:[%s261 + $0xc0] sm:$0xff] %v4365
        %4430 = vst [vmem:[%s261 + $0xc8] sm:$0xff] %v4366
        %4431 = vst [vmem:[%s261 + $0xd0] sm:$0xff] %v4367
        %4432 = vst [vmem:[%s261 + $0xd8] sm:$0xff] %v4368
        %4433 = vst [vmem:[%s261 + $0xe0] sm:$0xff] %v4369
        %4434 = vst [vmem:[%s261 + $0xe8] sm:$0xff] %v4370
        %4435 = vst [vmem:[%s261 + $0xf0] sm:$0xff] %v4371
        %4436 = vst [vmem:[%s261 + $0xf8] sm:$0xff] %v4372
        %4437 = vst [vmem:[%s261 + $0x100] sm:$0xff] %v4373
        %4438 = vst [vmem:[%s261 + $0x108] sm:$0xff] %v4374
        %4439 = vst [vmem:[%s261 + $0x110] sm:$0xff] %v4375
        %4440 = vst [vmem:[%s261 + $0x118] sm:$0xff] %v4376
        %4441 = vst [vmem:[%s261 + $0x120] sm:$0xff] %v4377
        %4442 = vst [vmem:[%s261 + $0x128] sm:$0xff] %v4378
        %4443 = vst [vmem:[%s261 + $0x130] sm:$0xff] %v4379
        %4444 = vst [vmem:[%s261 + $0x138] sm:$0xff] %v4380
        %4445 = vst [vmem:[%s261 + $0x140] sm:$0xff] %v4381
        %4446 = vst [vmem:[%s261 + $0x148] sm:$0xff] %v4382
        %4447 = vst [vmem:[%s261 + $0x150] sm:$0xff] %v4383
        %4448 = vst [vmem:[%s261 + $0x158] sm:$0xff] %v4384
        %4449 = vst [vmem:[%s261 + $0x160] sm:$0xff] %v4385
        %4450 = vst [vmem:[%s261 + $0x168] sm:$0xff] %v4386
        %4451 = vst [vmem:[%s261 + $0x170] sm:$0xff] %v4387
        %4452 = vst [vmem:[%s261 + $0x178] sm:$0xff] %v4388
        %4453 = vst [vmem:[%s261 + $0x180] sm:$0xff] %v4389
        %4454 = vst [vmem:[%s261 + $0x188] sm:$0xff] %v4390
        %4455 = vst [vmem:[%s261 + $0x190] sm:$0xff] %v4391
        %4456 = vst [vmem:[%s261 + $0x198] sm:$0xff] %v4392
        %4457 = vst [vmem:[%s261 + $0x1a0] sm:$0xff] %v4393
        %4458 = vst [vmem:[%s261 + $0x1a8] sm:$0xff] %v4394
        %4459 = vst [vmem:[%s261 + $0x1b0] sm:$0xff] %v4395
        %4460 = vst [vmem:[%s261 + $0x1b8] sm:$0xff] %v4396
        %4461 = vst [vmem:[%s261 + $0x1c0] sm:$0xff] %v4397
        %4462 = vst [vmem:[%s261 + $0x1c8] sm:$0xff] %v4398
        %4463 = vst [vmem:[%s261 + $0x1d0] sm:$0xff] %v4399
        %4464 = vst [vmem:[%s261 + $0x1d8] sm:$0xff] %v4400
        %4465 = vst [vmem:[%s261 + $0x1e0] sm:$0xff] %v4401
        %4466 = vst [vmem:[%s261 + $0x1e8] sm:$0xff] %v4402
        %4467 = vst [vmem:[%s261 + $0x1f0] sm:$0xff] %v4403
        %4468 = vst [vmem:[%s261 + $0x1f8] sm:$0xff] %v4404
        %s4469 = sand.u32 %s120, 1
        %s4470 = scalar_lea.sflag [#allocation4], %s4469
        %s4471 = sand.u32 %s120, 1
        %s4472 = smul.addr %s4471, 512
        %s4473 = scalar_lea.vmem [#allocation10], %s4472
        // Predicated region
        $region53: #{tpu_custom_call.1} parent=35 // pred_check
          %p4474 = pneg %p130
        $region54: #{tpu_custom_call.1} parent=35 // pred_check_branch
          %4476 = sbr.rel (%p4474) target = $region56
        $region55: #{tpu_custom_call.1} parent=35 // pred_region
          %s4477 = smul.u32 2, %s23
          %4479 = vsyncadd %s4470, 0
          %s4480 = smul.addr %s4477, 32
          %s4481 = smul.addr %s4480, 8
          %s4482 = scalar_lea.hbm %s4, %s4481
          %s4483 = sshll.u32 %s4473, 4
          %s4484 = int_to_ptr.vmem [resolvable:$true] %s4483
          %s4485 = sshll.u32 %s4482, 4
          %s4486 = int_to_ptr.hbm [resolvable:$true] %s4485
          %4491 = dma.vmem_to_hbm [thread:$0]  %s4484, 8192, %s4486, %s4470, 256, 256, 16
        $region56: #{tpu_custom_call.1} parent=35 // pred_fallthru
          _
      $region36: #{tpu_custom_call.1} parent=5 // pred_fallthru
        _
      %p4492 = scmp.le.s32.totalorder 2, %s18
      // Predicated region
      $region57: #{tpu_custom_call.1} parent=5 // pred_check
        %p4493 = pneg %p4492
      $region58: #{tpu_custom_call.1} parent=5 // pred_check_branch
        %4495 = sbr.rel (%p4493) target = $region60
      $region59: #{tpu_custom_call.1} parent=5 // pred_region
        %s4496 = ssub.s32 %s18, 2
        // Predicated region
        $region61: #{tpu_custom_call.1} parent=59 // pred_check
          %p4497 = pneg %p136
        $region62: #{tpu_custom_call.1} parent=59 // pred_check_branch
          %4499 = sbr.rel (%p4497) target = $region64
        $region63: #{tpu_custom_call.1} parent=59 // pred_region
          %s4500 = sand.u32 %s121, 1
          %s4501 = scalar_lea.sflag [#allocation4], %s4500
          %s4502 = sand.u32 %s121, 1
          %s4503 = smul.addr %s4502, 512
          %s4504 = scalar_lea.vmem [#allocation10], %s4503
          %4506 = dma.done %s4501, 8192
        $region64: #{tpu_custom_call.1} parent=59 // pred_fallthru
          _
      $region60: #{tpu_custom_call.1} parent=5 // pred_fallthru
        _
    $region6: #{tpu_custom_call.1} parent=1 // loop_footer
      %s22 = sadd.s32 1, %s18
    $region7: #{tpu_custom_call.1} parent=1 // loop_footer_branch
      %17 = sbr.rel target = $region3
    $region8: #{tpu_custom_call.1} parent=1 // loop_exit
      _
    %4507 = vsyncpa [#allocation3], 1
    %s4508 = scalar_lea.sflag [#allocation3], 1
    %4509 = vsyncpa %s4508, 1
    %4510 = vsyncpa [#allocation7], 1
    %4511 = vsyncpa [#allocation4], 1
    %s4512 = scalar_lea.sflag [#allocation4], 1
    %4513 = vsyncpa %s4512, 1
    %4514 = vsyncpa [#allocation5], 1
    %s4515 = scalar_lea.sflag [#allocation5], 1
    %4516 = vsyncpa %s4515, 1

</llo_original>
